<compile_context>
chip_gen: v7x
topology: tpu7x:2x2x1
jax: 0.10.0
libtpu: 0.0.40
codegen_flags: <defaults>
</compile_context>

<pallas_src>
import functools

import jax
import jax.numpy as jnp
import numpy as np
from jax.experimental import pallas as pl
from jax.experimental.pallas import tpu as pltpu

_LANES = 128


def _round_up(x, m):
    return (x + m - 1) // m * m


# ---------------------------------------------------------------------------
# Fused kernel: conv1(3x3,s)+bn1+relu -> conv2(3x3,1)+bn2 -> +shortcut -> relu
# One grid step processes one image.  All matmuls are bf16 x bf16 -> f32 (MXU).
#
# Activation layout ("flat phase planes"):
#   xflat[((kh%s)*s + kw%s)*hs*ws2 + r*ws2 + c, :] == x_pad[r*s + kh%s, c*s + kw%s, :]
# so the conv1 tap (kh, kw), evaluated at every output position laid out as
# full-width rows (i, j) with j in [0, ws2), is the contiguous slice starting
# at base = ((p*hs) + kh//s)*ws2 + kw//s of length ho*ws2.  Columns j >= wo are
# junk and are either masked (before feeding conv2) or discarded by the wrapper.
# ---------------------------------------------------------------------------
def _basic_blk_kernel(xflat_ref, w1_ref, w2_ref, wsc_ref, aff_ref, cmask_ref,
                      o_ref, y_ref, *, stride, ho, wo, ws2, hs, has_proj):
    s = stride
    mfull = ho * ws2
    cp = o_ref.shape[-1]                      # output channels, padded to 128
    f32 = jnp.float32
    bf16 = jnp.bfloat16

    aff = aff_ref[...]                        # (6, cp) f32: s1,b1,s2,b2,ssc,bsc
    s1, b1 = aff[0:1, :], aff[1:2, :]
    s2, b2 = aff[2:3, :], aff[3:4, :]
    ssc, bsc = aff[4:5, :], aff[5:6, :]
    cmask = cmask_ref[...]                    # (mfull, 1) f32: 1.0 where col < wo

    def x_tap(kh, kw):
        p = (kh % s) * s + (kw % s)
        base = (p * hs + kh // s) * ws2 + kw // s
        return xflat_ref[0, pl.ds(base, mfull), :]        # (mfull, cin_p) bf16

    # ---- conv1 + bn1 + relu: 3 MXU calls, K = 3*cin_p (kw taps fused) -------
    x_center = None
    acc = None
    for kh in range(3):
        taps = [x_tap(kh, kw) for kw in range(3)]
        if kh == 1:
            x_center = taps[1]                # reused by the shortcut below
        g = jnp.concatenate(taps, axis=-1)    # (mfull, 3*cin_p) bf16
        d = jnp.dot(g, w1_ref[kh], preferred_element_type=f32)
        acc = d if acc is None else acc + d
    # Mask junk columns (>= wo) to zero so conv2's +/-1 column reads see the
    # zero ring of the canvas.
    out1 = jnp.maximum(acc * s1 + b1, 0.0) * cmask

    # ---- write conv1 output (bf16) into the flat padded canvas ---------------
    # Canvas layout: out1[r, c] lives at flat index 8 + (r+1)*ws2 + c.
    # Only the thin zero ring is (re)written every step; the interior is a
    # single full, aligned, unmasked store.
    y_ref[pl.ds(0, 8 + ws2), :] = jnp.zeros((8 + ws2, cp), bf16)
    y_ref[pl.ds(8 + (ho + 1) * ws2, ws2 + 8), :] = jnp.zeros((ws2 + 8, cp), bf16)
    y_ref[pl.ds(8 + ws2, mfull), :] = out1.astype(bf16)

    # ---- conv2 (3x3, stride 1) + bn2: 3 MXU calls, K = 3*cout_p ---------------
    acc = None
    for kh in range(3):
        taps = [y_ref[pl.ds(7 + kh * ws2 + kw, mfull), :] for kw in range(3)]
        g = jnp.concatenate(taps, axis=-1)    # (mfull, 3*cout_p) bf16
        d = jnp.dot(g, w2_ref[kh], preferred_element_type=f32)
        acc = d if acc is None else acc + d
    y = acc * s2 + b2

    # ---- shortcut (fused): 1x1 strided conv + bn, or identity -----------------
    if has_proj:
        sc = jnp.dot(x_center, wsc_ref[...], preferred_element_type=f32) * ssc + bsc
    else:
        sc = x_center.astype(f32)

    o_ref[0] = jnp.maximum(y + sc, 0.0).astype(o_ref.dtype)


# ---------------------------------------------------------------------------
# Wrapper: layout plumbing (NHWC, channel/lane padding, flat phase planes,
# per-kernel-row weights, folded BN) + the pallas_call.
# ---------------------------------------------------------------------------
def _fold_bn(gamma, beta, mean, var, eps=1e-5):
    scale = gamma / jnp.sqrt(var + eps)
    return scale, beta - mean * scale


def _conv3x3_rows(w_oihw, cin_p, cout_p):
    """OIHW (O, I, 3, 3) -> (3, 3*cin_p, cout_p) bf16, K index = kw*cin_p + ci."""
    o, i = w_oihw.shape[0], w_oihw.shape[1]
    wt = jnp.transpose(w_oihw, (2, 3, 1, 0))                       # (3, 3, I, O)
    wt = jnp.pad(wt, ((0, 0), (0, 0), (0, cin_p - i), (0, cout_p - o)))
    return wt.reshape(3, 3 * cin_p, cout_p).astype(jnp.bfloat16)


def _pad1d(v, n):
    return jnp.pad(v.astype(jnp.float32), (0, n - v.shape[0]))


def basic_blk_forward(x_nchw, params, *, stride):
    """BasicBlk forward. x: [N, Cin, H, W] f32 -> [N, Cout, Ho, Wo] f32."""
    n, cin, h, w = x_nchw.shape
    cout = params["w1"].shape[0]
    s = int(stride)
    ho = (h - 1) // s + 1
    wo = (w - 1) // s + 1
    cin_p = _round_up(cin, _LANES)
    cout_p = _round_up(cout, _LANES)
    has_proj = (s != 1) or (cin != cout)

    # Padded phase-plane geometry.  ws2 is a multiple of 8 so every in-kernel
    # slab is sublane-group sized; hs keeps all tap rows in-bounds.
    hs = -(-(h + 2) // s)
    ws2 = _round_up(-(-(w + 2) // s), 8)
    hp, wp2 = s * hs, s * ws2

    # NHWC + bf16, zero-pad: 1-px conv ring, channels -> lane width, spatial to
    # the padded phase geometry.
    x = jnp.transpose(x_nchw, (0, 2, 3, 1)).astype(jnp.bfloat16)
    x = jnp.pad(x, ((0, 0), (1, hp - h - 1), (1, wp2 - w - 1), (0, cin_p - cin)))
    # Flat phase planes:
    #   xflat[n, ((pr*s+pc)*hs + r)*ws2 + c, :] == x_pad[n, r*s+pr, c*s+pc, :]
    xph = x.reshape(n, hs, s, ws2, s, cin_p).transpose(0, 2, 4, 1, 3, 5)
    xflat = xph.reshape(n, s * s * hs * ws2, cin_p)
    xflat = jnp.pad(xflat, ((0, 0), (0, 8), (0, 0)))   # guard rows for tap overhang

    w1 = _conv3x3_rows(params["w1"], cin_p, cout_p)
    w2 = _conv3x3_rows(params["w2"], cout_p, cout_p)
    s1, b1 = _fold_bn(*params["bn1"])
    s2, b2 = _fold_bn(*params["bn2"])
    if has_proj:
        ssc, bsc = _fold_bn(*params["bnsc"])
        wsc = jnp.pad(params["wsc"].reshape(cout, cin).T,
                      ((0, cin_p - cin), (0, cout_p - cout))).astype(jnp.bfloat16)
    else:
        ssc = jnp.ones((cout,), jnp.float32)
        bsc = jnp.zeros((cout,), jnp.float32)
        wsc = jnp.zeros((8, _LANES), jnp.bfloat16)     # unused dummy
    aff = jnp.stack([_pad1d(v, cout_p) for v in (s1, b1, s2, b2, ssc, bsc)])

    mfull = ho * ws2
    cmask = (jnp.arange(mfull, dtype=jnp.int32) % ws2 < wo)
    cmask = cmask.astype(jnp.float32).reshape(mfull, 1)
    y_rows = 16 + (ho + 2) * ws2
    xr = xflat.shape[1]

    kernel = functools.partial(_basic_blk_kernel, stride=s, ho=ho, wo=wo,
                               ws2=ws2, hs=hs, has_proj=has_proj)
    flops = 2 * n * mfull * (9 * cin_p * cout_p + 9 * cout_p * cout_p
                             + (cin_p * cout_p if has_proj else 0))
    bytes_accessed = (xflat.size * 2 + w1.size * 2 + w2.size * 2 + wsc.size * 2
                      + aff.size * 4 + cmask.size * 4 + n * mfull * cout_p * 2)

    out = pl.pallas_call(
        kernel,
        out_shape=jax.ShapeDtypeStruct((n, mfull, cout_p), jnp.bfloat16),
        grid=(n,),
        in_specs=[
            pl.BlockSpec((1, xr, cin_p), lambda i: (i, 0, 0)),
            pl.BlockSpec(w1.shape, lambda i: (0, 0, 0)),
            pl.BlockSpec(w2.shape, lambda i: (0, 0, 0)),
            pl.BlockSpec(wsc.shape, lambda i: (0, 0)),
            pl.BlockSpec(aff.shape, lambda i: (0, 0)),
            pl.BlockSpec((mfull, 1), lambda i: (0, 0)),
        ],
        out_specs=pl.BlockSpec((1, mfull, cout_p), lambda i: (i, 0, 0)),
        scratch_shapes=[pltpu.VMEM((y_rows, cout_p), jnp.bfloat16)],
        compiler_params=pltpu.CompilerParams(
            dimension_semantics=("parallel",),
            vmem_limit_bytes=40 * 1024 * 1024,
        ),
        cost_estimate=pl.CostEstimate(flops=flops, transcendentals=0,
                                      bytes_accessed=bytes_accessed),
    )(xflat, w1, w2, wsc, aff, cmask)

    out = out[:, :, :cout].astype(jnp.float32).reshape(n, ho, ws2, cout)
    out = out[:, :, :wo, :]
    # TODO(synk): in a full network keep activations NHWC/bf16 (lane-dense)
    # between blocks; the NCHW<->NHWC f32 conversion only matches the torch API.
    return jnp.transpose(out, (0, 3, 1, 2))


# ---------------------------------------------------------------------------
# Pure-JAX references (eval-mode BN, mirrors the PyTorch forward)
# ---------------------------------------------------------------------------
def _bn_ref(y, p, eps=1e-5):
    g, b, m, v = p
    inv = g / jnp.sqrt(v + eps)
    return y * inv[None, :, None, None] + (b - m * inv)[None, :, None, None]


def basic_blk_reference_f32(x, params, stride):
    def conv(x, w, s, pad):
        return jax.lax.conv_general_dilated(
            x, w, (s, s), [(pad, pad), (pad, pad)],
            dimension_numbers=("NCHW", "OIHW", "NCHW"))

    cin, cout = x.shape[1], params["w1"].shape[0]
    out = jax.nn.relu(_bn_ref(conv(x, params["w1"], stride, 1), params["bn1"]))
    out = _bn_ref(conv(out, params["w2"], 1, 1), params["bn2"])
    if stride != 1 or cin != cout:
        sc = _bn_ref(conv(x, params["wsc"], stride, 0), params["bnsc"])
    else:
        sc = x
    return jax.nn.relu(out + sc)


def basic_blk_reference_bf16(x, params, stride):
    """Mirrors the kernel's numerics: bf16 operands, f32 accumulate/epilogue."""
    bf, f32 = jnp.bfloat16, jnp.float32

    def conv(x, w, s, pad):
        return jax.lax.conv_general_dilated(
            x.astype(bf), w.astype(bf), (s, s), [(pad, pad), (pad, pad)],
            dimension_numbers=("NCHW", "OIHW", "NCHW"),
            preferred_element_type=f32)

    cin, cout = x.shape[1], params["w1"].shape[0]
    out = jax.nn.relu(_bn_ref(conv(x, params["w1"], stride, 1), params["bn1"]))
    out = _bn_ref(conv(out, params["w2"], 1, 1), params["bn2"])
    if stride != 1 or cin != cout:
        sc = _bn_ref(conv(x, params["wsc"], stride, 0), params["bnsc"])
    else:
        sc = x.astype(bf).astype(f32)
    return jax.nn.relu(out + sc)


# ---------------------------------------------------------------------------
if __name__ == "__main__":
    def bn_params(c, off):
        return (
            1.0 + 0.10 * jnp.arange(c, dtype=jnp.float32),       # gamma
            0.05 * jnp.arange(c, dtype=jnp.float32) + off,       # beta
            0.02 * jnp.arange(c, dtype=jnp.float32),              # running_mean
            1.0 + 0.03 * jnp.arange(c, dtype=jnp.float32),        # running_var
        )

    key = jax.random.PRNGKey(0)
    fwd = jax.jit(basic_blk_forward, static_argnames=("stride",))

    configs = [
        (2, 4, 16, 16, 8, 2),   # stride-2, channel change -> projection shortcut
        (2, 8, 8, 8, 8, 1),     # stride-1, same channels  -> identity shortcut
    ]
    for (N, Cin, H, W, Cout, stride) in configs:
        key, kx, k1, k2, k3 = jax.random.split(key, 5)
        x = jax.random.normal(kx, (N, Cin, H, W), jnp.float32)
        params = {
            "w1": 0.1 * jax.random.normal(k1, (Cout, Cin, 3, 3), jnp.float32),
            "w2": 0.1 * jax.random.normal(k2, (Cout, Cout, 3, 3), jnp.float32),
            "bn1": bn_params(Cout, 0.0),
            "bn2": bn_params(Cout, 0.1),
        }
        if stride != 1 or Cin != Cout:
            params["wsc"] = 0.1 * jax.random.normal(k3, (Cout, Cin, 1, 1),
                                                    jnp.float32)
            params["bnsc"] = bn_params(Cout, -0.1)

        y = fwd(x, params, stride=stride)
        jax.block_until_ready(y)

        # The kernel writes bf16 outputs; round the bf16-numerics reference the
        # same way for the tight check, keep a loose sanity check vs. pure f32.
        y_bf = basic_blk_reference_bf16(x, params, stride)
        y_bf = y_bf.astype(jnp.bfloat16).astype(jnp.float32)
        y_f32 = basic_blk_reference_f32(x, params, stride)
        assert y.shape == y_f32.shape, (y.shape, y_f32.shape)
        err_bf = float(jnp.max(jnp.abs(y - y_bf)))
        err_f32 = float(jnp.max(jnp.abs(y - y_f32)))
        assert np.allclose(np.asarray(y), np.asarray(y_bf),
                           atol=3e-2, rtol=3e-2), err_bf
        assert np.allclose(np.asarray(y), np.asarray(y_f32),
                           atol=2.5e-1, rtol=2e-1), err_f32

    print("KERNEL_OK")
</pallas_src>

<mosaic_0001>
module attributes {stable_mosaic.version = 11 : i64} {
  func.func @_basic_blk_kernel(%arg0: i32, %arg1: memref<1x584x128xbf16, #tpu.memory_space<vmem>>, %arg2: memref<3x384x128xbf16, #tpu.memory_space<vmem>>, %arg3: memref<3x384x128xbf16, #tpu.memory_space<vmem>>, %arg4: memref<128x128xbf16, #tpu.memory_space<vmem>>, %arg5: memref<6x128xf32, #tpu.memory_space<vmem>>, %arg6: memref<128x1xf32, #tpu.memory_space<vmem>>, %arg7: memref<1x128x128xbf16, #tpu.memory_space<vmem>>, %arg8: memref<176x128xbf16, #tpu.memory_space<vmem>>) attributes {dimension_semantics = [#tpu.dimension_semantics<parallel>], iteration_bounds = array<i64: 2>, scalar_prefetch = 0 : i64, scratch_operands = 1 : i64, tpu.core_type = #tpu.core_type<tc>, window_params = [{transform_indices = @transform_0, window_bounds = array<i64: 1, 584, 128>}, {pipeline_mode = #tpu.pipeline_mode<synchronous>, transform_indices = @transform_1, window_bounds = array<i64: 3, 384, 128>}, {pipeline_mode = #tpu.pipeline_mode<synchronous>, transform_indices = @transform_2, window_bounds = array<i64: 3, 384, 128>}, {pipeline_mode = #tpu.pipeline_mode<synchronous>, transform_indices = @transform_3, window_bounds = array<i64: 128, 128>}, {pipeline_mode = #tpu.pipeline_mode<synchronous>, transform_indices = @transform_4, window_bounds = array<i64: 6, 128>}, {pipeline_mode = #tpu.pipeline_mode<synchronous>, transform_indices = @transform_5, window_bounds = array<i64: 128, 1>}, {transform_indices = @transform_6, window_bounds = array<i64: 1, 128, 128>}]} {
    %c0 = arith.constant 0 : index
    %c0_0 = arith.constant 0 : index
    %0 = vector.load %arg5[%c0, %c0_0] : memref<6x128xf32, #tpu.memory_space<vmem>>, vector<6x128xf32>
    %1 = vector.extract_strided_slice %0 {offsets = [0, 0], sizes = [1, 128], strides = [1, 1]} : vector<6x128xf32> to vector<1x128xf32>
    %2 = vector.extract_strided_slice %0 {offsets = [1, 0], sizes = [1, 128], strides = [1, 1]} : vector<6x128xf32> to vector<1x128xf32>
    %3 = vector.extract_strided_slice %0 {offsets = [2, 0], sizes = [1, 128], strides = [1, 1]} : vector<6x128xf32> to vector<1x128xf32>
    %4 = vector.extract_strided_slice %0 {offsets = [3, 0], sizes = [1, 128], strides = [1, 1]} : vector<6x128xf32> to vector<1x128xf32>
    %5 = vector.extract_strided_slice %0 {offsets = [4, 0], sizes = [1, 128], strides = [1, 1]} : vector<6x128xf32> to vector<1x128xf32>
    %6 = vector.extract_strided_slice %0 {offsets = [5, 0], sizes = [1, 128], strides = [1, 1]} : vector<6x128xf32> to vector<1x128xf32>
    %c0_1 = arith.constant 0 : index
    %c0_2 = arith.constant 0 : index
    %7 = vector.load %arg6[%c0_1, %c0_2] : memref<128x1xf32, #tpu.memory_space<vmem>>, vector<128x1xf32>
    %c0_3 = arith.constant 0 : index
    %c0_4 = arith.constant 0 : index
    %c0_5 = arith.constant 0 : index
    %8 = vector.load %arg1[%c0_3, %c0_4, %c0_5] : memref<1x584x128xbf16, #tpu.memory_space<vmem>>, vector<1x128x128xbf16>
    %9 = vector.shape_cast %8 : vector<1x128x128xbf16> to vector<128x128xbf16>
    %c0_6 = arith.constant 0 : index
    %c144 = arith.constant 144 : index
    %c0_7 = arith.constant 0 : index
    %10 = vector.load %arg1[%c0_6, %c144, %c0_7] : memref<1x584x128xbf16, #tpu.memory_space<vmem>>, vector<1x128x128xbf16>
    %11 = vector.shape_cast %10 : vector<1x128x128xbf16> to vector<128x128xbf16>
    %c0_8 = arith.constant 0 : index
    %c1 = arith.constant 1 : index
    %c0_9 = arith.constant 0 : index
    %12 = vector.load %arg1[%c0_8, %c1, %c0_9] : memref<1x584x128xbf16, #tpu.memory_space<vmem>>, vector<1x128x128xbf16>
    %13 = vector.shape_cast %12 : vector<1x128x128xbf16> to vector<128x128xbf16>
    %14 = tpu.concatenate %9, %11, %13 in 1 : vector<128x128xbf16>, vector<128x128xbf16>, vector<128x128xbf16> -> vector<128x384xbf16>
    %c0_10 = arith.constant 0 : index
    %c0_11 = arith.constant 0 : index
    %c0_12 = arith.constant 0 : index
    %15 = vector.load %arg2[%c0_10, %c0_11, %c0_12] : memref<3x384x128xbf16, #tpu.memory_space<vmem>>, vector<1x384x128xbf16>
    %16 = vector.shape_cast %15 : vector<1x384x128xbf16> to vector<384x128xbf16>
    %cst = arith.constant dense<0.000000e+00> : vector<128x128xf32>
    %17 = tpu.matmul %14, %16, %cst {dimension_numbers = #tpu.dot_dimension_numbers<[1], [0], [0], [1], [0, 0, 1, 1], [], []>} : vector<128x384xbf16>, vector<384x128xbf16>, vector<128x128xf32> -> vector<128x128xf32>
    %c0_13 = arith.constant 0 : index
    %c288 = arith.constant 288 : index
    %c0_14 = arith.constant 0 : index
    %18 = vector.load %arg1[%c0_13, %c288, %c0_14] : memref<1x584x128xbf16, #tpu.memory_space<vmem>>, vector<1x128x128xbf16>
    %19 = vector.shape_cast %18 : vector<1x128x128xbf16> to vector<128x128xbf16>
    %c0_15 = arith.constant 0 : index
    %c432 = arith.constant 432 : index
    %c0_16 = arith.constant 0 : index
    %20 = vector.load %arg1[%c0_15, %c432, %c0_16] : memref<1x584x128xbf16, #tpu.memory_space<vmem>>, vector<1x128x128xbf16>
    %21 = vector.shape_cast %20 : vector<1x128x128xbf16> to vector<128x128xbf16>
    %c0_17 = arith.constant 0 : index
    %c289 = arith.constant 289 : index
    %c0_18 = arith.constant 0 : index
    %22 = vector.load %arg1[%c0_17, %c289, %c0_18] : memref<1x584x128xbf16, #tpu.memory_space<vmem>>, vector<1x128x128xbf16>
    %23 = vector.shape_cast %22 : vector<1x128x128xbf16> to vector<128x128xbf16>
    %24 = tpu.concatenate %19, %21, %23 in 1 : vector<128x128xbf16>, vector<128x128xbf16>, vector<128x128xbf16> -> vector<128x384xbf16>
    %c1_19 = arith.constant 1 : index
    %c0_20 = arith.constant 0 : index
    %c0_21 = arith.constant 0 : index
    %25 = vector.load %arg2[%c1_19, %c0_20, %c0_21] : memref<3x384x128xbf16, #tpu.memory_space<vmem>>, vector<1x384x128xbf16>
    %26 = vector.shape_cast %25 : vector<1x384x128xbf16> to vector<384x128xbf16>
    %cst_22 = arith.constant dense<0.000000e+00> : vector<128x128xf32>
    %27 = tpu.matmul %24, %26, %cst_22 {dimension_numbers = #tpu.dot_dimension_numbers<[1], [0], [0], [1], [0, 0, 1, 1], [], []>} : vector<128x384xbf16>, vector<384x128xbf16>, vector<128x128xf32> -> vector<128x128xf32>
    %28 = arith.addf %17, %27 : vector<128x128xf32>
    %c0_23 = arith.constant 0 : index
    %c16 = arith.constant 16 : index
    %c0_24 = arith.constant 0 : index
    %29 = vector.load %arg1[%c0_23, %c16, %c0_24] : memref<1x584x128xbf16, #tpu.memory_space<vmem>>, vector<1x128x128xbf16>
    %30 = vector.shape_cast %29 : vector<1x128x128xbf16> to vector<128x128xbf16>
    %c0_25 = arith.constant 0 : index
    %c160 = arith.constant 160 : index
    %c0_26 = arith.constant 0 : index
    %31 = vector.load %arg1[%c0_25, %c160, %c0_26] : memref<1x584x128xbf16, #tpu.memory_space<vmem>>, vector<1x128x128xbf16>
    %32 = vector.shape_cast %31 : vector<1x128x128xbf16> to vector<128x128xbf16>
    %c0_27 = arith.constant 0 : index
    %c17 = arith.constant 17 : index
    %c0_28 = arith.constant 0 : index
    %33 = vector.load %arg1[%c0_27, %c17, %c0_28] : memref<1x584x128xbf16, #tpu.memory_space<vmem>>, vector<1x128x128xbf16>
    %34 = vector.shape_cast %33 : vector<1x128x128xbf16> to vector<128x128xbf16>
    %35 = tpu.concatenate %30, %32, %34 in 1 : vector<128x128xbf16>, vector<128x128xbf16>, vector<128x128xbf16> -> vector<128x384xbf16>
    %c2 = arith.constant 2 : index
    %c0_29 = arith.constant 0 : index
    %c0_30 = arith.constant 0 : index
    %36 = vector.load %arg2[%c2, %c0_29, %c0_30] : memref<3x384x128xbf16, #tpu.memory_space<vmem>>, vector<1x384x128xbf16>
    %37 = vector.shape_cast %36 : vector<1x384x128xbf16> to vector<384x128xbf16>
    %cst_31 = arith.constant dense<0.000000e+00> : vector<128x128xf32>
    %38 = tpu.matmul %35, %37, %cst_31 {dimension_numbers = #tpu.dot_dimension_numbers<[1], [0], [0], [1], [0, 0, 1, 1], [], []>} : vector<128x384xbf16>, vector<384x128xbf16>, vector<128x128xf32> -> vector<128x128xf32>
    %39 = arith.addf %28, %38 : vector<128x128xf32>
    %40 = vector.broadcast %1 : vector<1x128xf32> to vector<128x128xf32>
    %41 = arith.mulf %39, %40 : vector<128x128xf32>
    %42 = vector.broadcast %2 : vector<1x128xf32> to vector<128x128xf32>
    %43 = arith.addf %41, %42 : vector<128x128xf32>
    %cst_32 = arith.constant 0.000000e+00 : f32
    %44 = vector.broadcast %cst_32 : f32 to vector<128x128xf32>
    %45 = arith.maximumf %43, %44 : vector<128x128xf32>
    %46 = vector.broadcast %7 : vector<128x1xf32> to vector<128x128xf32>
    %47 = arith.mulf %45, %46 : vector<128x128xf32>
    %cst_33 = arith.constant 0.000000e+00 : bf16
    %48 = vector.broadcast %cst_33 : bf16 to vector<24x128xbf16>
    %c0_34 = arith.constant 0 : index
    %c0_35 = arith.constant 0 : index
    %49 = vector.load %arg8[%c0_34, %c0_35] : memref<176x128xbf16, #tpu.memory_space<vmem>>, vector<24x128xbf16>
    tpu.vector_store %arg8[%c0_34, %c0_35], %48 {strides = array<i32>} : memref<176x128xbf16, #tpu.memory_space<vmem>>, vector<24x128xbf16>,
    %cst_36 = arith.constant 0.000000e+00 : bf16
    %50 = vector.broadcast %cst_36 : bf16 to vector<24x128xbf16>
    %c152 = arith.constant 152 : index
    %c0_37 = arith.constant 0 : index
    %51 = vector.load %arg8[%c152, %c0_37] : memref<176x128xbf16, #tpu.memory_space<vmem>>, vector<24x128xbf16>
    tpu.vector_store %arg8[%c152, %c0_37], %50 {strides = array<i32>} : memref<176x128xbf16, #tpu.memory_space<vmem>>, vector<24x128xbf16>,
    %52 = arith.truncf %47 : vector<128x128xf32> to vector<128x128xbf16>
    %c24 = arith.constant 24 : index
    %c0_38 = arith.constant 0 : index
    %53 = vector.load %arg8[%c24, %c0_38] : memref<176x128xbf16, #tpu.memory_space<vmem>>, vector<128x128xbf16>
    tpu.vector_store %arg8[%c24, %c0_38], %52 {strides = array<i32>} : memref<176x128xbf16, #tpu.memory_space<vmem>>, vector<128x128xbf16>,
    %c7 = arith.constant 7 : index
    %c0_39 = arith.constant 0 : index
    %54 = vector.load %arg8[%c7, %c0_39] : memref<176x128xbf16, #tpu.memory_space<vmem>>, vector<128x128xbf16>
    %c8 = arith.constant 8 : index
    %c0_40 = arith.constant 0 : index
    %55 = vector.load %arg8[%c8, %c0_40] : memref<176x128xbf16, #tpu.memory_space<vmem>>, vector<128x128xbf16>
    %c9 = arith.constant 9 : index
    %c0_41 = arith.constant 0 : index
    %56 = vector.load %arg8[%c9, %c0_41] : memref<176x128xbf16, #tpu.memory_space<vmem>>, vector<128x128xbf16>
    %57 = tpu.concatenate %54, %55, %56 in 1 : vector<128x128xbf16>, vector<128x128xbf16>, vector<128x128xbf16> -> vector<128x384xbf16>
    %c0_42 = arith.constant 0 : index
    %c0_43 = arith.constant 0 : index
    %c0_44 = arith.constant 0 : index
    %58 = vector.load %arg3[%c0_42, %c0_43, %c0_44] : memref<3x384x128xbf16, #tpu.memory_space<vmem>>, vector<1x384x128xbf16>
    %59 = vector.shape_cast %58 : vector<1x384x128xbf16> to vector<384x128xbf16>
    %cst_45 = arith.constant dense<0.000000e+00> : vector<128x128xf32>
    %60 = tpu.matmul %57, %59, %cst_45 {dimension_numbers = #tpu.dot_dimension_numbers<[1], [0], [0], [1], [0, 0, 1, 1], [], []>} : vector<128x384xbf16>, vector<384x128xbf16>, vector<128x128xf32> -> vector<128x128xf32>
    %c23 = arith.constant 23 : index
    %c0_46 = arith.constant 0 : index
    %61 = vector.load %arg8[%c23, %c0_46] : memref<176x128xbf16, #tpu.memory_space<vmem>>, vector<128x128xbf16>
    %c24_47 = arith.constant 24 : index
    %c0_48 = arith.constant 0 : index
    %62 = vector.load %arg8[%c24_47, %c0_48] : memref<176x128xbf16, #tpu.memory_space<vmem>>, vector<128x128xbf16>
    %c25 = arith.constant 25 : index
    %c0_49 = arith.constant 0 : index
    %63 = vector.load %arg8[%c25, %c0_49] : memref<176x128xbf16, #tpu.memory_space<vmem>>, vector<128x128xbf16>
    %64 = tpu.concatenate %61, %62, %63 in 1 : vector<128x128xbf16>, vector<128x128xbf16>, vector<128x128xbf16> -> vector<128x384xbf16>
    %c1_50 = arith.constant 1 : index
    %c0_51 = arith.constant 0 : index
    %c0_52 = arith.constant 0 : index
    %65 = vector.load %arg3[%c1_50, %c0_51, %c0_52] : memref<3x384x128xbf16, #tpu.memory_space<vmem>>, vector<1x384x128xbf16>
    %66 = vector.shape_cast %65 : vector<1x384x128xbf16> to vector<384x128xbf16>
    %cst_53 = arith.constant dense<0.000000e+00> : vector<128x128xf32>
    %67 = tpu.matmul %64, %66, %cst_53 {dimension_numbers = #tpu.dot_dimension_numbers<[1], [0], [0], [1], [0, 0, 1, 1], [], []>} : vector<128x384xbf16>, vector<384x128xbf16>, vector<128x128xf32> -> vector<128x128xf32>
    %68 = arith.addf %60, %67 : vector<128x128xf32>
    %c39 = arith.constant 39 : index
    %c0_54 = arith.constant 0 : index
    %69 = vector.load %arg8[%c39, %c0_54] : memref<176x128xbf16, #tpu.memory_space<vmem>>, vector<128x128xbf16>
    %c40 = arith.constant 40 : index
    %c0_55 = arith.constant 0 : index
    %70 = vector.load %arg8[%c40, %c0_55] : memref<176x128xbf16, #tpu.memory_space<vmem>>, vector<128x128xbf16>
    %c41 = arith.constant 41 : index
    %c0_56 = arith.constant 0 : index
    %71 = vector.load %arg8[%c41, %c0_56] : memref<176x128xbf16, #tpu.memory_space<vmem>>, vector<128x128xbf16>
    %72 = tpu.concatenate %69, %70, %71 in 1 : vector<128x128xbf16>, vector<128x128xbf16>, vector<128x128xbf16> -> vector<128x384xbf16>
    %c2_57 = arith.constant 2 : index
    %c0_58 = arith.constant 0 : index
    %c0_59 = arith.constant 0 : index
    %73 = vector.load %arg3[%c2_57, %c0_58, %c0_59] : memref<3x384x128xbf16, #tpu.memory_space<vmem>>, vector<1x384x128xbf16>
    %74 = vector.shape_cast %73 : vector<1x384x128xbf16> to vector<384x128xbf16>
    %cst_60 = arith.constant dense<0.000000e+00> : vector<128x128xf32>
    %75 = tpu.matmul %72, %74, %cst_60 {dimension_numbers = #tpu.dot_dimension_numbers<[1], [0], [0], [1], [0, 0, 1, 1], [], []>} : vector<128x384xbf16>, vector<384x128xbf16>, vector<128x128xf32> -> vector<128x128xf32>
    %76 = arith.addf %68, %75 : vector<128x128xf32>
    %77 = vector.broadcast %3 : vector<1x128xf32> to vector<128x128xf32>
    %78 = arith.mulf %76, %77 : vector<128x128xf32>
    %79 = vector.broadcast %4 : vector<1x128xf32> to vector<128x128xf32>
    %80 = arith.addf %78, %79 : vector<128x128xf32>
    %c0_61 = arith.constant 0 : index
    %c0_62 = arith.constant 0 : index
    %81 = vector.load %arg4[%c0_61, %c0_62] : memref<128x128xbf16, #tpu.memory_space<vmem>>, vector<128x128xbf16>
    %cst_63 = arith.constant dense<0.000000e+00> : vector<128x128xf32>
    %82 = tpu.matmul %21, %81, %cst_63 {dimension_numbers = #tpu.dot_dimension_numbers<[1], [0], [0], [1], [0, 0, 1, 1], [], []>} : vector<128x128xbf16>, vector<128x128xbf16>, vector<128x128xf32> -> vector<128x128xf32>
    %83 = vector.broadcast %5 : vector<1x128xf32> to vector<128x128xf32>
    %84 = arith.mulf %82, %83 : vector<128x128xf32>
    %85 = vector.broadcast %6 : vector<1x128xf32> to vector<128x128xf32>
    %86 = arith.addf %84, %85 : vector<128x128xf32>
    %87 = arith.addf %80, %86 : vector<128x128xf32>
    %cst_64 = arith.constant 0.000000e+00 : f32
    %88 = vector.broadcast %cst_64 : f32 to vector<128x128xf32>
    %89 = arith.maximumf %87, %88 : vector<128x128xf32>
    %90 = arith.truncf %89 : vector<128x128xf32> to vector<128x128xbf16>
    %c0_65 = arith.constant 0 : index
    %c0_66 = arith.constant 0 : index
    %c0_67 = arith.constant 0 : index
    %91 = vector.load %arg7[%c0_65, %c0_66, %c0_67] : memref<1x128x128xbf16, #tpu.memory_space<vmem>>, vector<1x128x128xbf16>
    %92 = vector.shape_cast %91 : vector<1x128x128xbf16> to vector<128x128xbf16>
    %93 = vector.shape_cast %90 : vector<128x128xbf16> to vector<1x128x128xbf16>
    tpu.vector_store %arg7[%c0_65, %c0_66, %c0_67], %93 {strides = array<i32>} : memref<1x128x128xbf16, #tpu.memory_space<vmem>>, vector<1x128x128xbf16>,
    return
  }
  func.func @transform_0(%arg0: i32) -> (i32, i32, i32) {
    %c0_i32 = arith.constant 0 : i32
    %c0_i32_0 = arith.constant 0 : i32
    %c0_i32_1 = arith.constant 0 : i32
    return %arg0, %c0_i32, %c0_i32_0 : i32, i32, i32
  }
  func.func @transform_1(%arg0: i32) -> (i32, i32, i32) {
    %c0_i32 = arith.constant 0 : i32
    %c0_i32_0 = arith.constant 0 : i32
    %c0_i32_1 = arith.constant 0 : i32
    %c0_i32_2 = arith.constant 0 : i32
    return %c0_i32, %c0_i32_0, %c0_i32_1 : i32, i32, i32
  }
  func.func @transform_2(%arg0: i32) -> (i32, i32, i32) {
    %c0_i32 = arith.constant 0 : i32
    %c0_i32_0 = arith.constant 0 : i32
    %c0_i32_1 = arith.constant 0 : i32
    %c0_i32_2 = arith.constant 0 : i32
    return %c0_i32, %c0_i32_0, %c0_i32_1 : i32, i32, i32
  }
  func.func @transform_3(%arg0: i32) -> (i32, i32) {
    %c0_i32 = arith.constant 0 : i32
    %c0_i32_0 = arith.constant 0 : i32
    %c0_i32_1 = arith.constant 0 : i32
    return %c0_i32, %c0_i32_0 : i32, i32
  }
  func.func @transform_4(%arg0: i32) -> (i32, i32) {
    %c0_i32 = arith.constant 0 : i32
    %c0_i32_0 = arith.constant 0 : i32
    %c0_i32_1 = arith.constant 0 : i32
    return %c0_i32, %c0_i32_0 : i32, i32
  }
  func.func @transform_5(%arg0: i32) -> (i32, i32) {
    %c0_i32 = arith.constant 0 : i32
    %c0_i32_0 = arith.constant 0 : i32
    %c0_i32_1 = arith.constant 0 : i32
    return %c0_i32, %c0_i32_0 : i32, i32
  }
  func.func @transform_6(%arg0: i32) -> (i32, i32, i32) {
    %c0_i32 = arith.constant 0 : i32
    %c0_i32_0 = arith.constant 0 : i32
    %c0_i32_1 = arith.constant 0 : i32
    return %arg0, %c0_i32, %c0_i32_0 : i32, i32, i32
  }
}

</mosaic_0001>

<llo_original>
// kernel: basic_blk_forward.1
$region0: #{basic_blk_forward.1}
  #allocation0 [shape = 'u32[]', space=smem, size = 0x4, offset = 0x4, fixed_abs, tag = 'smem constant byte address 0x4 - core index']
  #allocation1 [shape = 'u32[144,128]{1,0:T(1,128)}', space=vmem, size = 0x12000, scoped, tag = 'internal scratch']
  #allocation2 [shape = 'bf16[176,128]{1,0:T(16,128)(2,1)}', space=vmem, size = 0xb000, scoped, tag = 'scratch operand']
  %s0 = inlined_call_operand.vmem [shape: bf16[2,584,128], index: 0, kind: input, shape index: {}]
  %s1 = inlined_call_operand.vmem [shape: bf16[3,384,128], index: 1, kind: input, shape index: {}]
  %s2 = inlined_call_operand.vmem [shape: bf16[3,384,128], index: 2, kind: input, shape index: {}]
  %s3 = inlined_call_operand.vmem [shape: bf16[128,128], index: 3, kind: input, shape index: {}]
  %s4 = inlined_call_operand.vmem [shape: f32[6,128], index: 4, kind: input, shape index: {}]
  %s5 = inlined_call_operand.vmem [shape: f32[128,1], index: 5, kind: input, shape index: {}]
  %s6 = inlined_call_operand.vmem [shape: bf16[2,128,128], index: 6, kind: output, shape index: {}]
  %s7 = sld [smem:[#allocation0]]
  $region57: #{basic_blk_forward.1} parent=0
    _
  %s9 = ssub.s32 1, %s7
  %s10 = scalar_select 0, %s9, %s7
  loop: start=0, step=1, limit=4
  $region2: #{basic_blk_forward.1} parent=0 // loop_pre_header
    _
  $region3: #{basic_blk_forward.1} parent=0 // loop_header
    %s12 = sphi 0, %s16
    %p13 = scmp.ge.s32.totalorder %s12, 4
    %s22 = sphi 0, %s24
    %s25 = sphi 0, %s22
    %s26 = sphi 0, %s25
    %s42 = sphi 0, %s26
    %s46 = sphi 0, %s46
    %s48 = sphi 0, %s46
    %s49 = sphi 0, %s48
    %s63 = sphi 0, %s49
    %s67 = sphi 0, %s67
    %s69 = sphi 0, %s67
    %s70 = sphi 0, %s69
    %s84 = sphi 0, %s70
    %s88 = sphi 0, %s88
    %s90 = sphi 0, %s88
    %s91 = sphi 0, %s90
    %s105 = sphi 0, %s91
    %s109 = sphi 0, %s109
    %s111 = sphi 0, %s109
    %s112 = sphi 0, %s111
    %s126 = sphi 0, %s112
    %s130 = sphi 0, %s130
    %s132 = sphi 0, %s130
    %s133 = sphi 0, %s132
    %s147 = sphi 0, %s133
    %s153 = sphi 0, %s155
    %s156 = sphi 0, %s153
    %s157 = sphi 0, %s156
    %s173 = sphi 0, %s157
  $region4: #{basic_blk_forward.1} parent=0 // loop_header_branch
    %15 = sbr.rel (%p13) target = $region8
  $region5: #{basic_blk_forward.1} parent=0 // loop_body
    %s17 = ssub.s32 %s12, 1
    %s18 = ssub.s32 %s12, 2
    %s19 = sadd.s32 %s12, 1
    %s20 = ssub.s32 %s12, %s19
    %p21 = scmp.eq.s32.totalorder %s20, 0
    %s23 = sadd.s32 %s22, 1
    %s24 = scalar_select %p21, %s22, %s23
    %p27 = pneg %p21
    %p28 = scmp.eq.s32.totalorder %s12, 1
    %p29 = por %p27, %p28
    %p30 = scmp.ne.s32.totalorder %s22, %s25
    %p31 = scmp.eq.s32.totalorder %s12, 0
    %p32 = por %p30, %p31
    %p33 = scmp.ne.s32.totalorder %s22, %s25
    %p34 = scmp.eq.s32.totalorder %s17, 1
    %p35 = por %p33, %p34
    %p36 = scmp.ne.s32.totalorder %s25, %s26
    %p37 = scmp.eq.s32.totalorder %s17, 0
    %p38 = por %p36, %p37
    %p39 = scmp.ne.s32.totalorder %s25, %s26
    %p40 = scmp.eq.s32.totalorder %s18, 1
    %p41 = por %p39, %p40
    %p43 = scmp.ne.s32.totalorder %s26, %s42
    %p44 = scmp.eq.s32.totalorder %s18, 0
    %p45 = por %p43, %p44
    %s47 = sadd.s32 %s46, 1
    %p50 = scmp.eq.s32.totalorder %s12, 1
    %p51 = scmp.ne.s32.totalorder %s46, %s48
    %p52 = scmp.eq.s32.totalorder %s12, 0
    %p53 = por %p51, %p52
    %p54 = scmp.ne.s32.totalorder %s46, %s48
    %p55 = scmp.eq.s32.totalorder %s17, 1
    %p56 = por %p54, %p55
    %p57 = scmp.ne.s32.totalorder %s48, %s49
    %p58 = scmp.eq.s32.totalorder %s17, 0
    %p59 = por %p57, %p58
    %p60 = scmp.ne.s32.totalorder %s48, %s49
    %p61 = scmp.eq.s32.totalorder %s18, 1
    %p62 = por %p60, %p61
    %p64 = scmp.ne.s32.totalorder %s49, %s63
    %p65 = scmp.eq.s32.totalorder %s18, 0
    %p66 = por %p64, %p65
    %s68 = sadd.s32 %s67, 1
    %p71 = scmp.eq.s32.totalorder %s12, 1
    %p72 = scmp.ne.s32.totalorder %s67, %s69
    %p73 = scmp.eq.s32.totalorder %s12, 0
    %p74 = por %p72, %p73
    %p75 = scmp.ne.s32.totalorder %s67, %s69
    %p76 = scmp.eq.s32.totalorder %s17, 1
    %p77 = por %p75, %p76
    %p78 = scmp.ne.s32.totalorder %s69, %s70
    %p79 = scmp.eq.s32.totalorder %s17, 0
    %p80 = por %p78, %p79
    %p81 = scmp.ne.s32.totalorder %s69, %s70
    %p82 = scmp.eq.s32.totalorder %s18, 1
    %p83 = por %p81, %p82
    %p85 = scmp.ne.s32.totalorder %s70, %s84
    %p86 = scmp.eq.s32.totalorder %s18, 0
    %p87 = por %p85, %p86
    %s89 = sadd.s32 %s88, 1
    %p92 = scmp.eq.s32.totalorder %s12, 1
    %p93 = scmp.ne.s32.totalorder %s88, %s90
    %p94 = scmp.eq.s32.totalorder %s12, 0
    %p95 = por %p93, %p94
    %p96 = scmp.ne.s32.totalorder %s88, %s90
    %p97 = scmp.eq.s32.totalorder %s17, 1
    %p98 = por %p96, %p97
    %p99 = scmp.ne.s32.totalorder %s90, %s91
    %p100 = scmp.eq.s32.totalorder %s17, 0
    %p101 = por %p99, %p100
    %p102 = scmp.ne.s32.totalorder %s90, %s91
    %p103 = scmp.eq.s32.totalorder %s18, 1
    %p104 = por %p102, %p103
    %p106 = scmp.ne.s32.totalorder %s91, %s105
    %p107 = scmp.eq.s32.totalorder %s18, 0
    %p108 = por %p106, %p107
    %s110 = sadd.s32 %s109, 1
    %p113 = scmp.eq.s32.totalorder %s12, 1
    %p114 = scmp.ne.s32.totalorder %s109, %s111
    %p115 = scmp.eq.s32.totalorder %s12, 0
    %p116 = por %p114, %p115
    %p117 = scmp.ne.s32.totalorder %s109, %s111
    %p118 = scmp.eq.s32.totalorder %s17, 1
    %p119 = por %p117, %p118
    %p120 = scmp.ne.s32.totalorder %s111, %s112
    %p121 = scmp.eq.s32.totalorder %s17, 0
    %p122 = por %p120, %p121
    %p123 = scmp.ne.s32.totalorder %s111, %s112
    %p124 = scmp.eq.s32.totalorder %s18, 1
    %p125 = por %p123, %p124
    %p127 = scmp.ne.s32.totalorder %s112, %s126
    %p128 = scmp.eq.s32.totalorder %s18, 0
    %p129 = por %p127, %p128
    %s131 = sadd.s32 %s130, 1
    %p134 = scmp.eq.s32.totalorder %s12, 1
    %p135 = scmp.ne.s32.totalorder %s130, %s132
    %p136 = scmp.eq.s32.totalorder %s12, 0
    %p137 = por %p135, %p136
    %p138 = scmp.ne.s32.totalorder %s130, %s132
    %p139 = scmp.eq.s32.totalorder %s17, 1
    %p140 = por %p138, %p139
    %p141 = scmp.ne.s32.totalorder %s132, %s133
    %p142 = scmp.eq.s32.totalorder %s17, 0
    %p143 = por %p141, %p142
    %p144 = scmp.ne.s32.totalorder %s132, %s133
    %p145 = scmp.eq.s32.totalorder %s18, 1
    %p146 = por %p144, %p145
    %p148 = scmp.ne.s32.totalorder %s133, %s147
    %p149 = scmp.eq.s32.totalorder %s18, 0
    %p150 = por %p148, %p149
    %s151 = ssub.s32 %s12, %s19
    %p152 = scmp.eq.s32.totalorder %s151, 0
    %s154 = sadd.s32 %s153, 1
    %s155 = scalar_select %p152, %s153, %s154
    %p158 = pneg %p152
    %p159 = scmp.eq.s32.totalorder %s12, 1
    %p160 = por %p158, %p159
    %p161 = scmp.ne.s32.totalorder %s153, %s156
    %p162 = scmp.eq.s32.totalorder %s12, 0
    %p163 = por %p161, %p162
    %p164 = scmp.ne.s32.totalorder %s153, %s156
    %p165 = scmp.eq.s32.totalorder %s17, 1
    %p166 = por %p164, %p165
    %p167 = scmp.ne.s32.totalorder %s156, %s157
    %p168 = scmp.eq.s32.totalorder %s17, 0
    %p169 = por %p167, %p168
    %p170 = scmp.ne.s32.totalorder %s156, %s157
    %p171 = scmp.eq.s32.totalorder %s18, 1
    %p172 = por %p170, %p171
    %p174 = scmp.ne.s32.totalorder %s157, %s173
    %p175 = scmp.eq.s32.totalorder %s18, 0
    %p176 = por %p174, %p175
    %p177 = scmp.le.s32.totalorder 1, %s12
    %p178 = scmp.lt.s32.totalorder %s12, 3
    %p179 = pnand %p177, %p178
    %p180 = pneg %p179
    // Predicated region
    $region9: #{basic_blk_forward.1} parent=5 // pred_check
      _
    $region10: #{basic_blk_forward.1} parent=5 // pred_check_branch
      %182 = sbr.rel (%p179) target = $region12
    $region11: #{basic_blk_forward.1} parent=5 // pred_region
      %s183 = ssub.s32 %s12, 1
      // Predicated region
      $region13: #{basic_blk_forward.1} parent=11 // pred_check
        %p184 = pneg %p59
      $region14: #{basic_blk_forward.1} parent=11 // pred_check_branch
        %186 = sbr.rel (%p184) target = $region16
      $region15: #{basic_blk_forward.1} parent=11 // pred_region
        _
      $region16: #{basic_blk_forward.1} parent=11 // pred_fallthru
        _
      // Predicated region
      $region17: #{basic_blk_forward.1} parent=11 // pred_check
        %p187 = pneg %p80
      $region18: #{basic_blk_forward.1} parent=11 // pred_check_branch
        %189 = sbr.rel (%p187) target = $region20
      $region19: #{basic_blk_forward.1} parent=11 // pred_region
        _
      $region20: #{basic_blk_forward.1} parent=11 // pred_fallthru
        _
      // Predicated region
      $region21: #{basic_blk_forward.1} parent=11 // pred_check
        %p190 = pneg %p101
      $region22: #{basic_blk_forward.1} parent=11 // pred_check_branch
        %192 = sbr.rel (%p190) target = $region24
      $region23: #{basic_blk_forward.1} parent=11 // pred_region
        _
      $region24: #{basic_blk_forward.1} parent=11 // pred_fallthru
        _
      // Predicated region
      $region25: #{basic_blk_forward.1} parent=11 // pred_check
        %p193 = pneg %p122
      $region26: #{basic_blk_forward.1} parent=11 // pred_check_branch
        %195 = sbr.rel (%p193) target = $region28
      $region27: #{basic_blk_forward.1} parent=11 // pred_region
        _
      $region28: #{basic_blk_forward.1} parent=11 // pred_fallthru
        _
      // Predicated region
      $region29: #{basic_blk_forward.1} parent=11 // pred_check
        %p196 = pneg %p143
      $region30: #{basic_blk_forward.1} parent=11 // pred_check_branch
        %198 = sbr.rel (%p196) target = $region32
      $region31: #{basic_blk_forward.1} parent=11 // pred_region
        _
      $region32: #{basic_blk_forward.1} parent=11 // pred_fallthru
        _
    $region12: #{basic_blk_forward.1} parent=5 // pred_fallthru
      _
    %p199 = scmp.lt.s32.totalorder %s12, 2
    // Predicated region
    $region33: #{basic_blk_forward.1} parent=5 // pred_check
      %p200 = pneg %p199
    $region34: #{basic_blk_forward.1} parent=5 // pred_check_branch
      %202 = sbr.rel (%p200) target = $region36
    $region35: #{basic_blk_forward.1} parent=5 // pred_region
      // Predicated region
      $region37: #{basic_blk_forward.1} parent=35 // pred_check
        %p203 = pneg %p32
      $region38: #{basic_blk_forward.1} parent=35 // pred_check_branch
        %205 = sbr.rel (%p203) target = $region40
      $region39: #{basic_blk_forward.1} parent=35 // pred_region
        %p206 = scmp.lt.s32.totalorder %s12, 1
        %s207 = scalar_select %p206, %s12, 1
        %s208 = smul.addr %s207, 73
        %s209 = smul.addr %s208, 4
        %s210 = scalar_lea.vmem %s0, %s209
      $region40: #{basic_blk_forward.1} parent=35 // pred_fallthru
        _
    $region36: #{basic_blk_forward.1} parent=5 // pred_fallthru
      _
    %p211 = scmp.le.s32.totalorder 1, %s12
    %p212 = scmp.lt.s32.totalorder %s12, 3
    %p213 = pnand %p211, %p212
    %p214 = pneg %p213
    // Predicated region
    $region41: #{basic_blk_forward.1} parent=5 // pred_check
      _
    $region42: #{basic_blk_forward.1} parent=5 // pred_check_branch
      %216 = sbr.rel (%p213) target = $region44
    $region43: #{basic_blk_forward.1} parent=5 // pred_region
      %s217 = ssub.s32 %s12, 1
      %p218 = scmp.lt.s32.totalorder %s17, 1
      %s219 = scalar_select %p218, %s17, 1
      %s220 = smul.addr %s219, 73
      %s221 = smul.addr %s220, 4
      %s222 = scalar_lea.vmem %s0, %s221
      %p223 = pneg %p38
      %p224 = pneg %p35
      %p225 = pneg %p59
      %p226 = pneg %p56
      %p227 = pneg %p80
      %p228 = pneg %p77
      %p229 = pneg %p101
      %p230 = pneg %p98
      %p231 = pneg %p122
      %p232 = pneg %p119
      %p233 = pneg %p143
      %p234 = pneg %p140
      %p235 = pneg %p169
      %p236 = pneg %p166
      %p237 = scmp.lt.s32.totalorder %s17, 1
      %s238 = scalar_select %p237, %s17, 1
      %s239 = smul.addr %s238, 16
      %s240 = smul.addr %s239, 4
      %s241 = scalar_lea.vmem %s6, %s240
      %p242 = scmp.lt.s32.totalorder %s17, 1
      %s243 = scalar_select %p242, %s17, 1
      %s244 = smul.addr %s243, 73
      %s245 = smul.addr %s244, 4
      %s246 = scalar_lea.vmem %s0, %s245
      %p247 = scmp.lt.s32.totalorder %s17, 1
      %s248 = scalar_select %p247, %s17, 1
      %s249 = smul.addr %s248, 16
      %s250 = smul.addr %s249, 4
      %s251 = scalar_lea.vmem %s6, %s250
      %v253 = vld [vmem:[%s4] sm:$0x3f]
      %v254 = vld [vmem:[%s5] sm:$0xff]
      %v255 = vld [vmem:[%s5 + $0x8] sm:$0xff]
      %v256 = vld [vmem:[%s5 + $0x10] sm:$0xff]
      %v257 = vld [vmem:[%s5 + $0x18] sm:$0xff]
      %v258 = vld [vmem:[%s5 + $0x20] sm:$0xff]
      %v259 = vld [vmem:[%s5 + $0x28] sm:$0xff]
      %v260 = vld [vmem:[%s5 + $0x30] sm:$0xff]
      %v261 = vld [vmem:[%s5 + $0x38] sm:$0xff]
      %v262 = vld [vmem:[%s5 + $0x40] sm:$0xff]
      %v263 = vld [vmem:[%s5 + $0x48] sm:$0xff]
      %v264 = vld [vmem:[%s5 + $0x50] sm:$0xff]
      %v265 = vld [vmem:[%s5 + $0x58] sm:$0xff]
      %v266 = vld [vmem:[%s5 + $0x60] sm:$0xff]
      %v267 = vld [vmem:[%s5 + $0x68] sm:$0xff]
      %v268 = vld [vmem:[%s5 + $0x70] sm:$0xff]
      %v269 = vld [vmem:[%s5 + $0x78] sm:$0xff]
      %v270 = vld [vmem:[%s246] sm:$0xf]
      %v271 = vld [vmem:[%s246 + $0x4] sm:$0xf]
      %v272 = vld [vmem:[%s246 + $0x8] sm:$0xf]
      %v273 = vld [vmem:[%s246 + $0xc] sm:$0xf]
      %v274 = vld [vmem:[%s246 + $0x10] sm:$0xf]
      %v275 = vld [vmem:[%s246 + $0x14] sm:$0xf]
      %v276 = vld [vmem:[%s246 + $0x18] sm:$0xf]
      %v277 = vld [vmem:[%s246 + $0x1c] sm:$0xf]
      %v278 = vld [vmem:[%s246 + $0x20] sm:$0xf]
      %v279 = vld [vmem:[%s246 + $0x24] sm:$0xf]
      %v280 = vld [vmem:[%s246 + $0x28] sm:$0xf]
      %v281 = vld [vmem:[%s246 + $0x2c] sm:$0xf]
      %v282 = vld [vmem:[%s246 + $0x30] sm:$0xf]
      %v283 = vld [vmem:[%s246 + $0x34] sm:$0xf]
      %v284 = vld [vmem:[%s246 + $0x38] sm:$0xf]
      %v285 = vld [vmem:[%s246 + $0x3c] sm:$0xf]
      %v286 = vld [vmem:[%s246 + $0x48] sm:$0xf]
      %v287 = vld [vmem:[%s246 + $0x4c] sm:$0xf]
      %v288 = vld [vmem:[%s246 + $0x50] sm:$0xf]
      %v289 = vld [vmem:[%s246 + $0x54] sm:$0xf]
      %v290 = vld [vmem:[%s246 + $0x58] sm:$0xf]
      %v291 = vld [vmem:[%s246 + $0x5c] sm:$0xf]
      %v292 = vld [vmem:[%s246 + $0x60] sm:$0xf]
      %v293 = vld [vmem:[%s246 + $0x64] sm:$0xf]
      %v294 = vld [vmem:[%s246 + $0x68] sm:$0xf]
      %v295 = vld [vmem:[%s246 + $0x6c] sm:$0xf]
      %v296 = vld [vmem:[%s246 + $0x70] sm:$0xf]
      %v297 = vld [vmem:[%s246 + $0x74] sm:$0xf]
      %v298 = vld [vmem:[%s246 + $0x78] sm:$0xf]
      %v299 = vld [vmem:[%s246 + $0x7c] sm:$0xf]
      %v300 = vld [vmem:[%s246 + $0x80] sm:$0xf]
      %v301 = vld [vmem:[%s246 + $0x84] sm:$0xf]
      %v302 = vld [vmem:[%s246 + $0x40] sm:$0x1]
      %v319 = vunpack.c.l.b16 %v270
      %v320 = vunpack.c.l.b16 %v271
      %v321 = vunpack.c.l.b16 %v272
      %v322 = vunpack.c.l.b16 %v273
      %v323 = vunpack.c.l.b16 %v274
      %v324 = vunpack.c.l.b16 %v275
      %v325 = vunpack.c.l.b16 %v276
      %v326 = vunpack.c.l.b16 %v277
      %v327 = vunpack.c.l.b16 %v278
      %v328 = vunpack.c.l.b16 %v279
      %v329 = vunpack.c.l.b16 %v280
      %v330 = vunpack.c.l.b16 %v281
      %v331 = vunpack.c.l.b16 %v282
      %v332 = vunpack.c.l.b16 %v283
      %v333 = vunpack.c.l.b16 %v284
      %v334 = vunpack.c.l.b16 %v285
      %v335 = vpack.c.b16 %v320, %v319
      %v336 = vpack.c.b16 %v322, %v321
      %v337 = vpack.c.b16 %v324, %v323
      %v338 = vpack.c.b16 %v326, %v325
      %v339 = vpack.c.b16 %v328, %v327
      %v340 = vpack.c.b16 %v330, %v329
      %v341 = vpack.c.b16 %v332, %v331
      %v342 = vpack.c.b16 %v334, %v333
      %v367 = vunpack.c.l.b16 %v286
      %v368 = vunpack.c.l.b16 %v287
      %v369 = vunpack.c.l.b16 %v288
      %v370 = vunpack.c.l.b16 %v289
      %v371 = vunpack.c.l.b16 %v290
      %v372 = vunpack.c.l.b16 %v291
      %v373 = vunpack.c.l.b16 %v292
      %v374 = vunpack.c.l.b16 %v293
      %v375 = vunpack.c.l.b16 %v294
      %v376 = vunpack.c.l.b16 %v295
      %v377 = vunpack.c.l.b16 %v296
      %v378 = vunpack.c.l.b16 %v297
      %v379 = vunpack.c.l.b16 %v298
      %v380 = vunpack.c.l.b16 %v299
      %v381 = vunpack.c.l.b16 %v300
      %v382 = vunpack.c.l.b16 %v301
      %v383 = vpack.c.b16 %v368, %v367
      %v384 = vpack.c.b16 %v370, %v369
      %v385 = vpack.c.b16 %v372, %v371
      %v386 = vpack.c.b16 %v374, %v373
      %v387 = vpack.c.b16 %v376, %v375
      %v388 = vpack.c.b16 %v378, %v377
      %v389 = vpack.c.b16 %v380, %v379
      %v390 = vpack.c.b16 %v382, %v381
      %v400 = vunpack.c.l.b16 %v302
      %v401 = vpack.c.b16 %v400, %v400
      %vm402 = vsmask.f32 7424
      %v404 = vshrl.u32 %v335, 16
      %v406 = vshll.u32 %v335, 16
      %v408 = vrot.slane %v406, 1
      %v409 = vor.u32 %v404, %v408
      %v411 = vshll.u32 %v336, 16
      %v413 = vrot.slane %v411, 1
      %v414 = vsel %vm402, %v409, %v413
      %v415 = vshrl.u32 %v336, 16
      %v417 = vor.u32 %v415, %v413
      %v419 = vshll.u32 %v337, 16
      %v421 = vrot.slane %v419, 1
      %v422 = vsel %vm402, %v417, %v421
      %v423 = vshrl.u32 %v337, 16
      %v425 = vor.u32 %v423, %v421
      %v427 = vshll.u32 %v338, 16
      %v429 = vrot.slane %v427, 1
      %v430 = vsel %vm402, %v425, %v429
      %v431 = vshrl.u32 %v338, 16
      %v433 = vor.u32 %v431, %v429
      %v435 = vshll.u32 %v339, 16
      %v437 = vrot.slane %v435, 1
      %v438 = vsel %vm402, %v433, %v437
      %v439 = vshrl.u32 %v339, 16
      %v441 = vor.u32 %v439, %v437
      %v443 = vshll.u32 %v340, 16
      %v445 = vrot.slane %v443, 1
      %v446 = vsel %vm402, %v441, %v445
      %v447 = vshrl.u32 %v340, 16
      %v449 = vor.u32 %v447, %v445
      %v451 = vshll.u32 %v341, 16
      %v453 = vrot.slane %v451, 1
      %v454 = vsel %vm402, %v449, %v453
      %v455 = vshrl.u32 %v341, 16
      %v457 = vor.u32 %v455, %v453
      %v459 = vshll.u32 %v342, 16
      %v461 = vrot.slane %v459, 1
      %v462 = vsel %vm402, %v457, %v461
      %v463 = vshrl.u32 %v342, 16
      %v465 = vor.u32 %v463, %v461
      %v467 = vshll.u32 %v401, 16
      %v469 = vrot.slane %v467, 1
      %v470 = vsel %vm402, %v465, %v469
      %v479 = vld [vmem:[%s1] sm:$0xf]
      %v480 = vld [vmem:[%s1 + $0x4] sm:$0xf]
      %v481 = vld [vmem:[%s1 + $0x8] sm:$0xf]
      %v482 = vld [vmem:[%s1 + $0xc] sm:$0xf]
      %v483 = vld [vmem:[%s1 + $0x10] sm:$0xf]
      %v484 = vld [vmem:[%s1 + $0x14] sm:$0xf]
      %v485 = vld [vmem:[%s1 + $0x18] sm:$0xf]
      %v486 = vld [vmem:[%s1 + $0x1c] sm:$0xf]
      %v487 = vld [vmem:[%s1 + $0x20] sm:$0xf]
      %v488 = vld [vmem:[%s1 + $0x24] sm:$0xf]
      %v489 = vld [vmem:[%s1 + $0x28] sm:$0xf]
      %v490 = vld [vmem:[%s1 + $0x2c] sm:$0xf]
      %v491 = vld [vmem:[%s1 + $0x30] sm:$0xf]
      %v492 = vld [vmem:[%s1 + $0x34] sm:$0xf]
      %v493 = vld [vmem:[%s1 + $0x38] sm:$0xf]
      %v494 = vld [vmem:[%s1 + $0x3c] sm:$0xf]
      %v495 = vld [vmem:[%s1 + $0x40] sm:$0xf]
      %v496 = vld [vmem:[%s1 + $0x44] sm:$0xf]
      %v497 = vld [vmem:[%s1 + $0x48] sm:$0xf]
      %v498 = vld [vmem:[%s1 + $0x4c] sm:$0xf]
      %v499 = vld [vmem:[%s1 + $0x50] sm:$0xf]
      %v500 = vld [vmem:[%s1 + $0x54] sm:$0xf]
      %v501 = vld [vmem:[%s1 + $0x58] sm:$0xf]
      %v502 = vld [vmem:[%s1 + $0x5c] sm:$0xf]
      %v503 = vld [vmem:[%s1 + $0x60] sm:$0xf]
      %v504 = vld [vmem:[%s1 + $0x64] sm:$0xf]
      %v505 = vld [vmem:[%s1 + $0x68] sm:$0xf]
      %v506 = vld [vmem:[%s1 + $0x6c] sm:$0xf]
      %v507 = vld [vmem:[%s1 + $0x70] sm:$0xf]
      %v508 = vld [vmem:[%s1 + $0x74] sm:$0xf]
      %v509 = vld [vmem:[%s1 + $0x78] sm:$0xf]
      %v510 = vld [vmem:[%s1 + $0x7c] sm:$0xf]
      %v511 = vld [vmem:[%s1 + $0x80] sm:$0xf]
      %v512 = vld [vmem:[%s1 + $0x84] sm:$0xf]
      %v513 = vld [vmem:[%s1 + $0x88] sm:$0xf]
      %v514 = vld [vmem:[%s1 + $0x8c] sm:$0xf]
      %v515 = vld [vmem:[%s1 + $0x90] sm:$0xf]
      %v516 = vld [vmem:[%s1 + $0x94] sm:$0xf]
      %v517 = vld [vmem:[%s1 + $0x98] sm:$0xf]
      %v518 = vld [vmem:[%s1 + $0x9c] sm:$0xf]
      %v519 = vld [vmem:[%s1 + $0xa0] sm:$0xf]
      %v520 = vld [vmem:[%s1 + $0xa4] sm:$0xf]
      %v521 = vld [vmem:[%s1 + $0xa8] sm:$0xf]
      %v522 = vld [vmem:[%s1 + $0xac] sm:$0xf]
      %v523 = vld [vmem:[%s1 + $0xb0] sm:$0xf]
      %v524 = vld [vmem:[%s1 + $0xb4] sm:$0xf]
      %v525 = vld [vmem:[%s1 + $0xb8] sm:$0xf]
      %v526 = vld [vmem:[%s1 + $0xbc] sm:$0xf]
      %v527 = vld [vmem:[%s246 + $0x90] sm:$0xf]
      %v528 = vld [vmem:[%s246 + $0x94] sm:$0xf]
      %v529 = vld [vmem:[%s246 + $0x98] sm:$0xf]
      %v530 = vld [vmem:[%s246 + $0x9c] sm:$0xf]
      %v531 = vld [vmem:[%s246 + $0xa0] sm:$0xf]
      %v532 = vld [vmem:[%s246 + $0xa4] sm:$0xf]
      %v533 = vld [vmem:[%s246 + $0xa8] sm:$0xf]
      %v534 = vld [vmem:[%s246 + $0xac] sm:$0xf]
      %v535 = vld [vmem:[%s246 + $0xb0] sm:$0xf]
      %v536 = vld [vmem:[%s246 + $0xb4] sm:$0xf]
      %v537 = vld [vmem:[%s246 + $0xb8] sm:$0xf]
      %v538 = vld [vmem:[%s246 + $0xbc] sm:$0xf]
      %v539 = vld [vmem:[%s246 + $0xc0] sm:$0xf]
      %v540 = vld [vmem:[%s246 + $0xc4] sm:$0xf]
      %v541 = vld [vmem:[%s246 + $0xc8] sm:$0xf]
      %v542 = vld [vmem:[%s246 + $0xcc] sm:$0xf]
      %v543 = vld [vmem:[%s246 + $0xd8] sm:$0xf]
      %v544 = vld [vmem:[%s246 + $0xdc] sm:$0xf]
      %v545 = vld [vmem:[%s246 + $0xe0] sm:$0xf]
      %v546 = vld [vmem:[%s246 + $0xe4] sm:$0xf]
      %v547 = vld [vmem:[%s246 + $0xe8] sm:$0xf]
      %v548 = vld [vmem:[%s246 + $0xec] sm:$0xf]
      %v549 = vld [vmem:[%s246 + $0xf0] sm:$0xf]
      %v550 = vld [vmem:[%s246 + $0xf4] sm:$0xf]
      %v551 = vld [vmem:[%s246 + $0xf8] sm:$0xf]
      %v552 = vld [vmem:[%s246 + $0xfc] sm:$0xf]
      %v553 = vld [vmem:[%s246 + $0x100] sm:$0xf]
      %v554 = vld [vmem:[%s246 + $0x104] sm:$0xf]
      %v555 = vld [vmem:[%s246 + $0x108] sm:$0xf]
      %v556 = vld [vmem:[%s246 + $0x10c] sm:$0xf]
      %v557 = vld [vmem:[%s246 + $0x110] sm:$0xf]
      %v558 = vld [vmem:[%s246 + $0x114] sm:$0xf]
      %v559 = vld [vmem:[%s246 + $0xd0] sm:$0x1]
      %v576 = vunpack.c.l.b16 %v527
      %v577 = vunpack.c.l.b16 %v528
      %v578 = vunpack.c.l.b16 %v529
      %v579 = vunpack.c.l.b16 %v530
      %v580 = vunpack.c.l.b16 %v531
      %v581 = vunpack.c.l.b16 %v532
      %v582 = vunpack.c.l.b16 %v533
      %v583 = vunpack.c.l.b16 %v534
      %v584 = vunpack.c.l.b16 %v535
      %v585 = vunpack.c.l.b16 %v536
      %v586 = vunpack.c.l.b16 %v537
      %v587 = vunpack.c.l.b16 %v538
      %v588 = vunpack.c.l.b16 %v539
      %v589 = vunpack.c.l.b16 %v540
      %v590 = vunpack.c.l.b16 %v541
      %v591 = vunpack.c.l.b16 %v542
      %v592 = vpack.c.b16 %v577, %v576
      %v593 = vpack.c.b16 %v579, %v578
      %v594 = vpack.c.b16 %v581, %v580
      %v595 = vpack.c.b16 %v583, %v582
      %v596 = vpack.c.b16 %v585, %v584
      %v597 = vpack.c.b16 %v587, %v586
      %v598 = vpack.c.b16 %v589, %v588
      %v599 = vpack.c.b16 %v591, %v590
      %v624 = vunpack.c.l.b16 %v543
      %v625 = vunpack.c.l.b16 %v544
      %v626 = vunpack.c.l.b16 %v545
      %v627 = vunpack.c.l.b16 %v546
      %v628 = vunpack.c.l.b16 %v547
      %v629 = vunpack.c.l.b16 %v548
      %v630 = vunpack.c.l.b16 %v549
      %v631 = vunpack.c.l.b16 %v550
      %v632 = vunpack.c.l.b16 %v551
      %v633 = vunpack.c.l.b16 %v552
      %v634 = vunpack.c.l.b16 %v553
      %v635 = vunpack.c.l.b16 %v554
      %v636 = vunpack.c.l.b16 %v555
      %v637 = vunpack.c.l.b16 %v556
      %v638 = vunpack.c.l.b16 %v557
      %v639 = vunpack.c.l.b16 %v558
      %v640 = vpack.c.b16 %v625, %v624
      %v641 = vpack.c.b16 %v627, %v626
      %v642 = vpack.c.b16 %v629, %v628
      %v643 = vpack.c.b16 %v631, %v630
      %v644 = vpack.c.b16 %v633, %v632
      %v645 = vpack.c.b16 %v635, %v634
      %v646 = vpack.c.b16 %v637, %v636
      %v647 = vpack.c.b16 %v639, %v638
      %v657 = vunpack.c.l.b16 %v559
      %v658 = vpack.c.b16 %v657, %v657
      %v660 = vshrl.u32 %v592, 16
      %v662 = vshll.u32 %v592, 16
      %v664 = vrot.slane %v662, 1
      %v665 = vor.u32 %v660, %v664
      %v667 = vshll.u32 %v593, 16
      %v669 = vrot.slane %v667, 1
      %v670 = vsel %vm402, %v665, %v669
      %v671 = vshrl.u32 %v593, 16
      %v673 = vor.u32 %v671, %v669
      %v675 = vshll.u32 %v594, 16
      %v677 = vrot.slane %v675, 1
      %v678 = vsel %vm402, %v673, %v677
      %v679 = vshrl.u32 %v594, 16
      %v681 = vor.u32 %v679, %v677
      %v683 = vshll.u32 %v595, 16
      %v685 = vrot.slane %v683, 1
      %v686 = vsel %vm402, %v681, %v685
      %v687 = vshrl.u32 %v595, 16
      %v689 = vor.u32 %v687, %v685
      %v691 = vshll.u32 %v596, 16
      %v693 = vrot.slane %v691, 1
      %v694 = vsel %vm402, %v689, %v693
      %v695 = vshrl.u32 %v596, 16
      %v697 = vor.u32 %v695, %v693
      %v699 = vshll.u32 %v597, 16
      %v701 = vrot.slane %v699, 1
      %v702 = vsel %vm402, %v697, %v701
      %v703 = vshrl.u32 %v597, 16
      %v705 = vor.u32 %v703, %v701
      %v707 = vshll.u32 %v598, 16
      %v709 = vrot.slane %v707, 1
      %v710 = vsel %vm402, %v705, %v709
      %v711 = vshrl.u32 %v598, 16
      %v713 = vor.u32 %v711, %v709
      %v715 = vshll.u32 %v599, 16
      %v717 = vrot.slane %v715, 1
      %v718 = vsel %vm402, %v713, %v717
      %v719 = vshrl.u32 %v599, 16
      %v721 = vor.u32 %v719, %v717
      %v723 = vshll.u32 %v658, 16
      %v725 = vrot.slane %v723, 1
      %v726 = vsel %vm402, %v721, %v725
      %s735 = scalar_lea.vmem %s1, 192
      %v736 = vld [vmem:[%s735] sm:$0xf]
      %v737 = vld [vmem:[%s735 + $0x4] sm:$0xf]
      %v738 = vld [vmem:[%s735 + $0x8] sm:$0xf]
      %v739 = vld [vmem:[%s735 + $0xc] sm:$0xf]
      %v740 = vld [vmem:[%s735 + $0x10] sm:$0xf]
      %v741 = vld [vmem:[%s735 + $0x14] sm:$0xf]
      %v742 = vld [vmem:[%s735 + $0x18] sm:$0xf]
      %v743 = vld [vmem:[%s735 + $0x1c] sm:$0xf]
      %v744 = vld [vmem:[%s735 + $0x20] sm:$0xf]
      %v745 = vld [vmem:[%s735 + $0x24] sm:$0xf]
      %v746 = vld [vmem:[%s735 + $0x28] sm:$0xf]
      %v747 = vld [vmem:[%s735 + $0x2c] sm:$0xf]
      %v748 = vld [vmem:[%s735 + $0x30] sm:$0xf]
      %v749 = vld [vmem:[%s735 + $0x34] sm:$0xf]
      %v750 = vld [vmem:[%s735 + $0x38] sm:$0xf]
      %v751 = vld [vmem:[%s735 + $0x3c] sm:$0xf]
      %v752 = vld [vmem:[%s735 + $0x40] sm:$0xf]
      %v753 = vld [vmem:[%s735 + $0x44] sm:$0xf]
      %v754 = vld [vmem:[%s735 + $0x48] sm:$0xf]
      %v755 = vld [vmem:[%s735 + $0x4c] sm:$0xf]
      %v756 = vld [vmem:[%s735 + $0x50] sm:$0xf]
      %v757 = vld [vmem:[%s735 + $0x54] sm:$0xf]
      %v758 = vld [vmem:[%s735 + $0x58] sm:$0xf]
      %v759 = vld [vmem:[%s735 + $0x5c] sm:$0xf]
      %v760 = vld [vmem:[%s735 + $0x60] sm:$0xf]
      %v761 = vld [vmem:[%s735 + $0x64] sm:$0xf]
      %v762 = vld [vmem:[%s735 + $0x68] sm:$0xf]
      %v763 = vld [vmem:[%s735 + $0x6c] sm:$0xf]
      %v764 = vld [vmem:[%s735 + $0x70] sm:$0xf]
      %v765 = vld [vmem:[%s735 + $0x74] sm:$0xf]
      %v766 = vld [vmem:[%s735 + $0x78] sm:$0xf]
      %v767 = vld [vmem:[%s735 + $0x7c] sm:$0xf]
      %v768 = vld [vmem:[%s735 + $0x80] sm:$0xf]
      %v769 = vld [vmem:[%s735 + $0x84] sm:$0xf]
      %v770 = vld [vmem:[%s735 + $0x88] sm:$0xf]
      %v771 = vld [vmem:[%s735 + $0x8c] sm:$0xf]
      %v772 = vld [vmem:[%s735 + $0x90] sm:$0xf]
      %v773 = vld [vmem:[%s735 + $0x94] sm:$0xf]
      %v774 = vld [vmem:[%s735 + $0x98] sm:$0xf]
      %v775 = vld [vmem:[%s735 + $0x9c] sm:$0xf]
      %v776 = vld [vmem:[%s735 + $0xa0] sm:$0xf]
      %v777 = vld [vmem:[%s735 + $0xa4] sm:$0xf]
      %v778 = vld [vmem:[%s735 + $0xa8] sm:$0xf]
      %v779 = vld [vmem:[%s735 + $0xac] sm:$0xf]
      %v780 = vld [vmem:[%s735 + $0xb0] sm:$0xf]
      %v781 = vld [vmem:[%s735 + $0xb4] sm:$0xf]
      %v782 = vld [vmem:[%s735 + $0xb8] sm:$0xf]
      %v783 = vld [vmem:[%s735 + $0xbc] sm:$0xf]
      %v832 = vunpack.c.l.b16 %v736
      %v833 = vunpack.c.l.b16 %v737
      %v834 = vunpack.c.l.b16 %v738
      %v835 = vunpack.c.l.b16 %v739
      %v836 = vunpack.c.l.b16 %v740
      %v837 = vunpack.c.l.b16 %v741
      %v838 = vunpack.c.l.b16 %v742
      %v839 = vunpack.c.l.b16 %v743
      %v840 = vunpack.c.l.b16 %v744
      %v841 = vunpack.c.l.b16 %v745
      %v842 = vunpack.c.l.b16 %v746
      %v843 = vunpack.c.l.b16 %v747
      %v844 = vunpack.c.l.b16 %v748
      %v845 = vunpack.c.l.b16 %v749
      %v846 = vunpack.c.l.b16 %v750
      %v847 = vunpack.c.l.b16 %v751
      %v848 = vunpack.c.l.b16 %v752
      %v849 = vunpack.c.l.b16 %v753
      %v850 = vunpack.c.l.b16 %v754
      %v851 = vunpack.c.l.b16 %v755
      %v852 = vunpack.c.l.b16 %v756
      %v853 = vunpack.c.l.b16 %v757
      %v854 = vunpack.c.l.b16 %v758
      %v855 = vunpack.c.l.b16 %v759
      %v856 = vunpack.c.l.b16 %v760
      %v857 = vunpack.c.l.b16 %v761
      %v858 = vunpack.c.l.b16 %v762
      %v859 = vunpack.c.l.b16 %v763
      %v860 = vunpack.c.l.b16 %v764
      %v861 = vunpack.c.l.b16 %v765
      %v862 = vunpack.c.l.b16 %v766
      %v863 = vunpack.c.l.b16 %v767
      %v864 = vunpack.c.l.b16 %v768
      %v865 = vunpack.c.l.b16 %v769
      %v866 = vunpack.c.l.b16 %v770
      %v867 = vunpack.c.l.b16 %v771
      %v868 = vunpack.c.l.b16 %v772
      %v869 = vunpack.c.l.b16 %v773
      %v870 = vunpack.c.l.b16 %v774
      %v871 = vunpack.c.l.b16 %v775
      %v872 = vunpack.c.l.b16 %v776
      %v873 = vunpack.c.l.b16 %v777
      %v874 = vunpack.c.l.b16 %v778
      %v875 = vunpack.c.l.b16 %v779
      %v876 = vunpack.c.l.b16 %v780
      %v877 = vunpack.c.l.b16 %v781
      %v878 = vunpack.c.l.b16 %v782
      %v879 = vunpack.c.l.b16 %v783
      %v880 = vpack.c.b16 %v833, %v832
      %v881 = vpack.c.b16 %v835, %v834
      %v882 = vpack.c.b16 %v837, %v836
      %v883 = vpack.c.b16 %v839, %v838
      %v884 = vpack.c.b16 %v841, %v840
      %v885 = vpack.c.b16 %v843, %v842
      %v886 = vpack.c.b16 %v845, %v844
      %v887 = vpack.c.b16 %v847, %v846
      %v888 = vpack.c.b16 %v849, %v848
      %v889 = vpack.c.b16 %v851, %v850
      %v890 = vpack.c.b16 %v853, %v852
      %v891 = vpack.c.b16 %v855, %v854
      %v892 = vpack.c.b16 %v857, %v856
      %v893 = vpack.c.b16 %v859, %v858
      %v894 = vpack.c.b16 %v861, %v860
      %v895 = vpack.c.b16 %v863, %v862
      %v896 = vpack.c.b16 %v865, %v864
      %v897 = vpack.c.b16 %v867, %v866
      %v898 = vpack.c.b16 %v869, %v868
      %v899 = vpack.c.b16 %v871, %v870
      %v900 = vpack.c.b16 %v873, %v872
      %v901 = vpack.c.b16 %v875, %v874
      %v902 = vpack.c.b16 %v877, %v876
      %v903 = vpack.c.b16 %v879, %v878
      %928 = vmatprep.subr.bf16.mxu0 0
      %929 = vmatpush1.bf16.msra.mxu0 %v880
      %930 = vmatprep.subr.bf16.mxu0 0
      %931 = vmatpush1.bf16.msra.mxu0 %v881
      %932 = vmatprep.subr.bf16.mxu0 0
      %933 = vmatpush1.bf16.msra.mxu0 %v882
      %934 = vmatprep.subr.bf16.mxu0 0
      %935 = vmatpush1.bf16.msra.mxu0 %v883
      %936 = vmatprep.subr.bf16.mxu0 0
      %937 = vmatpush1.bf16.msra.mxu0 %v884
      %938 = vmatprep.subr.bf16.mxu0 0
      %939 = vmatpush1.bf16.msra.mxu0 %v885
      %940 = vmatprep.subr.bf16.mxu0 0
      %941 = vmatpush1.bf16.msra.mxu0 %v886
      %942 = vmatprep.subr.bf16.mxu0 0
      %943 = vmatpush1.bf16.msra.mxu0 %v887
      %944 = vmatprep.subr.bf16.mxu0 0
      %945 = vmatpush1.bf16.msra.mxu0 %v888
      %946 = vmatprep.subr.bf16.mxu0 0
      %947 = vmatpush1.bf16.msra.mxu0 %v889
      %948 = vmatprep.subr.bf16.mxu0 0
      %949 = vmatpush1.bf16.msra.mxu0 %v890
      %950 = vmatprep.subr.bf16.mxu0 0
      %951 = vmatpush1.bf16.msra.mxu0 %v891
      %952 = vmatprep.subr.bf16.mxu0 0
      %953 = vmatpush1.bf16.msra.mxu0 %v892
      %954 = vmatprep.subr.bf16.mxu0 0
      %955 = vmatpush1.bf16.msra.mxu0 %v893
      %956 = vmatprep.subr.bf16.mxu0 0
      %957 = vmatpush1.bf16.msra.mxu0 %v894
      %958 = vmatprep.subr.bf16.mxu0 0
      %959 = vmatpush1.bf16.msra.mxu0 %v895
      %960 = vmatprep.mubr.bf16.mxu0 %v640
      %961 = vmatmul.mubr.bf16.gmra.mrb[0].mxu0 %v592
      %v962 = vpop.f32.mrb[0].mxu0
      %v963 = vadd.f32 0.0, %v962
      %v964 = vpop.f32.mrb[0].mxu0
      %v965 = vpop.f32.mrb[0].mxu0
      %v966 = vadd.f32 0.0, %v965
      %v967 = vpop.f32.mrb[0].mxu0
      %968 = vmatprep.mubr.bf16.mxu0 %v641
      %969 = vmatmul.mubr.bf16.gmra.mrb[0].mxu0 %v593
      %v970 = vpop.f32.mrb[0].mxu0
      %v971 = vadd.f32 0.0, %v970
      %v972 = vpop.f32.mrb[0].mxu0
      %v973 = vpop.f32.mrb[0].mxu0
      %v974 = vadd.f32 0.0, %v973
      %v975 = vpop.f32.mrb[0].mxu0
      %976 = vmatprep.mubr.bf16.mxu0 %v642
      %977 = vmatmul.mubr.bf16.gmra.mrb[0].mxu0 %v594
      %v978 = vpop.f32.mrb[0].mxu0
      %v979 = vadd.f32 0.0, %v978
      %v980 = vpop.f32.mrb[0].mxu0
      %v981 = vpop.f32.mrb[0].mxu0
      %v982 = vadd.f32 0.0, %v981
      %v983 = vpop.f32.mrb[0].mxu0
      %984 = vmatprep.mubr.bf16.mxu0 %v643
      %985 = vmatmul.mubr.bf16.gmra.mrb[0].mxu0 %v595
      %v986 = vpop.f32.mrb[0].mxu0
      %v987 = vadd.f32 0.0, %v986
      %v988 = vpop.f32.mrb[0].mxu0
      %v989 = vpop.f32.mrb[0].mxu0
      %v990 = vadd.f32 0.0, %v989
      %v991 = vpop.f32.mrb[0].mxu0
      %992 = vmatprep.mubr.bf16.mxu0 %v644
      %993 = vmatmul.mubr.bf16.gmra.mrb[0].mxu0 %v596
      %v994 = vpop.f32.mrb[0].mxu0
      %v995 = vadd.f32 0.0, %v994
      %v996 = vpop.f32.mrb[0].mxu0
      %v997 = vpop.f32.mrb[0].mxu0
      %v998 = vadd.f32 0.0, %v997
      %v999 = vpop.f32.mrb[0].mxu0
      %1000 = vmatprep.mubr.bf16.mxu0 %v645
      %1001 = vmatmul.mubr.bf16.gmra.mrb[0].mxu0 %v597
      %v1002 = vpop.f32.mrb[0].mxu0
      %v1003 = vadd.f32 0.0, %v1002
      %v1004 = vpop.f32.mrb[0].mxu0
      %v1005 = vpop.f32.mrb[0].mxu0
      %v1006 = vadd.f32 0.0, %v1005
      %v1007 = vpop.f32.mrb[0].mxu0
      %1008 = vmatprep.mubr.bf16.mxu0 %v646
      %1009 = vmatmul.mubr.bf16.gmra.mrb[0].mxu0 %v598
      %v1010 = vpop.f32.mrb[0].mxu0
      %v1011 = vadd.f32 0.0, %v1010
      %v1012 = vpop.f32.mrb[0].mxu0
      %v1013 = vpop.f32.mrb[0].mxu0
      %v1014 = vadd.f32 0.0, %v1013
      %v1015 = vpop.f32.mrb[0].mxu0
      %1016 = vmatprep.mubr.bf16.mxu0 %v647
      %1017 = vmatmul.mubr.bf16.gmra.mrb[0].mxu0 %v599
      %v1018 = vpop.f32.mrb[0].mxu0
      %v1019 = vadd.f32 0.0, %v1018
      %v1020 = vpop.f32.mrb[0].mxu0
      %v1021 = vpop.f32.mrb[0].mxu0
      %v1022 = vadd.f32 0.0, %v1021
      %v1023 = vpop.f32.mrb[0].mxu0
      %1024 = vdwg.mxu0
      %1025 = vmatprep.subr.bf16.mxu0 0
      %1026 = vmatpush1.bf16.msra.mxu0 %v896
      %1027 = vmatprep.subr.bf16.mxu0 0
      %1028 = vmatpush1.bf16.msra.mxu0 %v897
      %1029 = vmatprep.subr.bf16.mxu0 0
      %1030 = vmatpush1.bf16.msra.mxu0 %v898
      %1031 = vmatprep.subr.bf16.mxu0 0
      %1032 = vmatpush1.bf16.msra.mxu0 %v899
      %1033 = vmatprep.subr.bf16.mxu0 0
      %1034 = vmatpush1.bf16.msra.mxu0 %v900
      %1035 = vmatprep.subr.bf16.mxu0 0
      %1036 = vmatpush1.bf16.msra.mxu0 %v901
      %1037 = vmatprep.subr.bf16.mxu0 0
      %1038 = vmatpush1.bf16.msra.mxu0 %v902
      %1039 = vmatprep.subr.bf16.mxu0 0
      %1040 = vmatpush1.bf16.msra.mxu0 %v903
      %1041 = vmatprep.subr.bf16.mxu0 0
      %1042 = vmatpush1.bf16.msra.mxu0 0
      %1043 = vmatprep.subr.bf16.mxu0 0
      %1044 = vmatpush1.bf16.msra.mxu0 0
      %1045 = vmatprep.subr.bf16.mxu0 0
      %1046 = vmatpush1.bf16.msra.mxu0 0
      %1047 = vmatprep.subr.bf16.mxu0 0
      %1048 = vmatpush1.bf16.msra.mxu0 0
      %1049 = vmatprep.subr.bf16.mxu0 0
      %1050 = vmatpush1.bf16.msra.mxu0 0
      %1051 = vmatprep.subr.bf16.mxu0 0
      %1052 = vmatpush1.bf16.msra.mxu0 0
      %1053 = vmatprep.subr.bf16.mxu0 0
      %1054 = vmatpush1.bf16.msra.mxu0 0
      %1055 = vmatprep.subr.bf16.mxu0 0
      %1056 = vmatpush1.bf16.msra.mxu0 0
      %1057 = vmatprep.mubr.bf16.mxu0 0
      %1058 = vmatmul.mubr.bf16.gmra.mrb[0].mxu0 %v670
      %v1059 = vpop.f32.mrb[0].mxu0
      %v1060 = vadd.f32 %v963, %v1059
      %v1061 = vpop.f32.mrb[0].mxu0
      %v1062 = vpop.f32.mrb[0].mxu0
      %v1063 = vadd.f32 %v966, %v1062
      %v1064 = vpop.f32.mrb[0].mxu0
      %1065 = vmatprep.mubr.bf16.mxu0 0
      %1066 = vmatmul.mubr.bf16.gmra.mrb[0].mxu0 %v678
      %v1067 = vpop.f32.mrb[0].mxu0
      %v1068 = vadd.f32 %v971, %v1067
      %v1069 = vpop.f32.mrb[0].mxu0
      %v1070 = vpop.f32.mrb[0].mxu0
      %v1071 = vadd.f32 %v974, %v1070
      %v1072 = vpop.f32.mrb[0].mxu0
      %1073 = vmatprep.mubr.bf16.mxu0 0
      %1074 = vmatmul.mubr.bf16.gmra.mrb[0].mxu0 %v686
      %v1075 = vpop.f32.mrb[0].mxu0
      %v1076 = vadd.f32 %v979, %v1075
      %v1077 = vpop.f32.mrb[0].mxu0
      %v1078 = vpop.f32.mrb[0].mxu0
      %v1079 = vadd.f32 %v982, %v1078
      %v1080 = vpop.f32.mrb[0].mxu0
      %1081 = vmatprep.mubr.bf16.mxu0 0
      %1082 = vmatmul.mubr.bf16.gmra.mrb[0].mxu0 %v694
      %v1083 = vpop.f32.mrb[0].mxu0
      %v1084 = vadd.f32 %v987, %v1083
      %v1085 = vpop.f32.mrb[0].mxu0
      %v1086 = vpop.f32.mrb[0].mxu0
      %v1087 = vadd.f32 %v990, %v1086
      %v1088 = vpop.f32.mrb[0].mxu0
      %1089 = vmatprep.mubr.bf16.mxu0 0
      %1090 = vmatmul.mubr.bf16.gmra.mrb[0].mxu0 %v702
      %v1091 = vpop.f32.mrb[0].mxu0
      %v1092 = vadd.f32 %v995, %v1091
      %v1093 = vpop.f32.mrb[0].mxu0
      %v1094 = vpop.f32.mrb[0].mxu0
      %v1095 = vadd.f32 %v998, %v1094
      %v1096 = vpop.f32.mrb[0].mxu0
      %1097 = vmatprep.mubr.bf16.mxu0 0
      %1098 = vmatmul.mubr.bf16.gmra.mrb[0].mxu0 %v710
      %v1099 = vpop.f32.mrb[0].mxu0
      %v1100 = vadd.f32 %v1003, %v1099
      %v1101 = vpop.f32.mrb[0].mxu0
      %v1102 = vpop.f32.mrb[0].mxu0
      %v1103 = vadd.f32 %v1006, %v1102
      %v1104 = vpop.f32.mrb[0].mxu0
      %1105 = vmatprep.mubr.bf16.mxu0 0
      %1106 = vmatmul.mubr.bf16.gmra.mrb[0].mxu0 %v718
      %v1107 = vpop.f32.mrb[0].mxu0
      %v1108 = vadd.f32 %v1011, %v1107
      %v1109 = vpop.f32.mrb[0].mxu0
      %v1110 = vpop.f32.mrb[0].mxu0
      %v1111 = vadd.f32 %v1014, %v1110
      %v1112 = vpop.f32.mrb[0].mxu0
      %1113 = vmatprep.mubr.bf16.mxu0 0
      %1114 = vmatmul.mubr.bf16.gmra.mrb[0].mxu0 %v726
      %v1115 = vpop.f32.mrb[0].mxu0
      %v1116 = vadd.f32 %v1019, %v1115
      %v1117 = vpop.f32.mrb[0].mxu0
      %v1118 = vpop.f32.mrb[0].mxu0
      %v1119 = vadd.f32 %v1022, %v1118
      %v1120 = vpop.f32.mrb[0].mxu0
      %1121 = vdwg.mxu0
      %v1170 = vunpack.c.l.b16 %v479
      %v1171 = vunpack.c.l.b16 %v480
      %v1172 = vunpack.c.l.b16 %v481
      %v1173 = vunpack.c.l.b16 %v482
      %v1174 = vunpack.c.l.b16 %v483
      %v1175 = vunpack.c.l.b16 %v484
      %v1176 = vunpack.c.l.b16 %v485
      %v1177 = vunpack.c.l.b16 %v486
      %v1178 = vunpack.c.l.b16 %v487
      %v1179 = vunpack.c.l.b16 %v488
      %v1180 = vunpack.c.l.b16 %v489
      %v1181 = vunpack.c.l.b16 %v490
      %v1182 = vunpack.c.l.b16 %v491
      %v1183 = vunpack.c.l.b16 %v492
      %v1184 = vunpack.c.l.b16 %v493
      %v1185 = vunpack.c.l.b16 %v494
      %v1186 = vunpack.c.l.b16 %v495
      %v1187 = vunpack.c.l.b16 %v496
      %v1188 = vunpack.c.l.b16 %v497
      %v1189 = vunpack.c.l.b16 %v498
      %v1190 = vunpack.c.l.b16 %v499
      %v1191 = vunpack.c.l.b16 %v500
      %v1192 = vunpack.c.l.b16 %v501
      %v1193 = vunpack.c.l.b16 %v502
      %v1194 = vunpack.c.l.b16 %v503
      %v1195 = vunpack.c.l.b16 %v504
      %v1196 = vunpack.c.l.b16 %v505
      %v1197 = vunpack.c.l.b16 %v506
      %v1198 = vunpack.c.l.b16 %v507
      %v1199 = vunpack.c.l.b16 %v508
      %v1200 = vunpack.c.l.b16 %v509
      %v1201 = vunpack.c.l.b16 %v510
      %v1202 = vunpack.c.l.b16 %v511
      %v1203 = vunpack.c.l.b16 %v512
      %v1204 = vunpack.c.l.b16 %v513
      %v1205 = vunpack.c.l.b16 %v514
      %v1206 = vunpack.c.l.b16 %v515
      %v1207 = vunpack.c.l.b16 %v516
      %v1208 = vunpack.c.l.b16 %v517
      %v1209 = vunpack.c.l.b16 %v518
      %v1210 = vunpack.c.l.b16 %v519
      %v1211 = vunpack.c.l.b16 %v520
      %v1212 = vunpack.c.l.b16 %v521
      %v1213 = vunpack.c.l.b16 %v522
      %v1214 = vunpack.c.l.b16 %v523
      %v1215 = vunpack.c.l.b16 %v524
      %v1216 = vunpack.c.l.b16 %v525
      %v1217 = vunpack.c.l.b16 %v526
      %v1218 = vpack.c.b16 %v1171, %v1170
      %v1219 = vpack.c.b16 %v1173, %v1172
      %v1220 = vpack.c.b16 %v1175, %v1174
      %v1221 = vpack.c.b16 %v1177, %v1176
      %v1222 = vpack.c.b16 %v1179, %v1178
      %v1223 = vpack.c.b16 %v1181, %v1180
      %v1224 = vpack.c.b16 %v1183, %v1182
      %v1225 = vpack.c.b16 %v1185, %v1184
      %v1226 = vpack.c.b16 %v1187, %v1186
      %v1227 = vpack.c.b16 %v1189, %v1188
      %v1228 = vpack.c.b16 %v1191, %v1190
      %v1229 = vpack.c.b16 %v1193, %v1192
      %v1230 = vpack.c.b16 %v1195, %v1194
      %v1231 = vpack.c.b16 %v1197, %v1196
      %v1232 = vpack.c.b16 %v1199, %v1198
      %v1233 = vpack.c.b16 %v1201, %v1200
      %v1234 = vpack.c.b16 %v1203, %v1202
      %v1235 = vpack.c.b16 %v1205, %v1204
      %v1236 = vpack.c.b16 %v1207, %v1206
      %v1237 = vpack.c.b16 %v1209, %v1208
      %v1238 = vpack.c.b16 %v1211, %v1210
      %v1239 = vpack.c.b16 %v1213, %v1212
      %v1240 = vpack.c.b16 %v1215, %v1214
      %v1241 = vpack.c.b16 %v1217, %v1216
      %1266 = vmatprep.subr.bf16.mxu0 0
      %1267 = vmatpush1.bf16.msra.mxu0 %v1218
      %1268 = vmatprep.subr.bf16.mxu0 0
      %1269 = vmatpush1.bf16.msra.mxu0 %v1219
      %1270 = vmatprep.subr.bf16.mxu0 0
      %1271 = vmatpush1.bf16.msra.mxu0 %v1220
      %1272 = vmatprep.subr.bf16.mxu0 0
      %1273 = vmatpush1.bf16.msra.mxu0 %v1221
      %1274 = vmatprep.subr.bf16.mxu0 0
      %1275 = vmatpush1.bf16.msra.mxu0 %v1222
      %1276 = vmatprep.subr.bf16.mxu0 0
      %1277 = vmatpush1.bf16.msra.mxu0 %v1223
      %1278 = vmatprep.subr.bf16.mxu0 0
      %1279 = vmatpush1.bf16.msra.mxu0 %v1224
      %1280 = vmatprep.subr.bf16.mxu0 0
      %1281 = vmatpush1.bf16.msra.mxu0 %v1225
      %1282 = vmatprep.subr.bf16.mxu0 0
      %1283 = vmatpush1.bf16.msra.mxu0 %v1226
      %1284 = vmatprep.subr.bf16.mxu0 0
      %1285 = vmatpush1.bf16.msra.mxu0 %v1227
      %1286 = vmatprep.subr.bf16.mxu0 0
      %1287 = vmatpush1.bf16.msra.mxu0 %v1228
      %1288 = vmatprep.subr.bf16.mxu0 0
      %1289 = vmatpush1.bf16.msra.mxu0 %v1229
      %1290 = vmatprep.subr.bf16.mxu0 0
      %1291 = vmatpush1.bf16.msra.mxu0 %v1230
      %1292 = vmatprep.subr.bf16.mxu0 0
      %1293 = vmatpush1.bf16.msra.mxu0 %v1231
      %1294 = vmatprep.subr.bf16.mxu0 0
      %1295 = vmatpush1.bf16.msra.mxu0 %v1232
      %1296 = vmatprep.subr.bf16.mxu0 0
      %1297 = vmatpush1.bf16.msra.mxu0 %v1233
      %1298 = vmatprep.mubr.bf16.mxu0 %v383
      %1299 = vmatmul.mubr.bf16.gmra.mrb[0].mxu0 %v335
      %v1300 = vpop.f32.mrb[0].mxu0
      %v1301 = vadd.f32 %v1060, %v1300
      %v1302 = vpop.f32.mrb[0].mxu0
      %v1303 = vpop.f32.mrb[0].mxu0
      %v1304 = vadd.f32 %v1063, %v1303
      %v1305 = vpop.f32.mrb[0].mxu0
      %1306 = vmatprep.mubr.bf16.mxu0 %v384
      %1307 = vmatmul.mubr.bf16.gmra.mrb[0].mxu0 %v336
      %v1308 = vpop.f32.mrb[0].mxu0
      %v1309 = vadd.f32 %v1068, %v1308
      %v1310 = vpop.f32.mrb[0].mxu0
      %v1311 = vpop.f32.mrb[0].mxu0
      %v1312 = vadd.f32 %v1071, %v1311
      %v1313 = vpop.f32.mrb[0].mxu0
      %1314 = vmatprep.mubr.bf16.mxu0 %v385
      %1315 = vmatmul.mubr.bf16.gmra.mrb[0].mxu0 %v337
      %v1316 = vpop.f32.mrb[0].mxu0
      %v1317 = vadd.f32 %v1076, %v1316
      %v1318 = vpop.f32.mrb[0].mxu0
      %v1319 = vpop.f32.mrb[0].mxu0
      %v1320 = vadd.f32 %v1079, %v1319
      %v1321 = vpop.f32.mrb[0].mxu0
      %1322 = vmatprep.mubr.bf16.mxu0 %v386
      %1323 = vmatmul.mubr.bf16.gmra.mrb[0].mxu0 %v338
      %v1324 = vpop.f32.mrb[0].mxu0
      %v1325 = vadd.f32 %v1084, %v1324
      %v1326 = vpop.f32.mrb[0].mxu0
      %v1327 = vpop.f32.mrb[0].mxu0
      %v1328 = vadd.f32 %v1087, %v1327
      %v1329 = vpop.f32.mrb[0].mxu0
      %1330 = vmatprep.mubr.bf16.mxu0 %v387
      %1331 = vmatmul.mubr.bf16.gmra.mrb[0].mxu0 %v339
      %v1332 = vpop.f32.mrb[0].mxu0
      %v1333 = vadd.f32 %v1092, %v1332
      %v1334 = vpop.f32.mrb[0].mxu0
      %v1335 = vpop.f32.mrb[0].mxu0
      %v1336 = vadd.f32 %v1095, %v1335
      %v1337 = vpop.f32.mrb[0].mxu0
      %1338 = vmatprep.mubr.bf16.mxu0 %v388
      %1339 = vmatmul.mubr.bf16.gmra.mrb[0].mxu0 %v340
      %v1340 = vpop.f32.mrb[0].mxu0
      %v1341 = vadd.f32 %v1100, %v1340
      %v1342 = vpop.f32.mrb[0].mxu0
      %v1343 = vpop.f32.mrb[0].mxu0
      %v1344 = vadd.f32 %v1103, %v1343
      %v1345 = vpop.f32.mrb[0].mxu0
      %1346 = vmatprep.mubr.bf16.mxu0 %v389
      %1347 = vmatmul.mubr.bf16.gmra.mrb[0].mxu0 %v341
      %v1348 = vpop.f32.mrb[0].mxu0
      %v1349 = vadd.f32 %v1108, %v1348
      %v1350 = vpop.f32.mrb[0].mxu0
      %v1351 = vpop.f32.mrb[0].mxu0
      %v1352 = vadd.f32 %v1111, %v1351
      %v1353 = vpop.f32.mrb[0].mxu0
      %1354 = vmatprep.mubr.bf16.mxu0 %v390
      %1355 = vmatmul.mubr.bf16.gmra.mrb[0].mxu0 %v342
      %v1356 = vpop.f32.mrb[0].mxu0
      %v1357 = vadd.f32 %v1116, %v1356
      %v1358 = vpop.f32.mrb[0].mxu0
      %v1359 = vpop.f32.mrb[0].mxu0
      %v1360 = vadd.f32 %v1119, %v1359
      %v1361 = vpop.f32.mrb[0].mxu0
      %1362 = vdwg.mxu0
      %1363 = vmatprep.subr.bf16.mxu0 0
      %1364 = vmatpush1.bf16.msra.mxu0 %v1234
      %1365 = vmatprep.subr.bf16.mxu0 0
      %1366 = vmatpush1.bf16.msra.mxu0 %v1235
      %1367 = vmatprep.subr.bf16.mxu0 0
      %1368 = vmatpush1.bf16.msra.mxu0 %v1236
      %1369 = vmatprep.subr.bf16.mxu0 0
      %1370 = vmatpush1.bf16.msra.mxu0 %v1237
      %1371 = vmatprep.subr.bf16.mxu0 0
      %1372 = vmatpush1.bf16.msra.mxu0 %v1238
      %1373 = vmatprep.subr.bf16.mxu0 0
      %1374 = vmatpush1.bf16.msra.mxu0 %v1239
      %1375 = vmatprep.subr.bf16.mxu0 0
      %1376 = vmatpush1.bf16.msra.mxu0 %v1240
      %1377 = vmatprep.subr.bf16.mxu0 0
      %1378 = vmatpush1.bf16.msra.mxu0 %v1241
      %1379 = vmatprep.subr.bf16.mxu0 0
      %1380 = vmatpush1.bf16.msra.mxu0 0
      %1381 = vmatprep.subr.bf16.mxu0 0
      %1382 = vmatpush1.bf16.msra.mxu0 0
      %1383 = vmatprep.subr.bf16.mxu0 0
      %1384 = vmatpush1.bf16.msra.mxu0 0
      %1385 = vmatprep.subr.bf16.mxu0 0
      %1386 = vmatpush1.bf16.msra.mxu0 0
      %1387 = vmatprep.subr.bf16.mxu0 0
      %1388 = vmatpush1.bf16.msra.mxu0 0
      %1389 = vmatprep.subr.bf16.mxu0 0
      %1390 = vmatpush1.bf16.msra.mxu0 0
      %1391 = vmatprep.subr.bf16.mxu0 0
      %1392 = vmatpush1.bf16.msra.mxu0 0
      %1393 = vmatprep.subr.bf16.mxu0 0
      %1394 = vmatpush1.bf16.msra.mxu0 0
      %1395 = vmatprep.mubr.bf16.mxu0 0
      %1396 = vmatmul.mubr.bf16.gmra.mrb[0].mxu0 %v414
      %v1397 = vpop.f32.mrb[0].mxu0
      %v1398 = vadd.f32 %v1301, %v1397
      %v1399 = vpop.f32.mrb[0].mxu0
      %v1400 = vpop.f32.mrb[0].mxu0
      %v1401 = vadd.f32 %v1304, %v1400
      %v1402 = vpop.f32.mrb[0].mxu0
      %1403 = vmatprep.mubr.bf16.mxu0 0
      %1404 = vmatmul.mubr.bf16.gmra.mrb[0].mxu0 %v422
      %v1405 = vpop.f32.mrb[0].mxu0
      %v1406 = vadd.f32 %v1309, %v1405
      %v1407 = vpop.f32.mrb[0].mxu0
      %v1408 = vpop.f32.mrb[0].mxu0
      %v1409 = vadd.f32 %v1312, %v1408
      %v1410 = vpop.f32.mrb[0].mxu0
      %1411 = vmatprep.mubr.bf16.mxu0 0
      %1412 = vmatmul.mubr.bf16.gmra.mrb[0].mxu0 %v430
      %v1413 = vpop.f32.mrb[0].mxu0
      %v1414 = vadd.f32 %v1317, %v1413
      %v1415 = vpop.f32.mrb[0].mxu0
      %v1416 = vpop.f32.mrb[0].mxu0
      %v1417 = vadd.f32 %v1320, %v1416
      %v1418 = vpop.f32.mrb[0].mxu0
      %1419 = vmatprep.mubr.bf16.mxu0 0
      %1420 = vmatmul.mubr.bf16.gmra.mrb[0].mxu0 %v438
      %v1421 = vpop.f32.mrb[0].mxu0
      %v1422 = vadd.f32 %v1325, %v1421
      %v1423 = vpop.f32.mrb[0].mxu0
      %v1424 = vpop.f32.mrb[0].mxu0
      %v1425 = vadd.f32 %v1328, %v1424
      %v1426 = vpop.f32.mrb[0].mxu0
      %1427 = vmatprep.mubr.bf16.mxu0 0
      %1428 = vmatmul.mubr.bf16.gmra.mrb[0].mxu0 %v446
      %v1429 = vpop.f32.mrb[0].mxu0
      %v1430 = vadd.f32 %v1333, %v1429
      %v1431 = vpop.f32.mrb[0].mxu0
      %v1432 = vpop.f32.mrb[0].mxu0
      %v1433 = vadd.f32 %v1336, %v1432
      %v1434 = vpop.f32.mrb[0].mxu0
      %1435 = vmatprep.mubr.bf16.mxu0 0
      %1436 = vmatmul.mubr.bf16.gmra.mrb[0].mxu0 %v454
      %v1437 = vpop.f32.mrb[0].mxu0
      %v1438 = vadd.f32 %v1341, %v1437
      %v1439 = vpop.f32.mrb[0].mxu0
      %v1440 = vpop.f32.mrb[0].mxu0
      %v1441 = vadd.f32 %v1344, %v1440
      %v1442 = vpop.f32.mrb[0].mxu0
      %1443 = vmatprep.mubr.bf16.mxu0 0
      %1444 = vmatmul.mubr.bf16.gmra.mrb[0].mxu0 %v462
      %v1445 = vpop.f32.mrb[0].mxu0
      %v1446 = vadd.f32 %v1349, %v1445
      %v1447 = vpop.f32.mrb[0].mxu0
      %v1448 = vpop.f32.mrb[0].mxu0
      %v1449 = vadd.f32 %v1352, %v1448
      %v1450 = vpop.f32.mrb[0].mxu0
      %1451 = vmatprep.mubr.bf16.mxu0 0
      %1452 = vmatmul.mubr.bf16.gmra.mrb[0].mxu0 %v470
      %v1453 = vpop.f32.mrb[0].mxu0
      %v1454 = vadd.f32 %v1357, %v1453
      %v1455 = vpop.f32.mrb[0].mxu0
      %v1456 = vpop.f32.mrb[0].mxu0
      %v1457 = vadd.f32 %v1360, %v1456
      %v1458 = vpop.f32.mrb[0].mxu0
      %1459 = vdwg.mxu0
      %v1460 = vld [vmem:[%s246 + $0x8] sm:$0xf]
      %v1461 = vld [vmem:[%s246 + $0xc] sm:$0xf]
      %v1462 = vld [vmem:[%s246 + $0x10] sm:$0xf]
      %v1463 = vld [vmem:[%s246 + $0x14] sm:$0xf]
      %v1464 = vld [vmem:[%s246 + $0x18] sm:$0xf]
      %v1465 = vld [vmem:[%s246 + $0x1c] sm:$0xf]
      %v1466 = vld [vmem:[%s246 + $0x20] sm:$0xf]
      %v1467 = vld [vmem:[%s246 + $0x24] sm:$0xf]
      %v1468 = vld [vmem:[%s246 + $0x28] sm:$0xf]
      %v1469 = vld [vmem:[%s246 + $0x2c] sm:$0xf]
      %v1470 = vld [vmem:[%s246 + $0x30] sm:$0xf]
      %v1471 = vld [vmem:[%s246 + $0x34] sm:$0xf]
      %v1472 = vld [vmem:[%s246 + $0x38] sm:$0xf]
      %v1473 = vld [vmem:[%s246 + $0x3c] sm:$0xf]
      %v1474 = vld [vmem:[%s246 + $0x40] sm:$0xf]
      %v1475 = vld [vmem:[%s246 + $0x44] sm:$0xf]
      %v1476 = vld [vmem:[%s246 + $0x50] sm:$0xf]
      %v1477 = vld [vmem:[%s246 + $0x54] sm:$0xf]
      %v1478 = vld [vmem:[%s246 + $0x58] sm:$0xf]
      %v1479 = vld [vmem:[%s246 + $0x5c] sm:$0xf]
      %v1480 = vld [vmem:[%s246 + $0x60] sm:$0xf]
      %v1481 = vld [vmem:[%s246 + $0x64] sm:$0xf]
      %v1482 = vld [vmem:[%s246 + $0x68] sm:$0xf]
      %v1483 = vld [vmem:[%s246 + $0x6c] sm:$0xf]
      %v1484 = vld [vmem:[%s246 + $0x70] sm:$0xf]
      %v1485 = vld [vmem:[%s246 + $0x74] sm:$0xf]
      %v1486 = vld [vmem:[%s246 + $0x78] sm:$0xf]
      %v1487 = vld [vmem:[%s246 + $0x7c] sm:$0xf]
      %v1488 = vld [vmem:[%s246 + $0x80] sm:$0xf]
      %v1489 = vld [vmem:[%s246 + $0x84] sm:$0xf]
      %v1490 = vld [vmem:[%s246 + $0x88] sm:$0xf]
      %v1491 = vld [vmem:[%s246 + $0x8c] sm:$0xf]
      %v1492 = vld [vmem:[%s246 + $0x48] sm:$0x1]
      %v1509 = vunpack.c.l.b16 %v1460
      %v1510 = vunpack.c.l.b16 %v1461
      %v1511 = vunpack.c.l.b16 %v1462
      %v1512 = vunpack.c.l.b16 %v1463
      %v1513 = vunpack.c.l.b16 %v1464
      %v1514 = vunpack.c.l.b16 %v1465
      %v1515 = vunpack.c.l.b16 %v1466
      %v1516 = vunpack.c.l.b16 %v1467
      %v1517 = vunpack.c.l.b16 %v1468
      %v1518 = vunpack.c.l.b16 %v1469
      %v1519 = vunpack.c.l.b16 %v1470
      %v1520 = vunpack.c.l.b16 %v1471
      %v1521 = vunpack.c.l.b16 %v1472
      %v1522 = vunpack.c.l.b16 %v1473
      %v1523 = vunpack.c.l.b16 %v1474
      %v1524 = vunpack.c.l.b16 %v1475
      %v1525 = vpack.c.b16 %v1510, %v1509
      %v1526 = vpack.c.b16 %v1512, %v1511
      %v1527 = vpack.c.b16 %v1514, %v1513
      %v1528 = vpack.c.b16 %v1516, %v1515
      %v1529 = vpack.c.b16 %v1518, %v1517
      %v1530 = vpack.c.b16 %v1520, %v1519
      %v1531 = vpack.c.b16 %v1522, %v1521
      %v1532 = vpack.c.b16 %v1524, %v1523
      %v1557 = vunpack.c.l.b16 %v1476
      %v1558 = vunpack.c.l.b16 %v1477
      %v1559 = vunpack.c.l.b16 %v1478
      %v1560 = vunpack.c.l.b16 %v1479
      %v1561 = vunpack.c.l.b16 %v1480
      %v1562 = vunpack.c.l.b16 %v1481
      %v1563 = vunpack.c.l.b16 %v1482
      %v1564 = vunpack.c.l.b16 %v1483
      %v1565 = vunpack.c.l.b16 %v1484
      %v1566 = vunpack.c.l.b16 %v1485
      %v1567 = vunpack.c.l.b16 %v1486
      %v1568 = vunpack.c.l.b16 %v1487
      %v1569 = vunpack.c.l.b16 %v1488
      %v1570 = vunpack.c.l.b16 %v1489
      %v1571 = vunpack.c.l.b16 %v1490
      %v1572 = vunpack.c.l.b16 %v1491
      %v1573 = vpack.c.b16 %v1558, %v1557
      %v1574 = vpack.c.b16 %v1560, %v1559
      %v1575 = vpack.c.b16 %v1562, %v1561
      %v1576 = vpack.c.b16 %v1564, %v1563
      %v1577 = vpack.c.b16 %v1566, %v1565
      %v1578 = vpack.c.b16 %v1568, %v1567
      %v1579 = vpack.c.b16 %v1570, %v1569
      %v1580 = vpack.c.b16 %v1572, %v1571
      %v1590 = vunpack.c.l.b16 %v1492
      %v1591 = vpack.c.b16 %v1590, %v1590
      %v1593 = vshrl.u32 %v1525, 16
      %v1595 = vshll.u32 %v1525, 16
      %v1597 = vrot.slane %v1595, 1
      %v1598 = vor.u32 %v1593, %v1597
      %v1600 = vshll.u32 %v1526, 16
      %v1602 = vrot.slane %v1600, 1
      %v1603 = vsel %vm402, %v1598, %v1602
      %v1604 = vshrl.u32 %v1526, 16
      %v1606 = vor.u32 %v1604, %v1602
      %v1608 = vshll.u32 %v1527, 16
      %v1610 = vrot.slane %v1608, 1
      %v1611 = vsel %vm402, %v1606, %v1610
      %v1612 = vshrl.u32 %v1527, 16
      %v1614 = vor.u32 %v1612, %v1610
      %v1616 = vshll.u32 %v1528, 16
      %v1618 = vrot.slane %v1616, 1
      %v1619 = vsel %vm402, %v1614, %v1618
      %v1620 = vshrl.u32 %v1528, 16
      %v1622 = vor.u32 %v1620, %v1618
      %v1624 = vshll.u32 %v1529, 16
      %v1626 = vrot.slane %v1624, 1
      %v1627 = vsel %vm402, %v1622, %v1626
      %v1628 = vshrl.u32 %v1529, 16
      %v1630 = vor.u32 %v1628, %v1626
      %v1632 = vshll.u32 %v1530, 16
      %v1634 = vrot.slane %v1632, 1
      %v1635 = vsel %vm402, %v1630, %v1634
      %v1636 = vshrl.u32 %v1530, 16
      %v1638 = vor.u32 %v1636, %v1634
      %v1640 = vshll.u32 %v1531, 16
      %v1642 = vrot.slane %v1640, 1
      %v1643 = vsel %vm402, %v1638, %v1642
      %v1644 = vshrl.u32 %v1531, 16
      %v1646 = vor.u32 %v1644, %v1642
      %v1648 = vshll.u32 %v1532, 16
      %v1650 = vrot.slane %v1648, 1
      %v1651 = vsel %vm402, %v1646, %v1650
      %v1652 = vshrl.u32 %v1532, 16
      %v1654 = vor.u32 %v1652, %v1650
      %v1656 = vshll.u32 %v1591, 16
      %v1658 = vrot.slane %v1656, 1
      %v1659 = vsel %vm402, %v1654, %v1658
      %s1668 = scalar_lea.vmem %s1, 384
      %v1669 = vld [vmem:[%s1668] sm:$0xf]
      %v1670 = vld [vmem:[%s1668 + $0x4] sm:$0xf]
      %v1671 = vld [vmem:[%s1668 + $0x8] sm:$0xf]
      %v1672 = vld [vmem:[%s1668 + $0xc] sm:$0xf]
      %v1673 = vld [vmem:[%s1668 + $0x10] sm:$0xf]
      %v1674 = vld [vmem:[%s1668 + $0x14] sm:$0xf]
      %v1675 = vld [vmem:[%s1668 + $0x18] sm:$0xf]
      %v1676 = vld [vmem:[%s1668 + $0x1c] sm:$0xf]
      %v1677 = vld [vmem:[%s1668 + $0x20] sm:$0xf]
      %v1678 = vld [vmem:[%s1668 + $0x24] sm:$0xf]
      %v1679 = vld [vmem:[%s1668 + $0x28] sm:$0xf]
      %v1680 = vld [vmem:[%s1668 + $0x2c] sm:$0xf]
      %v1681 = vld [vmem:[%s1668 + $0x30] sm:$0xf]
      %v1682 = vld [vmem:[%s1668 + $0x34] sm:$0xf]
      %v1683 = vld [vmem:[%s1668 + $0x38] sm:$0xf]
      %v1684 = vld [vmem:[%s1668 + $0x3c] sm:$0xf]
      %v1685 = vld [vmem:[%s1668 + $0x40] sm:$0xf]
      %v1686 = vld [vmem:[%s1668 + $0x44] sm:$0xf]
      %v1687 = vld [vmem:[%s1668 + $0x48] sm:$0xf]
      %v1688 = vld [vmem:[%s1668 + $0x4c] sm:$0xf]
      %v1689 = vld [vmem:[%s1668 + $0x50] sm:$0xf]
      %v1690 = vld [vmem:[%s1668 + $0x54] sm:$0xf]
      %v1691 = vld [vmem:[%s1668 + $0x58] sm:$0xf]
      %v1692 = vld [vmem:[%s1668 + $0x5c] sm:$0xf]
      %v1693 = vld [vmem:[%s1668 + $0x60] sm:$0xf]
      %v1694 = vld [vmem:[%s1668 + $0x64] sm:$0xf]
      %v1695 = vld [vmem:[%s1668 + $0x68] sm:$0xf]
      %v1696 = vld [vmem:[%s1668 + $0x6c] sm:$0xf]
      %v1697 = vld [vmem:[%s1668 + $0x70] sm:$0xf]
      %v1698 = vld [vmem:[%s1668 + $0x74] sm:$0xf]
      %v1699 = vld [vmem:[%s1668 + $0x78] sm:$0xf]
      %v1700 = vld [vmem:[%s1668 + $0x7c] sm:$0xf]
      %v1701 = vld [vmem:[%s1668 + $0x80] sm:$0xf]
      %v1702 = vld [vmem:[%s1668 + $0x84] sm:$0xf]
      %v1703 = vld [vmem:[%s1668 + $0x88] sm:$0xf]
      %v1704 = vld [vmem:[%s1668 + $0x8c] sm:$0xf]
      %v1705 = vld [vmem:[%s1668 + $0x90] sm:$0xf]
      %v1706 = vld [vmem:[%s1668 + $0x94] sm:$0xf]
      %v1707 = vld [vmem:[%s1668 + $0x98] sm:$0xf]
      %v1708 = vld [vmem:[%s1668 + $0x9c] sm:$0xf]
      %v1709 = vld [vmem:[%s1668 + $0xa0] sm:$0xf]
      %v1710 = vld [vmem:[%s1668 + $0xa4] sm:$0xf]
      %v1711 = vld [vmem:[%s1668 + $0xa8] sm:$0xf]
      %v1712 = vld [vmem:[%s1668 + $0xac] sm:$0xf]
      %v1713 = vld [vmem:[%s1668 + $0xb0] sm:$0xf]
      %v1714 = vld [vmem:[%s1668 + $0xb4] sm:$0xf]
      %v1715 = vld [vmem:[%s1668 + $0xb8] sm:$0xf]
      %v1716 = vld [vmem:[%s1668 + $0xbc] sm:$0xf]
      %v1765 = vunpack.c.l.b16 %v1669
      %v1766 = vunpack.c.l.b16 %v1670
      %v1767 = vunpack.c.l.b16 %v1671
      %v1768 = vunpack.c.l.b16 %v1672
      %v1769 = vunpack.c.l.b16 %v1673
      %v1770 = vunpack.c.l.b16 %v1674
      %v1771 = vunpack.c.l.b16 %v1675
      %v1772 = vunpack.c.l.b16 %v1676
      %v1773 = vunpack.c.l.b16 %v1677
      %v1774 = vunpack.c.l.b16 %v1678
      %v1775 = vunpack.c.l.b16 %v1679
      %v1776 = vunpack.c.l.b16 %v1680
      %v1777 = vunpack.c.l.b16 %v1681
      %v1778 = vunpack.c.l.b16 %v1682
      %v1779 = vunpack.c.l.b16 %v1683
      %v1780 = vunpack.c.l.b16 %v1684
      %v1781 = vunpack.c.l.b16 %v1685
      %v1782 = vunpack.c.l.b16 %v1686
      %v1783 = vunpack.c.l.b16 %v1687
      %v1784 = vunpack.c.l.b16 %v1688
      %v1785 = vunpack.c.l.b16 %v1689
      %v1786 = vunpack.c.l.b16 %v1690
      %v1787 = vunpack.c.l.b16 %v1691
      %v1788 = vunpack.c.l.b16 %v1692
      %v1789 = vunpack.c.l.b16 %v1693
      %v1790 = vunpack.c.l.b16 %v1694
      %v1791 = vunpack.c.l.b16 %v1695
      %v1792 = vunpack.c.l.b16 %v1696
      %v1793 = vunpack.c.l.b16 %v1697
      %v1794 = vunpack.c.l.b16 %v1698
      %v1795 = vunpack.c.l.b16 %v1699
      %v1796 = vunpack.c.l.b16 %v1700
      %v1797 = vunpack.c.l.b16 %v1701
      %v1798 = vunpack.c.l.b16 %v1702
      %v1799 = vunpack.c.l.b16 %v1703
      %v1800 = vunpack.c.l.b16 %v1704
      %v1801 = vunpack.c.l.b16 %v1705
      %v1802 = vunpack.c.l.b16 %v1706
      %v1803 = vunpack.c.l.b16 %v1707
      %v1804 = vunpack.c.l.b16 %v1708
      %v1805 = vunpack.c.l.b16 %v1709
      %v1806 = vunpack.c.l.b16 %v1710
      %v1807 = vunpack.c.l.b16 %v1711
      %v1808 = vunpack.c.l.b16 %v1712
      %v1809 = vunpack.c.l.b16 %v1713
      %v1810 = vunpack.c.l.b16 %v1714
      %v1811 = vunpack.c.l.b16 %v1715
      %v1812 = vunpack.c.l.b16 %v1716
      %v1813 = vpack.c.b16 %v1766, %v1765
      %v1814 = vpack.c.b16 %v1768, %v1767
      %v1815 = vpack.c.b16 %v1770, %v1769
      %v1816 = vpack.c.b16 %v1772, %v1771
      %v1817 = vpack.c.b16 %v1774, %v1773
      %v1818 = vpack.c.b16 %v1776, %v1775
      %v1819 = vpack.c.b16 %v1778, %v1777
      %v1820 = vpack.c.b16 %v1780, %v1779
      %v1821 = vpack.c.b16 %v1782, %v1781
      %v1822 = vpack.c.b16 %v1784, %v1783
      %v1823 = vpack.c.b16 %v1786, %v1785
      %v1824 = vpack.c.b16 %v1788, %v1787
      %v1825 = vpack.c.b16 %v1790, %v1789
      %v1826 = vpack.c.b16 %v1792, %v1791
      %v1827 = vpack.c.b16 %v1794, %v1793
      %v1828 = vpack.c.b16 %v1796, %v1795
      %v1829 = vpack.c.b16 %v1798, %v1797
      %v1830 = vpack.c.b16 %v1800, %v1799
      %v1831 = vpack.c.b16 %v1802, %v1801
      %v1832 = vpack.c.b16 %v1804, %v1803
      %v1833 = vpack.c.b16 %v1806, %v1805
      %v1834 = vpack.c.b16 %v1808, %v1807
      %v1835 = vpack.c.b16 %v1810, %v1809
      %v1836 = vpack.c.b16 %v1812, %v1811
      %1861 = vmatprep.subr.bf16.mxu0 0
      %1862 = vmatpush1.bf16.msra.mxu0 %v1813
      %1863 = vmatprep.subr.bf16.mxu0 0
      %1864 = vmatpush1.bf16.msra.mxu0 %v1814
      %1865 = vmatprep.subr.bf16.mxu0 0
      %1866 = vmatpush1.bf16.msra.mxu0 %v1815
      %1867 = vmatprep.subr.bf16.mxu0 0
      %1868 = vmatpush1.bf16.msra.mxu0 %v1816
      %1869 = vmatprep.subr.bf16.mxu0 0
      %1870 = vmatpush1.bf16.msra.mxu0 %v1817
      %1871 = vmatprep.subr.bf16.mxu0 0
      %1872 = vmatpush1.bf16.msra.mxu0 %v1818
      %1873 = vmatprep.subr.bf16.mxu0 0
      %1874 = vmatpush1.bf16.msra.mxu0 %v1819
      %1875 = vmatprep.subr.bf16.mxu0 0
      %1876 = vmatpush1.bf16.msra.mxu0 %v1820
      %1877 = vmatprep.subr.bf16.mxu0 0
      %1878 = vmatpush1.bf16.msra.mxu0 %v1821
      %1879 = vmatprep.subr.bf16.mxu0 0
      %1880 = vmatpush1.bf16.msra.mxu0 %v1822
      %1881 = vmatprep.subr.bf16.mxu0 0
      %1882 = vmatpush1.bf16.msra.mxu0 %v1823
      %1883 = vmatprep.subr.bf16.mxu0 0
      %1884 = vmatpush1.bf16.msra.mxu0 %v1824
      %1885 = vmatprep.subr.bf16.mxu0 0
      %1886 = vmatpush1.bf16.msra.mxu0 %v1825
      %1887 = vmatprep.subr.bf16.mxu0 0
      %1888 = vmatpush1.bf16.msra.mxu0 %v1826
      %1889 = vmatprep.subr.bf16.mxu0 0
      %1890 = vmatpush1.bf16.msra.mxu0 %v1827
      %1891 = vmatprep.subr.bf16.mxu0 0
      %1892 = vmatpush1.bf16.msra.mxu0 %v1828
      %1893 = vmatprep.mubr.bf16.mxu0 %v1573
      %1894 = vmatmul.mubr.bf16.gmra.mrb[0].mxu0 %v1525
      %v1895 = vpop.f32.mrb[0].mxu0
      %v1896 = vadd.f32 0.0, %v1895
      %v1897 = vpop.f32.mrb[0].mxu0
      %v1898 = vpop.f32.mrb[0].mxu0
      %v1899 = vadd.f32 0.0, %v1898
      %v1900 = vpop.f32.mrb[0].mxu0
      %1901 = vmatprep.mubr.bf16.mxu0 %v1574
      %1902 = vmatmul.mubr.bf16.gmra.mrb[0].mxu0 %v1526
      %v1903 = vpop.f32.mrb[0].mxu0
      %v1904 = vadd.f32 0.0, %v1903
      %v1905 = vpop.f32.mrb[0].mxu0
      %v1906 = vpop.f32.mrb[0].mxu0
      %v1907 = vadd.f32 0.0, %v1906
      %v1908 = vpop.f32.mrb[0].mxu0
      %1909 = vmatprep.mubr.bf16.mxu0 %v1575
      %1910 = vmatmul.mubr.bf16.gmra.mrb[0].mxu0 %v1527
      %v1911 = vpop.f32.mrb[0].mxu0
      %v1912 = vadd.f32 0.0, %v1911
      %v1913 = vpop.f32.mrb[0].mxu0
      %v1914 = vpop.f32.mrb[0].mxu0
      %v1915 = vadd.f32 0.0, %v1914
      %v1916 = vpop.f32.mrb[0].mxu0
      %1917 = vmatprep.mubr.bf16.mxu0 %v1576
      %1918 = vmatmul.mubr.bf16.gmra.mrb[0].mxu0 %v1528
      %v1919 = vpop.f32.mrb[0].mxu0
      %v1920 = vadd.f32 0.0, %v1919
      %v1921 = vpop.f32.mrb[0].mxu0
      %v1922 = vpop.f32.mrb[0].mxu0
      %v1923 = vadd.f32 0.0, %v1922
      %v1924 = vpop.f32.mrb[0].mxu0
      %1925 = vmatprep.mubr.bf16.mxu0 %v1577
      %1926 = vmatmul.mubr.bf16.gmra.mrb[0].mxu0 %v1529
      %v1927 = vpop.f32.mrb[0].mxu0
      %v1928 = vadd.f32 0.0, %v1927
      %v1929 = vpop.f32.mrb[0].mxu0
      %v1930 = vpop.f32.mrb[0].mxu0
      %v1931 = vadd.f32 0.0, %v1930
      %v1932 = vpop.f32.mrb[0].mxu0
      %1933 = vmatprep.mubr.bf16.mxu0 %v1578
      %1934 = vmatmul.mubr.bf16.gmra.mrb[0].mxu0 %v1530
      %v1935 = vpop.f32.mrb[0].mxu0
      %v1936 = vadd.f32 0.0, %v1935
      %v1937 = vpop.f32.mrb[0].mxu0
      %v1938 = vpop.f32.mrb[0].mxu0
      %v1939 = vadd.f32 0.0, %v1938
      %v1940 = vpop.f32.mrb[0].mxu0
      %1941 = vmatprep.mubr.bf16.mxu0 %v1579
      %1942 = vmatmul.mubr.bf16.gmra.mrb[0].mxu0 %v1531
      %v1943 = vpop.f32.mrb[0].mxu0
      %v1944 = vadd.f32 0.0, %v1943
      %v1945 = vpop.f32.mrb[0].mxu0
      %v1946 = vpop.f32.mrb[0].mxu0
      %v1947 = vadd.f32 0.0, %v1946
      %v1948 = vpop.f32.mrb[0].mxu0
      %1949 = vmatprep.mubr.bf16.mxu0 %v1580
      %1950 = vmatmul.mubr.bf16.gmra.mrb[0].mxu0 %v1532
      %v1951 = vpop.f32.mrb[0].mxu0
      %v1952 = vadd.f32 0.0, %v1951
      %v1953 = vpop.f32.mrb[0].mxu0
      %v1954 = vpop.f32.mrb[0].mxu0
      %v1955 = vadd.f32 0.0, %v1954
      %v1956 = vpop.f32.mrb[0].mxu0
      %1957 = vdwg.mxu0
      %1958 = vmatprep.subr.bf16.mxu0 0
      %1959 = vmatpush1.bf16.msra.mxu0 %v1829
      %1960 = vmatprep.subr.bf16.mxu0 0
      %1961 = vmatpush1.bf16.msra.mxu0 %v1830
      %1962 = vmatprep.subr.bf16.mxu0 0
      %1963 = vmatpush1.bf16.msra.mxu0 %v1831
      %1964 = vmatprep.subr.bf16.mxu0 0
      %1965 = vmatpush1.bf16.msra.mxu0 %v1832
      %1966 = vmatprep.subr.bf16.mxu0 0
      %1967 = vmatpush1.bf16.msra.mxu0 %v1833
      %1968 = vmatprep.subr.bf16.mxu0 0
      %1969 = vmatpush1.bf16.msra.mxu0 %v1834
      %1970 = vmatprep.subr.bf16.mxu0 0
      %1971 = vmatpush1.bf16.msra.mxu0 %v1835
      %1972 = vmatprep.subr.bf16.mxu0 0
      %1973 = vmatpush1.bf16.msra.mxu0 %v1836
      %1974 = vmatprep.subr.bf16.mxu0 0
      %1975 = vmatpush1.bf16.msra.mxu0 0
      %1976 = vmatprep.subr.bf16.mxu0 0
      %1977 = vmatpush1.bf16.msra.mxu0 0
      %1978 = vmatprep.subr.bf16.mxu0 0
      %1979 = vmatpush1.bf16.msra.mxu0 0
      %1980 = vmatprep.subr.bf16.mxu0 0
      %1981 = vmatpush1.bf16.msra.mxu0 0
      %1982 = vmatprep.subr.bf16.mxu0 0
      %1983 = vmatpush1.bf16.msra.mxu0 0
      %1984 = vmatprep.subr.bf16.mxu0 0
      %1985 = vmatpush1.bf16.msra.mxu0 0
      %1986 = vmatprep.subr.bf16.mxu0 0
      %1987 = vmatpush1.bf16.msra.mxu0 0
      %1988 = vmatprep.subr.bf16.mxu0 0
      %1989 = vmatpush1.bf16.msra.mxu0 0
      %1990 = vmatprep.mubr.bf16.mxu0 0
      %1991 = vmatmul.mubr.bf16.gmra.mrb[0].mxu0 %v1603
      %v1992 = vpop.f32.mrb[0].mxu0
      %v1993 = vadd.f32 %v1896, %v1992
      %v1994 = vpop.f32.mrb[0].mxu0
      %v1995 = vpop.f32.mrb[0].mxu0
      %v1996 = vadd.f32 %v1899, %v1995
      %v1997 = vpop.f32.mrb[0].mxu0
      %1998 = vmatprep.mubr.bf16.mxu0 0
      %1999 = vmatmul.mubr.bf16.gmra.mrb[0].mxu0 %v1611
      %v2000 = vpop.f32.mrb[0].mxu0
      %v2001 = vadd.f32 %v1904, %v2000
      %v2002 = vpop.f32.mrb[0].mxu0
      %v2003 = vpop.f32.mrb[0].mxu0
      %v2004 = vadd.f32 %v1907, %v2003
      %v2005 = vpop.f32.mrb[0].mxu0
      %2006 = vmatprep.mubr.bf16.mxu0 0
      %2007 = vmatmul.mubr.bf16.gmra.mrb[0].mxu0 %v1619
      %v2008 = vpop.f32.mrb[0].mxu0
      %v2009 = vadd.f32 %v1912, %v2008
      %v2010 = vpop.f32.mrb[0].mxu0
      %v2011 = vpop.f32.mrb[0].mxu0
      %v2012 = vadd.f32 %v1915, %v2011
      %v2013 = vpop.f32.mrb[0].mxu0
      %2014 = vmatprep.mubr.bf16.mxu0 0
      %2015 = vmatmul.mubr.bf16.gmra.mrb[0].mxu0 %v1627
      %v2016 = vpop.f32.mrb[0].mxu0
      %v2017 = vadd.f32 %v1920, %v2016
      %v2018 = vpop.f32.mrb[0].mxu0
      %v2019 = vpop.f32.mrb[0].mxu0
      %v2020 = vadd.f32 %v1923, %v2019
      %v2021 = vpop.f32.mrb[0].mxu0
      %2022 = vmatprep.mubr.bf16.mxu0 0
      %2023 = vmatmul.mubr.bf16.gmra.mrb[0].mxu0 %v1635
      %v2024 = vpop.f32.mrb[0].mxu0
      %v2025 = vadd.f32 %v1928, %v2024
      %v2026 = vpop.f32.mrb[0].mxu0
      %v2027 = vpop.f32.mrb[0].mxu0
      %v2028 = vadd.f32 %v1931, %v2027
      %v2029 = vpop.f32.mrb[0].mxu0
      %2030 = vmatprep.mubr.bf16.mxu0 0
      %2031 = vmatmul.mubr.bf16.gmra.mrb[0].mxu0 %v1643
      %v2032 = vpop.f32.mrb[0].mxu0
      %v2033 = vadd.f32 %v1936, %v2032
      %v2034 = vpop.f32.mrb[0].mxu0
      %v2035 = vpop.f32.mrb[0].mxu0
      %v2036 = vadd.f32 %v1939, %v2035
      %v2037 = vpop.f32.mrb[0].mxu0
      %2038 = vmatprep.mubr.bf16.mxu0 0
      %2039 = vmatmul.mubr.bf16.gmra.mrb[0].mxu0 %v1651
      %v2040 = vpop.f32.mrb[0].mxu0
      %v2041 = vadd.f32 %v1944, %v2040
      %v2042 = vpop.f32.mrb[0].mxu0
      %v2043 = vpop.f32.mrb[0].mxu0
      %v2044 = vadd.f32 %v1947, %v2043
      %v2045 = vpop.f32.mrb[0].mxu0
      %2046 = vmatprep.mubr.bf16.mxu0 0
      %2047 = vmatmul.mubr.bf16.gmra.mrb[0].mxu0 %v1659
      %v2048 = vpop.f32.mrb[0].mxu0
      %v2049 = vadd.f32 %v1952, %v2048
      %v2050 = vpop.f32.mrb[0].mxu0
      %v2051 = vpop.f32.mrb[0].mxu0
      %v2052 = vadd.f32 %v1955, %v2051
      %v2053 = vpop.f32.mrb[0].mxu0
      %2054 = vdwg.mxu0
      %v2055 = vadd.f32 %v1398, %v1993
      %v2056 = vadd.f32 %v1401, %v1996
      %v2057 = vadd.f32 %v1406, %v2001
      %v2058 = vadd.f32 %v1409, %v2004
      %v2059 = vadd.f32 %v1414, %v2009
      %v2060 = vadd.f32 %v1417, %v2012
      %v2061 = vadd.f32 %v1422, %v2017
      %v2062 = vadd.f32 %v1425, %v2020
      %v2063 = vadd.f32 %v1430, %v2025
      %v2064 = vadd.f32 %v1433, %v2028
      %v2065 = vadd.f32 %v1438, %v2033
      %v2066 = vadd.f32 %v1441, %v2036
      %v2067 = vadd.f32 %v1446, %v2041
      %v2068 = vadd.f32 %v1449, %v2044
      %v2069 = vadd.f32 %v1454, %v2049
      %v2070 = vadd.f32 %v1457, %v2052
      %v2071 = vlaneseq
      %v2072 = vshrl.u32 %v2071, 7
      %v2073 = vsub.s32 0, %v2072
      %v2074 = vrot.slane %v253, %v2073
      %v2075 = vmul.f32 %v2055, %v2074
      %v2076 = vmul.f32 %v2056, %v2074
      %v2077 = vmul.f32 %v2057, %v2074
      %v2078 = vmul.f32 %v2058, %v2074
      %v2079 = vmul.f32 %v2059, %v2074
      %v2080 = vmul.f32 %v2060, %v2074
      %v2081 = vmul.f32 %v2061, %v2074
      %v2082 = vmul.f32 %v2062, %v2074
      %v2083 = vmul.f32 %v2063, %v2074
      %v2084 = vmul.f32 %v2064, %v2074
      %v2085 = vmul.f32 %v2065, %v2074
      %v2086 = vmul.f32 %v2066, %v2074
      %v2087 = vmul.f32 %v2067, %v2074
      %v2088 = vmul.f32 %v2068, %v2074
      %v2089 = vmul.f32 %v2069, %v2074
      %v2090 = vmul.f32 %v2070, %v2074
      %v2091 = vlaneseq
      %v2092 = vshrl.u32 %v2091, 7
      %v2093 = vsub.s32 1, %v2092
      %v2094 = vrot.slane %v253, %v2093
      %v2095 = vadd.f32 %v2075, %v2094
      %v2096 = vadd.f32 %v2076, %v2094
      %v2097 = vadd.f32 %v2077, %v2094
      %v2098 = vadd.f32 %v2078, %v2094
      %v2099 = vadd.f32 %v2079, %v2094
      %v2100 = vadd.f32 %v2080, %v2094
      %v2101 = vadd.f32 %v2081, %v2094
      %v2102 = vadd.f32 %v2082, %v2094
      %v2103 = vadd.f32 %v2083, %v2094
      %v2104 = vadd.f32 %v2084, %v2094
      %v2105 = vadd.f32 %v2085, %v2094
      %v2106 = vadd.f32 %v2086, %v2094
      %v2107 = vadd.f32 %v2087, %v2094
      %v2108 = vadd.f32 %v2088, %v2094
      %v2109 = vadd.f32 %v2089, %v2094
      %v2110 = vadd.f32 %v2090, %v2094
      %v2111 = vmax.f32 %v2095, 0.0
      %v2112 = vmax.f32 %v2096, 0.0
      %v2113 = vmax.f32 %v2097, 0.0
      %v2114 = vmax.f32 %v2098, 0.0
      %v2115 = vmax.f32 %v2099, 0.0
      %v2116 = vmax.f32 %v2100, 0.0
      %v2117 = vmax.f32 %v2101, 0.0
      %v2118 = vmax.f32 %v2102, 0.0
      %v2119 = vmax.f32 %v2103, 0.0
      %v2120 = vmax.f32 %v2104, 0.0
      %v2121 = vmax.f32 %v2105, 0.0
      %v2122 = vmax.f32 %v2106, 0.0
      %v2123 = vmax.f32 %v2107, 0.0
      %v2124 = vmax.f32 %v2108, 0.0
      %v2125 = vmax.f32 %v2109, 0.0
      %v2126 = vmax.f32 %v2110, 0.0
      %2128 = vset.pattern.permute.xlu0 0
      %2129 = vperm.xlu0 %2128, %v254
      %v2130 = vpop.permute.xlu0 %2129
      %2133 = vset.pattern.permute.xlu0 0
      %2134 = vperm.xlu0 %2133, %v255
      %v2135 = vpop.permute.xlu0 %2134
      %2138 = vset.pattern.permute.xlu0 0
      %2139 = vperm.xlu0 %2138, %v256
      %v2140 = vpop.permute.xlu0 %2139
      %2143 = vset.pattern.permute.xlu0 0
      %2144 = vperm.xlu0 %2143, %v257
      %v2145 = vpop.permute.xlu0 %2144
      %2148 = vset.pattern.permute.xlu0 0
      %2149 = vperm.xlu0 %2148, %v258
      %v2150 = vpop.permute.xlu0 %2149
      %2153 = vset.pattern.permute.xlu0 0
      %2154 = vperm.xlu0 %2153, %v259
      %v2155 = vpop.permute.xlu0 %2154
      %2158 = vset.pattern.permute.xlu0 0
      %2159 = vperm.xlu0 %2158, %v260
      %v2160 = vpop.permute.xlu0 %2159
      %2163 = vset.pattern.permute.xlu0 0
      %2164 = vperm.xlu0 %2163, %v261
      %v2165 = vpop.permute.xlu0 %2164
      %2168 = vset.pattern.permute.xlu0 0
      %2169 = vperm.xlu0 %2168, %v262
      %v2170 = vpop.permute.xlu0 %2169
      %2173 = vset.pattern.permute.xlu0 0
      %2174 = vperm.xlu0 %2173, %v263
      %v2175 = vpop.permute.xlu0 %2174
      %2178 = vset.pattern.permute.xlu0 0
      %2179 = vperm.xlu0 %2178, %v264
      %v2180 = vpop.permute.xlu0 %2179
      %2183 = vset.pattern.permute.xlu0 0
      %2184 = vperm.xlu0 %2183, %v265
      %v2185 = vpop.permute.xlu0 %2184
      %2188 = vset.pattern.permute.xlu0 0
      %2189 = vperm.xlu0 %2188, %v266
      %v2190 = vpop.permute.xlu0 %2189
      %2193 = vset.pattern.permute.xlu0 0
      %2194 = vperm.xlu0 %2193, %v267
      %v2195 = vpop.permute.xlu0 %2194
      %2198 = vset.pattern.permute.xlu0 0
      %2199 = vperm.xlu0 %2198, %v268
      %v2200 = vpop.permute.xlu0 %2199
      %2203 = vset.pattern.permute.xlu0 0
      %2204 = vperm.xlu0 %2203, %v269
      %v2205 = vpop.permute.xlu0 %2204
      %v2207 = vmul.f32 %v2111, %v2130
      %v2208 = vmul.f32 %v2112, %v2135
      %v2209 = vmul.f32 %v2113, %v2140
      %v2210 = vmul.f32 %v2114, %v2145
      %v2211 = vmul.f32 %v2115, %v2150
      %v2212 = vmul.f32 %v2116, %v2155
      %v2213 = vmul.f32 %v2117, %v2160
      %v2214 = vmul.f32 %v2118, %v2165
      %v2215 = vmul.f32 %v2119, %v2170
      %v2216 = vmul.f32 %v2120, %v2175
      %v2217 = vmul.f32 %v2121, %v2180
      %v2218 = vmul.f32 %v2122, %v2185
      %v2219 = vmul.f32 %v2123, %v2190
      %v2220 = vmul.f32 %v2124, %v2195
      %v2221 = vmul.f32 %v2125, %v2200
      %v2222 = vmul.f32 %v2126, %v2205
      %2223 = vst [vmem:[#allocation2] sm:$0xff] 0
      %2224 = vst [vmem:[#allocation2 + $0x8] sm:$0xf] 0
      %2225 = vst [vmem:[#allocation2 + $0x48] sm:$0xf0] 0
      %2226 = vst [vmem:[#allocation2 + $0x50] sm:$0xff] 0
      %v2227 = vpack.c.bf16 %v2208, %v2207
      %v2228 = vpack.c.bf16 %v2210, %v2209
      %v2229 = vpack.c.bf16 %v2212, %v2211
      %v2230 = vpack.c.bf16 %v2214, %v2213
      %v2231 = vpack.c.bf16 %v2216, %v2215
      %v2232 = vpack.c.bf16 %v2218, %v2217
      %v2233 = vpack.c.bf16 %v2220, %v2219
      %v2234 = vpack.c.bf16 %v2222, %v2221
      %vm2243 = vcmask 1043456
      %v2244 = vrot.slane %v2227, 4
      %v2245 = vrot.slane %v2228, 4
      %v2246 = vsel %vm2243, %v2244, %v2245
      %v2247 = vrot.slane %v2229, 4
      %v2248 = vsel %vm2243, %v2245, %v2247
      %v2249 = vrot.slane %v2230, 4
      %v2250 = vsel %vm2243, %v2247, %v2249
      %v2251 = vrot.slane %v2231, 4
      %v2252 = vsel %vm2243, %v2249, %v2251
      %v2253 = vrot.slane %v2232, 4
      %v2254 = vsel %vm2243, %v2251, %v2253
      %v2255 = vrot.slane %v2233, 4
      %v2256 = vsel %vm2243, %v2253, %v2255
      %v2257 = vrot.slane %v2234, 4
      %v2258 = vsel %vm2243, %v2255, %v2257
      %2268 = vst [vmem:[#allocation2 + $0x8] sm:$0xf0] %v2244
      %2269 = vst [vmem:[#allocation2 + $0x10] sm:$0xff] %v2246
      %2270 = vst [vmem:[#allocation2 + $0x18] sm:$0xff] %v2248
      %2271 = vst [vmem:[#allocation2 + $0x20] sm:$0xff] %v2250
      %2272 = vst [vmem:[#allocation2 + $0x28] sm:$0xff] %v2252
      %2273 = vst [vmem:[#allocation2 + $0x30] sm:$0xff] %v2254
      %2274 = vst [vmem:[#allocation2 + $0x38] sm:$0xff] %v2256
      %2275 = vst [vmem:[#allocation2 + $0x40] sm:$0xff] %v2258
      %2276 = vst [vmem:[#allocation2 + $0x48] sm:$0xf] %v2257
      %v2277 = vld [vmem:[#allocation2] sm:$0xf8]
      %v2278 = vld [vmem:[#allocation2 + $0x8] sm:$0xff]
      %v2279 = vld [vmem:[#allocation2 + $0x10] sm:$0xff]
      %v2280 = vld [vmem:[#allocation2 + $0x18] sm:$0xff]
      %v2281 = vld [vmem:[#allocation2 + $0x20] sm:$0xff]
      %v2282 = vld [vmem:[#allocation2 + $0x28] sm:$0xff]
      %v2283 = vld [vmem:[#allocation2 + $0x30] sm:$0xff]
      %v2284 = vld [vmem:[#allocation2 + $0x38] sm:$0xff]
      %v2285 = vld [vmem:[#allocation2 + $0x40] sm:$0xf]
      %v2286 = vld [vmem:[#allocation2] sm:$0xf0]
      %v2287 = vld [vmem:[#allocation2 + $0x40] sm:$0x1f]
      %v2289 = vshrl.u32 %v2286, 16
      %v2291 = vshll.u32 %v2286, 16
      %v2293 = vrot.slane %v2291, 1
      %v2294 = vor.u32 %v2289, %v2293
      %v2296 = vshll.u32 %v2278, 16
      %v2298 = vrot.slane %v2296, 1
      %v2299 = vsel %vm402, %v2294, %v2298
      %v2300 = vshrl.u32 %v2278, 16
      %v2302 = vor.u32 %v2300, %v2298
      %v2304 = vshll.u32 %v2279, 16
      %v2306 = vrot.slane %v2304, 1
      %v2307 = vsel %vm402, %v2302, %v2306
      %v2308 = vshrl.u32 %v2279, 16
      %v2310 = vor.u32 %v2308, %v2306
      %v2312 = vshll.u32 %v2280, 16
      %v2314 = vrot.slane %v2312, 1
      %v2315 = vsel %vm402, %v2310, %v2314
      %v2316 = vshrl.u32 %v2280, 16
      %v2318 = vor.u32 %v2316, %v2314
      %v2320 = vshll.u32 %v2281, 16
      %v2322 = vrot.slane %v2320, 1
      %v2323 = vsel %vm402, %v2318, %v2322
      %v2324 = vshrl.u32 %v2281, 16
      %v2326 = vor.u32 %v2324, %v2322
      %v2328 = vshll.u32 %v2282, 16
      %v2330 = vrot.slane %v2328, 1
      %v2331 = vsel %vm402, %v2326, %v2330
      %v2332 = vshrl.u32 %v2282, 16
      %v2334 = vor.u32 %v2332, %v2330
      %v2336 = vshll.u32 %v2283, 16
      %v2338 = vrot.slane %v2336, 1
      %v2339 = vsel %vm402, %v2334, %v2338
      %v2340 = vshrl.u32 %v2283, 16
      %v2342 = vor.u32 %v2340, %v2338
      %v2344 = vshll.u32 %v2284, 16
      %v2346 = vrot.slane %v2344, 1
      %v2347 = vsel %vm402, %v2342, %v2346
      %v2348 = vshrl.u32 %v2284, 16
      %v2350 = vor.u32 %v2348, %v2346
      %v2352 = vshll.u32 %v2285, 16
      %v2354 = vrot.slane %v2352, 1
      %v2355 = vsel %vm402, %v2350, %v2354
      %v2356 = vshrl.u32 %v2285, 16
      %v2358 = vor.u32 %v2356, %v2354
      %vm2368 = vcmask 1046528
      %v2369 = vrot.slane %v2286, 1
      %v2370 = vrot.slane %v2278, 1
      %v2371 = vsel %vm2368, %v2369, %v2370
      %v2372 = vrot.slane %v2279, 1
      %v2373 = vsel %vm2368, %v2370, %v2372
      %v2374 = vrot.slane %v2280, 1
      %v2375 = vsel %vm2368, %v2372, %v2374
      %v2376 = vrot.slane %v2281, 1
      %v2377 = vsel %vm2368, %v2374, %v2376
      %v2378 = vrot.slane %v2282, 1
      %v2379 = vsel %vm2368, %v2376, %v2378
      %v2380 = vrot.slane %v2283, 1
      %v2381 = vsel %vm2368, %v2378, %v2380
      %v2382 = vrot.slane %v2284, 1
      %v2383 = vsel %vm2368, %v2380, %v2382
      %v2384 = vrot.slane %v2287, 1
      %v2385 = vsel %vm2368, %v2382, %v2384
      %v2386 = vld [vmem:[%s2] sm:$0xf]
      %v2387 = vld [vmem:[%s2 + $0x4] sm:$0xf]
      %v2388 = vld [vmem:[%s2 + $0x8] sm:$0xf]
      %v2389 = vld [vmem:[%s2 + $0xc] sm:$0xf]
      %v2390 = vld [vmem:[%s2 + $0x10] sm:$0xf]
      %v2391 = vld [vmem:[%s2 + $0x14] sm:$0xf]
      %v2392 = vld [vmem:[%s2 + $0x18] sm:$0xf]
      %v2393 = vld [vmem:[%s2 + $0x1c] sm:$0xf]
      %v2394 = vld [vmem:[%s2 + $0x20] sm:$0xf]
      %v2395 = vld [vmem:[%s2 + $0x24] sm:$0xf]
      %v2396 = vld [vmem:[%s2 + $0x28] sm:$0xf]
      %v2397 = vld [vmem:[%s2 + $0x2c] sm:$0xf]
      %v2398 = vld [vmem:[%s2 + $0x30] sm:$0xf]
      %v2399 = vld [vmem:[%s2 + $0x34] sm:$0xf]
      %v2400 = vld [vmem:[%s2 + $0x38] sm:$0xf]
      %v2401 = vld [vmem:[%s2 + $0x3c] sm:$0xf]
      %v2402 = vld [vmem:[%s2 + $0x40] sm:$0xf]
      %v2403 = vld [vmem:[%s2 + $0x44] sm:$0xf]
      %v2404 = vld [vmem:[%s2 + $0x48] sm:$0xf]
      %v2405 = vld [vmem:[%s2 + $0x4c] sm:$0xf]
      %v2406 = vld [vmem:[%s2 + $0x50] sm:$0xf]
      %v2407 = vld [vmem:[%s2 + $0x54] sm:$0xf]
      %v2408 = vld [vmem:[%s2 + $0x58] sm:$0xf]
      %v2409 = vld [vmem:[%s2 + $0x5c] sm:$0xf]
      %v2410 = vld [vmem:[%s2 + $0x60] sm:$0xf]
      %v2411 = vld [vmem:[%s2 + $0x64] sm:$0xf]
      %v2412 = vld [vmem:[%s2 + $0x68] sm:$0xf]
      %v2413 = vld [vmem:[%s2 + $0x6c] sm:$0xf]
      %v2414 = vld [vmem:[%s2 + $0x70] sm:$0xf]
      %v2415 = vld [vmem:[%s2 + $0x74] sm:$0xf]
      %v2416 = vld [vmem:[%s2 + $0x78] sm:$0xf]
      %v2417 = vld [vmem:[%s2 + $0x7c] sm:$0xf]
      %v2418 = vld [vmem:[%s2 + $0x80] sm:$0xf]
      %v2419 = vld [vmem:[%s2 + $0x84] sm:$0xf]
      %v2420 = vld [vmem:[%s2 + $0x88] sm:$0xf]
      %v2421 = vld [vmem:[%s2 + $0x8c] sm:$0xf]
      %v2422 = vld [vmem:[%s2 + $0x90] sm:$0xf]
      %v2423 = vld [vmem:[%s2 + $0x94] sm:$0xf]
      %v2424 = vld [vmem:[%s2 + $0x98] sm:$0xf]
      %v2425 = vld [vmem:[%s2 + $0x9c] sm:$0xf]
      %v2426 = vld [vmem:[%s2 + $0xa0] sm:$0xf]
      %v2427 = vld [vmem:[%s2 + $0xa4] sm:$0xf]
      %v2428 = vld [vmem:[%s2 + $0xa8] sm:$0xf]
      %v2429 = vld [vmem:[%s2 + $0xac] sm:$0xf]
      %v2430 = vld [vmem:[%s2 + $0xb0] sm:$0xf]
      %v2431 = vld [vmem:[%s2 + $0xb4] sm:$0xf]
      %v2432 = vld [vmem:[%s2 + $0xb8] sm:$0xf]
      %v2433 = vld [vmem:[%s2 + $0xbc] sm:$0xf]
      %v2434 = vld [vmem:[#allocation2 + $0x8] sm:$0xf8]
      %v2435 = vld [vmem:[#allocation2 + $0x40] sm:$0xff]
      %v2436 = vld [vmem:[#allocation2 + $0x48] sm:$0xf]
      %v2437 = vld [vmem:[#allocation2 + $0x8] sm:$0xf0]
      %v2438 = vld [vmem:[#allocation2 + $0x48] sm:$0x1f]
      %v2440 = vshrl.u32 %v2437, 16
      %v2442 = vshll.u32 %v2437, 16
      %v2444 = vrot.slane %v2442, 1
      %v2445 = vor.u32 %v2440, %v2444
      %v2446 = vsel %vm402, %v2445, %v2306
      %v2448 = vshll.u32 %v2435, 16
      %v2450 = vrot.slane %v2448, 1
      %v2451 = vsel %vm402, %v2350, %v2450
      %v2452 = vshrl.u32 %v2435, 16
      %v2454 = vor.u32 %v2452, %v2450
      %v2456 = vshll.u32 %v2436, 16
      %v2458 = vrot.slane %v2456, 1
      %v2459 = vsel %vm402, %v2454, %v2458
      %v2460 = vshrl.u32 %v2436, 16
      %v2462 = vor.u32 %v2460, %v2458
      %v2466 = vrot.slane %v2437, 1
      %v2467 = vsel %vm2368, %v2466, %v2372
      %v2468 = vrot.slane %v2435, 1
      %v2469 = vsel %vm2368, %v2382, %v2468
      %v2470 = vrot.slane %v2438, 1
      %v2471 = vsel %vm2368, %v2468, %v2470
      %s2472 = scalar_lea.vmem %s2, 192
      %v2473 = vld [vmem:[%s2472] sm:$0xf]
      %v2474 = vld [vmem:[%s2472 + $0x4] sm:$0xf]
      %v2475 = vld [vmem:[%s2472 + $0x8] sm:$0xf]
      %v2476 = vld [vmem:[%s2472 + $0xc] sm:$0xf]
      %v2477 = vld [vmem:[%s2472 + $0x10] sm:$0xf]
      %v2478 = vld [vmem:[%s2472 + $0x14] sm:$0xf]
      %v2479 = vld [vmem:[%s2472 + $0x18] sm:$0xf]
      %v2480 = vld [vmem:[%s2472 + $0x1c] sm:$0xf]
      %v2481 = vld [vmem:[%s2472 + $0x20] sm:$0xf]
      %v2482 = vld [vmem:[%s2472 + $0x24] sm:$0xf]
      %v2483 = vld [vmem:[%s2472 + $0x28] sm:$0xf]
      %v2484 = vld [vmem:[%s2472 + $0x2c] sm:$0xf]
      %v2485 = vld [vmem:[%s2472 + $0x30] sm:$0xf]
      %v2486 = vld [vmem:[%s2472 + $0x34] sm:$0xf]
      %v2487 = vld [vmem:[%s2472 + $0x38] sm:$0xf]
      %v2488 = vld [vmem:[%s2472 + $0x3c] sm:$0xf]
      %v2489 = vld [vmem:[%s2472 + $0x40] sm:$0xf]
      %v2490 = vld [vmem:[%s2472 + $0x44] sm:$0xf]
      %v2491 = vld [vmem:[%s2472 + $0x48] sm:$0xf]
      %v2492 = vld [vmem:[%s2472 + $0x4c] sm:$0xf]
      %v2493 = vld [vmem:[%s2472 + $0x50] sm:$0xf]
      %v2494 = vld [vmem:[%s2472 + $0x54] sm:$0xf]
      %v2495 = vld [vmem:[%s2472 + $0x58] sm:$0xf]
      %v2496 = vld [vmem:[%s2472 + $0x5c] sm:$0xf]
      %v2497 = vld [vmem:[%s2472 + $0x60] sm:$0xf]
      %v2498 = vld [vmem:[%s2472 + $0x64] sm:$0xf]
      %v2499 = vld [vmem:[%s2472 + $0x68] sm:$0xf]
      %v2500 = vld [vmem:[%s2472 + $0x6c] sm:$0xf]
      %v2501 = vld [vmem:[%s2472 + $0x70] sm:$0xf]
      %v2502 = vld [vmem:[%s2472 + $0x74] sm:$0xf]
      %v2503 = vld [vmem:[%s2472 + $0x78] sm:$0xf]
      %v2504 = vld [vmem:[%s2472 + $0x7c] sm:$0xf]
      %v2505 = vld [vmem:[%s2472 + $0x80] sm:$0xf]
      %v2506 = vld [vmem:[%s2472 + $0x84] sm:$0xf]
      %v2507 = vld [vmem:[%s2472 + $0x88] sm:$0xf]
      %v2508 = vld [vmem:[%s2472 + $0x8c] sm:$0xf]
      %v2509 = vld [vmem:[%s2472 + $0x90] sm:$0xf]
      %v2510 = vld [vmem:[%s2472 + $0x94] sm:$0xf]
      %v2511 = vld [vmem:[%s2472 + $0x98] sm:$0xf]
      %v2512 = vld [vmem:[%s2472 + $0x9c] sm:$0xf]
      %v2513 = vld [vmem:[%s2472 + $0xa0] sm:$0xf]
      %v2514 = vld [vmem:[%s2472 + $0xa4] sm:$0xf]
      %v2515 = vld [vmem:[%s2472 + $0xa8] sm:$0xf]
      %v2516 = vld [vmem:[%s2472 + $0xac] sm:$0xf]
      %v2517 = vld [vmem:[%s2472 + $0xb0] sm:$0xf]
      %v2518 = vld [vmem:[%s2472 + $0xb4] sm:$0xf]
      %v2519 = vld [vmem:[%s2472 + $0xb8] sm:$0xf]
      %v2520 = vld [vmem:[%s2472 + $0xbc] sm:$0xf]
      %vm2521 = vsmask.f32 4352
      %v2523 = vshrl.u32 %v2434, 16
      %v2525 = vrot.slane %v2523, 3
      %v2526 = vshll.u32 %v2434, 16
      %v2528 = vrot.slane %v2526, 4
      %v2529 = vor.u32 %v2525, %v2528
      %v2530 = vrot.slane %v2308, 3
      %v2531 = vrot.slane %v2304, 4
      %v2532 = vor.u32 %v2530, %v2531
      %v2533 = vsel %vm2521, %v2529, %v2532
      %v2535 = vshrl.u32 %v2446, 16
      %v2537 = vrot.slane %v2535, 3
      %v2538 = vshll.u32 %v2446, 16
      %v2540 = vrot.slane %v2538, 4
      %v2541 = vor.u32 %v2537, %v2540
      %v2543 = vshrl.u32 %v2315, 16
      %v2545 = vrot.slane %v2543, 3
      %v2546 = vshll.u32 %v2315, 16
      %v2548 = vrot.slane %v2546, 4
      %v2549 = vor.u32 %v2545, %v2548
      %v2550 = vsel %vm2521, %v2541, %v2549
      %v2552 = vshrl.u32 %v2467, 16
      %v2554 = vrot.slane %v2552, 3
      %v2555 = vshll.u32 %v2467, 16
      %v2557 = vrot.slane %v2555, 4
      %v2558 = vor.u32 %v2554, %v2557
      %v2560 = vshrl.u32 %v2375, 16
      %v2562 = vrot.slane %v2560, 3
      %v2563 = vshll.u32 %v2375, 16
      %v2565 = vrot.slane %v2563, 4
      %v2566 = vor.u32 %v2562, %v2565
      %v2567 = vsel %vm2521, %v2558, %v2566
      %v2568 = vrot.slane %v2316, 3
      %v2569 = vrot.slane %v2312, 4
      %v2570 = vor.u32 %v2568, %v2569
      %v2571 = vsel %vm2521, %v2532, %v2570
      %v2573 = vshrl.u32 %v2323, 16
      %v2575 = vrot.slane %v2573, 3
      %v2576 = vshll.u32 %v2323, 16
      %v2578 = vrot.slane %v2576, 4
      %v2579 = vor.u32 %v2575, %v2578
      %v2580 = vsel %vm2521, %v2549, %v2579
      %v2582 = vshrl.u32 %v2377, 16
      %v2584 = vrot.slane %v2582, 3
      %v2585 = vshll.u32 %v2377, 16
      %v2587 = vrot.slane %v2585, 4
      %v2588 = vor.u32 %v2584, %v2587
      %v2589 = vsel %vm2521, %v2566, %v2588
      %v2590 = vrot.slane %v2324, 3
      %v2591 = vrot.slane %v2320, 4
      %v2592 = vor.u32 %v2590, %v2591
      %v2593 = vsel %vm2521, %v2570, %v2592
      %v2595 = vshrl.u32 %v2331, 16
      %v2597 = vrot.slane %v2595, 3
      %v2598 = vshll.u32 %v2331, 16
      %v2600 = vrot.slane %v2598, 4
      %v2601 = vor.u32 %v2597, %v2600
      %v2602 = vsel %vm2521, %v2579, %v2601
      %v2604 = vshrl.u32 %v2379, 16
      %v2606 = vrot.slane %v2604, 3
      %v2607 = vshll.u32 %v2379, 16
      %v2609 = vrot.slane %v2607, 4
      %v2610 = vor.u32 %v2606, %v2609
      %v2611 = vsel %vm2521, %v2588, %v2610
      %v2612 = vrot.slane %v2332, 3
      %v2613 = vrot.slane %v2328, 4
      %v2614 = vor.u32 %v2612, %v2613
      %v2615 = vsel %vm2521, %v2592, %v2614
      %v2617 = vshrl.u32 %v2339, 16
      %v2619 = vrot.slane %v2617, 3
      %v2620 = vshll.u32 %v2339, 16
      %v2622 = vrot.slane %v2620, 4
      %v2623 = vor.u32 %v2619, %v2622
      %v2624 = vsel %vm2521, %v2601, %v2623
      %v2626 = vshrl.u32 %v2381, 16
      %v2628 = vrot.slane %v2626, 3
      %v2629 = vshll.u32 %v2381, 16
      %v2631 = vrot.slane %v2629, 4
      %v2632 = vor.u32 %v2628, %v2631
      %v2633 = vsel %vm2521, %v2610, %v2632
      %v2634 = vrot.slane %v2340, 3
      %v2635 = vrot.slane %v2336, 4
      %v2636 = vor.u32 %v2634, %v2635
      %v2637 = vsel %vm2521, %v2614, %v2636
      %v2639 = vshrl.u32 %v2347, 16
      %v2641 = vrot.slane %v2639, 3
      %v2642 = vshll.u32 %v2347, 16
      %v2644 = vrot.slane %v2642, 4
      %v2645 = vor.u32 %v2641, %v2644
      %v2646 = vsel %vm2521, %v2623, %v2645
      %v2648 = vshrl.u32 %v2383, 16
      %v2650 = vrot.slane %v2648, 3
      %v2651 = vshll.u32 %v2383, 16
      %v2653 = vrot.slane %v2651, 4
      %v2654 = vor.u32 %v2650, %v2653
      %v2655 = vsel %vm2521, %v2632, %v2654
      %v2656 = vrot.slane %v2348, 3
      %v2657 = vrot.slane %v2344, 4
      %v2658 = vor.u32 %v2656, %v2657
      %v2659 = vsel %vm2521, %v2636, %v2658
      %v2661 = vshrl.u32 %v2451, 16
      %v2663 = vrot.slane %v2661, 3
      %v2664 = vshll.u32 %v2451, 16
      %v2666 = vrot.slane %v2664, 4
      %v2667 = vor.u32 %v2663, %v2666
      %v2668 = vsel %vm2521, %v2645, %v2667
      %v2670 = vshrl.u32 %v2469, 16
      %v2672 = vrot.slane %v2670, 3
      %v2673 = vshll.u32 %v2469, 16
      %v2675 = vrot.slane %v2673, 4
      %v2676 = vor.u32 %v2672, %v2675
      %v2677 = vsel %vm2521, %v2654, %v2676
      %v2678 = vrot.slane %v2452, 3
      %v2679 = vrot.slane %v2448, 4
      %v2680 = vor.u32 %v2678, %v2679
      %v2681 = vsel %vm2521, %v2658, %v2680
      %v2683 = vshrl.u32 %v2459, 16
      %v2685 = vrot.slane %v2683, 3
      %v2686 = vshll.u32 %v2459, 16
      %v2688 = vrot.slane %v2686, 4
      %v2689 = vor.u32 %v2685, %v2688
      %v2690 = vsel %vm2521, %v2667, %v2689
      %v2692 = vshrl.u32 %v2471, 16
      %v2694 = vrot.slane %v2692, 3
      %v2695 = vshll.u32 %v2471, 16
      %v2697 = vrot.slane %v2695, 4
      %v2698 = vor.u32 %v2694, %v2697
      %v2699 = vsel %vm2521, %v2676, %v2698
      %v2700 = vrot.slane %v2460, 3
      %v2701 = vrot.slane %v2456, 4
      %v2702 = vor.u32 %v2700, %v2701
      %v2703 = vsel %vm2521, %v2680, %v2702
      %v2705 = vshrl.u32 %v2462, 16
      %v2707 = vrot.slane %v2705, 3
      %v2708 = vshll.u32 %v2462, 16
      %v2710 = vrot.slane %v2708, 4
      %v2711 = vor.u32 %v2707, %v2710
      %v2712 = vsel %vm2521, %v2689, %v2711
      %v2714 = vshrl.u32 %v2470, 16
      %v2716 = vrot.slane %v2714, 3
      %v2717 = vshll.u32 %v2470, 16
      %v2719 = vrot.slane %v2717, 4
      %v2720 = vor.u32 %v2716, %v2719
      %v2721 = vsel %vm2521, %v2698, %v2720
      %v2794 = vunpack.c.l.b16 %v2473
      %v2795 = vunpack.c.l.b16 %v2474
      %v2796 = vunpack.c.l.b16 %v2475
      %v2797 = vunpack.c.l.b16 %v2476
      %v2798 = vunpack.c.l.b16 %v2477
      %v2799 = vunpack.c.l.b16 %v2478
      %v2800 = vunpack.c.l.b16 %v2479
      %v2801 = vunpack.c.l.b16 %v2480
      %v2802 = vunpack.c.l.b16 %v2481
      %v2803 = vunpack.c.l.b16 %v2482
      %v2804 = vunpack.c.l.b16 %v2483
      %v2805 = vunpack.c.l.b16 %v2484
      %v2806 = vunpack.c.l.b16 %v2485
      %v2807 = vunpack.c.l.b16 %v2486
      %v2808 = vunpack.c.l.b16 %v2487
      %v2809 = vunpack.c.l.b16 %v2488
      %v2810 = vunpack.c.l.b16 %v2489
      %v2811 = vunpack.c.l.b16 %v2490
      %v2812 = vunpack.c.l.b16 %v2491
      %v2813 = vunpack.c.l.b16 %v2492
      %v2814 = vunpack.c.l.b16 %v2493
      %v2815 = vunpack.c.l.b16 %v2494
      %v2816 = vunpack.c.l.b16 %v2495
      %v2817 = vunpack.c.l.b16 %v2496
      %v2818 = vunpack.c.l.b16 %v2497
      %v2819 = vunpack.c.l.b16 %v2498
      %v2820 = vunpack.c.l.b16 %v2499
      %v2821 = vunpack.c.l.b16 %v2500
      %v2822 = vunpack.c.l.b16 %v2501
      %v2823 = vunpack.c.l.b16 %v2502
      %v2824 = vunpack.c.l.b16 %v2503
      %v2825 = vunpack.c.l.b16 %v2504
      %v2826 = vunpack.c.l.b16 %v2505
      %v2827 = vunpack.c.l.b16 %v2506
      %v2828 = vunpack.c.l.b16 %v2507
      %v2829 = vunpack.c.l.b16 %v2508
      %v2830 = vunpack.c.l.b16 %v2509
      %v2831 = vunpack.c.l.b16 %v2510
      %v2832 = vunpack.c.l.b16 %v2511
      %v2833 = vunpack.c.l.b16 %v2512
      %v2834 = vunpack.c.l.b16 %v2513
      %v2835 = vunpack.c.l.b16 %v2514
      %v2836 = vunpack.c.l.b16 %v2515
      %v2837 = vunpack.c.l.b16 %v2516
      %v2838 = vunpack.c.l.b16 %v2517
      %v2839 = vunpack.c.l.b16 %v2518
      %v2840 = vunpack.c.l.b16 %v2519
      %v2841 = vunpack.c.l.b16 %v2520
      %v2842 = vpack.c.b16 %v2795, %v2794
      %v2843 = vpack.c.b16 %v2797, %v2796
      %v2844 = vpack.c.b16 %v2799, %v2798
      %v2845 = vpack.c.b16 %v2801, %v2800
      %v2846 = vpack.c.b16 %v2803, %v2802
      %v2847 = vpack.c.b16 %v2805, %v2804
      %v2848 = vpack.c.b16 %v2807, %v2806
      %v2849 = vpack.c.b16 %v2809, %v2808
      %v2850 = vpack.c.b16 %v2811, %v2810
      %v2851 = vpack.c.b16 %v2813, %v2812
      %v2852 = vpack.c.b16 %v2815, %v2814
      %v2853 = vpack.c.b16 %v2817, %v2816
      %v2854 = vpack.c.b16 %v2819, %v2818
      %v2855 = vpack.c.b16 %v2821, %v2820
      %v2856 = vpack.c.b16 %v2823, %v2822
      %v2857 = vpack.c.b16 %v2825, %v2824
      %v2858 = vpack.c.b16 %v2827, %v2826
      %v2859 = vpack.c.b16 %v2829, %v2828
      %v2860 = vpack.c.b16 %v2831, %v2830
      %v2861 = vpack.c.b16 %v2833, %v2832
      %v2862 = vpack.c.b16 %v2835, %v2834
      %v2863 = vpack.c.b16 %v2837, %v2836
      %v2864 = vpack.c.b16 %v2839, %v2838
      %v2865 = vpack.c.b16 %v2841, %v2840
      %2890 = vmatprep.subr.bf16.mxu0 0
      %2891 = vmatpush1.bf16.msra.mxu0 %v2842
      %2892 = vmatprep.subr.bf16.mxu0 0
      %2893 = vmatpush1.bf16.msra.mxu0 %v2843
      %2894 = vmatprep.subr.bf16.mxu0 0
      %2895 = vmatpush1.bf16.msra.mxu0 %v2844
      %2896 = vmatprep.subr.bf16.mxu0 0
      %2897 = vmatpush1.bf16.msra.mxu0 %v2845
      %2898 = vmatprep.subr.bf16.mxu0 0
      %2899 = vmatpush1.bf16.msra.mxu0 %v2846
      %2900 = vmatprep.subr.bf16.mxu0 0
      %2901 = vmatpush1.bf16.msra.mxu0 %v2847
      %2902 = vmatprep.subr.bf16.mxu0 0
      %2903 = vmatpush1.bf16.msra.mxu0 %v2848
      %2904 = vmatprep.subr.bf16.mxu0 0
      %2905 = vmatpush1.bf16.msra.mxu0 %v2849
      %2906 = vmatprep.subr.bf16.mxu0 0
      %2907 = vmatpush1.bf16.msra.mxu0 %v2850
      %2908 = vmatprep.subr.bf16.mxu0 0
      %2909 = vmatpush1.bf16.msra.mxu0 %v2851
      %2910 = vmatprep.subr.bf16.mxu0 0
      %2911 = vmatpush1.bf16.msra.mxu0 %v2852
      %2912 = vmatprep.subr.bf16.mxu0 0
      %2913 = vmatpush1.bf16.msra.mxu0 %v2853
      %2914 = vmatprep.subr.bf16.mxu0 0
      %2915 = vmatpush1.bf16.msra.mxu0 %v2854
      %2916 = vmatprep.subr.bf16.mxu0 0
      %2917 = vmatpush1.bf16.msra.mxu0 %v2855
      %2918 = vmatprep.subr.bf16.mxu0 0
      %2919 = vmatpush1.bf16.msra.mxu0 %v2856
      %2920 = vmatprep.subr.bf16.mxu0 0
      %2921 = vmatpush1.bf16.msra.mxu0 %v2857
      %2922 = vmatprep.mubr.bf16.mxu0 %v2550
      %2923 = vmatmul.mubr.bf16.gmra.mrb[0].mxu0 %v2533
      %v2924 = vpop.f32.mrb[0].mxu0
      %v2925 = vadd.f32 0.0, %v2924
      %v2926 = vpop.f32.mrb[0].mxu0
      %v2927 = vpop.f32.mrb[0].mxu0
      %v2928 = vadd.f32 0.0, %v2927
      %v2929 = vpop.f32.mrb[0].mxu0
      %2930 = vmatprep.mubr.bf16.mxu0 %v2580
      %2931 = vmatmul.mubr.bf16.gmra.mrb[0].mxu0 %v2571
      %v2932 = vpop.f32.mrb[0].mxu0
      %v2933 = vadd.f32 0.0, %v2932
      %v2934 = vpop.f32.mrb[0].mxu0
      %v2935 = vpop.f32.mrb[0].mxu0
      %v2936 = vadd.f32 0.0, %v2935
      %v2937 = vpop.f32.mrb[0].mxu0
      %2938 = vmatprep.mubr.bf16.mxu0 %v2602
      %2939 = vmatmul.mubr.bf16.gmra.mrb[0].mxu0 %v2593
      %v2940 = vpop.f32.mrb[0].mxu0
      %v2941 = vadd.f32 0.0, %v2940
      %v2942 = vpop.f32.mrb[0].mxu0
      %v2943 = vpop.f32.mrb[0].mxu0
      %v2944 = vadd.f32 0.0, %v2943
      %v2945 = vpop.f32.mrb[0].mxu0
      %2946 = vmatprep.mubr.bf16.mxu0 %v2624
      %2947 = vmatmul.mubr.bf16.gmra.mrb[0].mxu0 %v2615
      %v2948 = vpop.f32.mrb[0].mxu0
      %v2949 = vadd.f32 0.0, %v2948
      %v2950 = vpop.f32.mrb[0].mxu0
      %v2951 = vpop.f32.mrb[0].mxu0
      %v2952 = vadd.f32 0.0, %v2951
      %v2953 = vpop.f32.mrb[0].mxu0
      %2954 = vmatprep.mubr.bf16.mxu0 %v2646
      %2955 = vmatmul.mubr.bf16.gmra.mrb[0].mxu0 %v2637
      %v2956 = vpop.f32.mrb[0].mxu0
      %v2957 = vadd.f32 0.0, %v2956
      %v2958 = vpop.f32.mrb[0].mxu0
      %v2959 = vpop.f32.mrb[0].mxu0
      %v2960 = vadd.f32 0.0, %v2959
      %v2961 = vpop.f32.mrb[0].mxu0
      %2962 = vmatprep.mubr.bf16.mxu0 %v2668
      %2963 = vmatmul.mubr.bf16.gmra.mrb[0].mxu0 %v2659
      %v2964 = vpop.f32.mrb[0].mxu0
      %v2965 = vadd.f32 0.0, %v2964
      %v2966 = vpop.f32.mrb[0].mxu0
      %v2967 = vpop.f32.mrb[0].mxu0
      %v2968 = vadd.f32 0.0, %v2967
      %v2969 = vpop.f32.mrb[0].mxu0
      %2970 = vmatprep.mubr.bf16.mxu0 %v2690
      %2971 = vmatmul.mubr.bf16.gmra.mrb[0].mxu0 %v2681
      %v2972 = vpop.f32.mrb[0].mxu0
      %v2973 = vadd.f32 0.0, %v2972
      %v2974 = vpop.f32.mrb[0].mxu0
      %v2975 = vpop.f32.mrb[0].mxu0
      %v2976 = vadd.f32 0.0, %v2975
      %v2977 = vpop.f32.mrb[0].mxu0
      %2978 = vmatprep.mubr.bf16.mxu0 %v2712
      %2979 = vmatmul.mubr.bf16.gmra.mrb[0].mxu0 %v2703
      %v2980 = vpop.f32.mrb[0].mxu0
      %v2981 = vadd.f32 0.0, %v2980
      %v2982 = vpop.f32.mrb[0].mxu0
      %v2983 = vpop.f32.mrb[0].mxu0
      %v2984 = vadd.f32 0.0, %v2983
      %v2985 = vpop.f32.mrb[0].mxu0
      %2986 = vdwg.mxu0
      %2987 = vmatprep.subr.bf16.mxu0 0
      %2988 = vmatpush1.bf16.msra.mxu0 %v2858
      %2989 = vmatprep.subr.bf16.mxu0 0
      %2990 = vmatpush1.bf16.msra.mxu0 %v2859
      %2991 = vmatprep.subr.bf16.mxu0 0
      %2992 = vmatpush1.bf16.msra.mxu0 %v2860
      %2993 = vmatprep.subr.bf16.mxu0 0
      %2994 = vmatpush1.bf16.msra.mxu0 %v2861
      %2995 = vmatprep.subr.bf16.mxu0 0
      %2996 = vmatpush1.bf16.msra.mxu0 %v2862
      %2997 = vmatprep.subr.bf16.mxu0 0
      %2998 = vmatpush1.bf16.msra.mxu0 %v2863
      %2999 = vmatprep.subr.bf16.mxu0 0
      %3000 = vmatpush1.bf16.msra.mxu0 %v2864
      %3001 = vmatprep.subr.bf16.mxu0 0
      %3002 = vmatpush1.bf16.msra.mxu0 %v2865
      %3003 = vmatprep.subr.bf16.mxu0 0
      %3004 = vmatpush1.bf16.msra.mxu0 0
      %3005 = vmatprep.subr.bf16.mxu0 0
      %3006 = vmatpush1.bf16.msra.mxu0 0
      %3007 = vmatprep.subr.bf16.mxu0 0
      %3008 = vmatpush1.bf16.msra.mxu0 0
      %3009 = vmatprep.subr.bf16.mxu0 0
      %3010 = vmatpush1.bf16.msra.mxu0 0
      %3011 = vmatprep.subr.bf16.mxu0 0
      %3012 = vmatpush1.bf16.msra.mxu0 0
      %3013 = vmatprep.subr.bf16.mxu0 0
      %3014 = vmatpush1.bf16.msra.mxu0 0
      %3015 = vmatprep.subr.bf16.mxu0 0
      %3016 = vmatpush1.bf16.msra.mxu0 0
      %3017 = vmatprep.subr.bf16.mxu0 0
      %3018 = vmatpush1.bf16.msra.mxu0 0
      %3019 = vmatprep.mubr.bf16.mxu0 0
      %3020 = vmatmul.mubr.bf16.gmra.mrb[0].mxu0 %v2567
      %v3021 = vpop.f32.mrb[0].mxu0
      %v3022 = vadd.f32 %v2925, %v3021
      %v3023 = vpop.f32.mrb[0].mxu0
      %v3024 = vpop.f32.mrb[0].mxu0
      %v3025 = vadd.f32 %v2928, %v3024
      %v3026 = vpop.f32.mrb[0].mxu0
      %3027 = vmatprep.mubr.bf16.mxu0 0
      %3028 = vmatmul.mubr.bf16.gmra.mrb[0].mxu0 %v2589
      %v3029 = vpop.f32.mrb[0].mxu0
      %v3030 = vadd.f32 %v2933, %v3029
      %v3031 = vpop.f32.mrb[0].mxu0
      %v3032 = vpop.f32.mrb[0].mxu0
      %v3033 = vadd.f32 %v2936, %v3032
      %v3034 = vpop.f32.mrb[0].mxu0
      %3035 = vmatprep.mubr.bf16.mxu0 0
      %3036 = vmatmul.mubr.bf16.gmra.mrb[0].mxu0 %v2611
      %v3037 = vpop.f32.mrb[0].mxu0
      %v3038 = vadd.f32 %v2941, %v3037
      %v3039 = vpop.f32.mrb[0].mxu0
      %v3040 = vpop.f32.mrb[0].mxu0
      %v3041 = vadd.f32 %v2944, %v3040
      %v3042 = vpop.f32.mrb[0].mxu0
      %3043 = vmatprep.mubr.bf16.mxu0 0
      %3044 = vmatmul.mubr.bf16.gmra.mrb[0].mxu0 %v2633
      %v3045 = vpop.f32.mrb[0].mxu0
      %v3046 = vadd.f32 %v2949, %v3045
      %v3047 = vpop.f32.mrb[0].mxu0
      %v3048 = vpop.f32.mrb[0].mxu0
      %v3049 = vadd.f32 %v2952, %v3048
      %v3050 = vpop.f32.mrb[0].mxu0
      %3051 = vmatprep.mubr.bf16.mxu0 0
      %3052 = vmatmul.mubr.bf16.gmra.mrb[0].mxu0 %v2655
      %v3053 = vpop.f32.mrb[0].mxu0
      %v3054 = vadd.f32 %v2957, %v3053
      %v3055 = vpop.f32.mrb[0].mxu0
      %v3056 = vpop.f32.mrb[0].mxu0
      %v3057 = vadd.f32 %v2960, %v3056
      %v3058 = vpop.f32.mrb[0].mxu0
      %3059 = vmatprep.mubr.bf16.mxu0 0
      %3060 = vmatmul.mubr.bf16.gmra.mrb[0].mxu0 %v2677
      %v3061 = vpop.f32.mrb[0].mxu0
      %v3062 = vadd.f32 %v2965, %v3061
      %v3063 = vpop.f32.mrb[0].mxu0
      %v3064 = vpop.f32.mrb[0].mxu0
      %v3065 = vadd.f32 %v2968, %v3064
      %v3066 = vpop.f32.mrb[0].mxu0
      %3067 = vmatprep.mubr.bf16.mxu0 0
      %3068 = vmatmul.mubr.bf16.gmra.mrb[0].mxu0 %v2699
      %v3069 = vpop.f32.mrb[0].mxu0
      %v3070 = vadd.f32 %v2973, %v3069
      %v3071 = vpop.f32.mrb[0].mxu0
      %v3072 = vpop.f32.mrb[0].mxu0
      %v3073 = vadd.f32 %v2976, %v3072
      %v3074 = vpop.f32.mrb[0].mxu0
      %3075 = vmatprep.mubr.bf16.mxu0 0
      %3076 = vmatmul.mubr.bf16.gmra.mrb[0].mxu0 %v2721
      %v3077 = vpop.f32.mrb[0].mxu0
      %v3078 = vadd.f32 %v2981, %v3077
      %v3079 = vpop.f32.mrb[0].mxu0
      %v3080 = vpop.f32.mrb[0].mxu0
      %v3081 = vadd.f32 %v2984, %v3080
      %v3082 = vpop.f32.mrb[0].mxu0
      %3083 = vdwg.mxu0
      %v3085 = vshrl.u32 %v2277, 16
      %v3087 = vrot.slane %v3085, 3
      %v3088 = vshll.u32 %v2277, 16
      %v3090 = vrot.slane %v3088, 4
      %v3091 = vor.u32 %v3087, %v3090
      %v3092 = vrot.slane %v2300, 3
      %v3093 = vrot.slane %v2296, 4
      %v3094 = vor.u32 %v3092, %v3093
      %v3095 = vsel %vm2521, %v3091, %v3094
      %v3097 = vshrl.u32 %v2299, 16
      %v3099 = vrot.slane %v3097, 3
      %v3100 = vshll.u32 %v2299, 16
      %v3102 = vrot.slane %v3100, 4
      %v3103 = vor.u32 %v3099, %v3102
      %v3105 = vshrl.u32 %v2307, 16
      %v3107 = vrot.slane %v3105, 3
      %v3108 = vshll.u32 %v2307, 16
      %v3110 = vrot.slane %v3108, 4
      %v3111 = vor.u32 %v3107, %v3110
      %v3112 = vsel %vm2521, %v3103, %v3111
      %v3114 = vshrl.u32 %v2371, 16
      %v3116 = vrot.slane %v3114, 3
      %v3117 = vshll.u32 %v2371, 16
      %v3119 = vrot.slane %v3117, 4
      %v3120 = vor.u32 %v3116, %v3119
      %v3122 = vshrl.u32 %v2373, 16
      %v3124 = vrot.slane %v3122, 3
      %v3125 = vshll.u32 %v2373, 16
      %v3127 = vrot.slane %v3125, 4
      %v3128 = vor.u32 %v3124, %v3127
      %v3129 = vsel %vm2521, %v3120, %v3128
      %v3130 = vsel %vm2521, %v3094, %v2532
      %v3131 = vsel %vm2521, %v3111, %v2549
      %v3132 = vsel %vm2521, %v3128, %v2566
      %v3134 = vshrl.u32 %v2355, 16
      %v3136 = vrot.slane %v3134, 3
      %v3137 = vshll.u32 %v2355, 16
      %v3139 = vrot.slane %v3137, 4
      %v3140 = vor.u32 %v3136, %v3139
      %v3141 = vsel %vm2521, %v2645, %v3140
      %v3143 = vshrl.u32 %v2385, 16
      %v3145 = vrot.slane %v3143, 3
      %v3146 = vshll.u32 %v2385, 16
      %v3148 = vrot.slane %v3146, 4
      %v3149 = vor.u32 %v3145, %v3148
      %v3150 = vsel %vm2521, %v2654, %v3149
      %v3151 = vrot.slane %v2356, 3
      %v3152 = vrot.slane %v2352, 4
      %v3153 = vor.u32 %v3151, %v3152
      %v3154 = vsel %vm2521, %v2658, %v3153
      %v3156 = vshrl.u32 %v2358, 16
      %v3158 = vrot.slane %v3156, 3
      %v3159 = vshll.u32 %v2358, 16
      %v3161 = vrot.slane %v3159, 4
      %v3162 = vor.u32 %v3158, %v3161
      %v3163 = vsel %vm2521, %v3140, %v3162
      %v3165 = vshrl.u32 %v2384, 16
      %v3167 = vrot.slane %v3165, 3
      %v3168 = vshll.u32 %v2384, 16
      %v3170 = vrot.slane %v3168, 4
      %v3171 = vor.u32 %v3167, %v3170
      %v3172 = vsel %vm2521, %v3149, %v3171
      %v3232 = vunpack.c.l.b16 %v2386
      %v3233 = vunpack.c.l.b16 %v2387
      %v3234 = vunpack.c.l.b16 %v2388
      %v3235 = vunpack.c.l.b16 %v2389
      %v3236 = vunpack.c.l.b16 %v2390
      %v3237 = vunpack.c.l.b16 %v2391
      %v3238 = vunpack.c.l.b16 %v2392
      %v3239 = vunpack.c.l.b16 %v2393
      %v3240 = vunpack.c.l.b16 %v2394
      %v3241 = vunpack.c.l.b16 %v2395
      %v3242 = vunpack.c.l.b16 %v2396
      %v3243 = vunpack.c.l.b16 %v2397
      %v3244 = vunpack.c.l.b16 %v2398
      %v3245 = vunpack.c.l.b16 %v2399
      %v3246 = vunpack.c.l.b16 %v2400
      %v3247 = vunpack.c.l.b16 %v2401
      %v3248 = vunpack.c.l.b16 %v2402
      %v3249 = vunpack.c.l.b16 %v2403
      %v3250 = vunpack.c.l.b16 %v2404
      %v3251 = vunpack.c.l.b16 %v2405
      %v3252 = vunpack.c.l.b16 %v2406
      %v3253 = vunpack.c.l.b16 %v2407
      %v3254 = vunpack.c.l.b16 %v2408
      %v3255 = vunpack.c.l.b16 %v2409
      %v3256 = vunpack.c.l.b16 %v2410
      %v3257 = vunpack.c.l.b16 %v2411
      %v3258 = vunpack.c.l.b16 %v2412
      %v3259 = vunpack.c.l.b16 %v2413
      %v3260 = vunpack.c.l.b16 %v2414
      %v3261 = vunpack.c.l.b16 %v2415
      %v3262 = vunpack.c.l.b16 %v2416
      %v3263 = vunpack.c.l.b16 %v2417
      %v3264 = vunpack.c.l.b16 %v2418
      %v3265 = vunpack.c.l.b16 %v2419
      %v3266 = vunpack.c.l.b16 %v2420
      %v3267 = vunpack.c.l.b16 %v2421
      %v3268 = vunpack.c.l.b16 %v2422
      %v3269 = vunpack.c.l.b16 %v2423
      %v3270 = vunpack.c.l.b16 %v2424
      %v3271 = vunpack.c.l.b16 %v2425
      %v3272 = vunpack.c.l.b16 %v2426
      %v3273 = vunpack.c.l.b16 %v2427
      %v3274 = vunpack.c.l.b16 %v2428
      %v3275 = vunpack.c.l.b16 %v2429
      %v3276 = vunpack.c.l.b16 %v2430
      %v3277 = vunpack.c.l.b16 %v2431
      %v3278 = vunpack.c.l.b16 %v2432
      %v3279 = vunpack.c.l.b16 %v2433
      %v3280 = vpack.c.b16 %v3233, %v3232
      %v3281 = vpack.c.b16 %v3235, %v3234
      %v3282 = vpack.c.b16 %v3237, %v3236
      %v3283 = vpack.c.b16 %v3239, %v3238
      %v3284 = vpack.c.b16 %v3241, %v3240
      %v3285 = vpack.c.b16 %v3243, %v3242
      %v3286 = vpack.c.b16 %v3245, %v3244
      %v3287 = vpack.c.b16 %v3247, %v3246
      %v3288 = vpack.c.b16 %v3249, %v3248
      %v3289 = vpack.c.b16 %v3251, %v3250
      %v3290 = vpack.c.b16 %v3253, %v3252
      %v3291 = vpack.c.b16 %v3255, %v3254
      %v3292 = vpack.c.b16 %v3257, %v3256
      %v3293 = vpack.c.b16 %v3259, %v3258
      %v3294 = vpack.c.b16 %v3261, %v3260
      %v3295 = vpack.c.b16 %v3263, %v3262
      %v3296 = vpack.c.b16 %v3265, %v3264
      %v3297 = vpack.c.b16 %v3267, %v3266
      %v3298 = vpack.c.b16 %v3269, %v3268
      %v3299 = vpack.c.b16 %v3271, %v3270
      %v3300 = vpack.c.b16 %v3273, %v3272
      %v3301 = vpack.c.b16 %v3275, %v3274
      %v3302 = vpack.c.b16 %v3277, %v3276
      %v3303 = vpack.c.b16 %v3279, %v3278
      %3328 = vmatprep.subr.bf16.mxu0 0
      %3329 = vmatpush1.bf16.msra.mxu0 %v3280
      %3330 = vmatprep.subr.bf16.mxu0 0
      %3331 = vmatpush1.bf16.msra.mxu0 %v3281
      %3332 = vmatprep.subr.bf16.mxu0 0
      %3333 = vmatpush1.bf16.msra.mxu0 %v3282
      %3334 = vmatprep.subr.bf16.mxu0 0
      %3335 = vmatpush1.bf16.msra.mxu0 %v3283
      %3336 = vmatprep.subr.bf16.mxu0 0
      %3337 = vmatpush1.bf16.msra.mxu0 %v3284
      %3338 = vmatprep.subr.bf16.mxu0 0
      %3339 = vmatpush1.bf16.msra.mxu0 %v3285
      %3340 = vmatprep.subr.bf16.mxu0 0
      %3341 = vmatpush1.bf16.msra.mxu0 %v3286
      %3342 = vmatprep.subr.bf16.mxu0 0
      %3343 = vmatpush1.bf16.msra.mxu0 %v3287
      %3344 = vmatprep.subr.bf16.mxu0 0
      %3345 = vmatpush1.bf16.msra.mxu0 %v3288
      %3346 = vmatprep.subr.bf16.mxu0 0
      %3347 = vmatpush1.bf16.msra.mxu0 %v3289
      %3348 = vmatprep.subr.bf16.mxu0 0
      %3349 = vmatpush1.bf16.msra.mxu0 %v3290
      %3350 = vmatprep.subr.bf16.mxu0 0
      %3351 = vmatpush1.bf16.msra.mxu0 %v3291
      %3352 = vmatprep.subr.bf16.mxu0 0
      %3353 = vmatpush1.bf16.msra.mxu0 %v3292
      %3354 = vmatprep.subr.bf16.mxu0 0
      %3355 = vmatpush1.bf16.msra.mxu0 %v3293
      %3356 = vmatprep.subr.bf16.mxu0 0
      %3357 = vmatpush1.bf16.msra.mxu0 %v3294
      %3358 = vmatprep.subr.bf16.mxu0 0
      %3359 = vmatpush1.bf16.msra.mxu0 %v3295
      %3360 = vmatprep.mubr.bf16.mxu0 %v3112
      %3361 = vmatmul.mubr.bf16.gmra.mrb[0].mxu0 %v3095
      %v3362 = vpop.f32.mrb[0].mxu0
      %v3363 = vadd.f32 %v3022, %v3362
      %v3364 = vpop.f32.mrb[0].mxu0
      %v3365 = vpop.f32.mrb[0].mxu0
      %v3366 = vadd.f32 %v3025, %v3365
      %v3367 = vpop.f32.mrb[0].mxu0
      %3368 = vmatprep.mubr.bf16.mxu0 %v3131
      %3369 = vmatmul.mubr.bf16.gmra.mrb[0].mxu0 %v3130
      %v3370 = vpop.f32.mrb[0].mxu0
      %v3371 = vadd.f32 %v3030, %v3370
      %v3372 = vpop.f32.mrb[0].mxu0
      %v3373 = vpop.f32.mrb[0].mxu0
      %v3374 = vadd.f32 %v3033, %v3373
      %v3375 = vpop.f32.mrb[0].mxu0
      %3376 = vmatprep.mubr.bf16.mxu0 %v2580
      %3377 = vmatmul.mubr.bf16.gmra.mrb[0].mxu0 %v2571
      %v3378 = vpop.f32.mrb[0].mxu0
      %v3379 = vadd.f32 %v3038, %v3378
      %v3380 = vpop.f32.mrb[0].mxu0
      %v3381 = vpop.f32.mrb[0].mxu0
      %v3382 = vadd.f32 %v3041, %v3381
      %v3383 = vpop.f32.mrb[0].mxu0
      %3384 = vmatprep.mubr.bf16.mxu0 %v2602
      %3385 = vmatmul.mubr.bf16.gmra.mrb[0].mxu0 %v2593
      %v3386 = vpop.f32.mrb[0].mxu0
      %v3387 = vadd.f32 %v3046, %v3386
      %v3388 = vpop.f32.mrb[0].mxu0
      %v3389 = vpop.f32.mrb[0].mxu0
      %v3390 = vadd.f32 %v3049, %v3389
      %v3391 = vpop.f32.mrb[0].mxu0
      %3392 = vmatprep.mubr.bf16.mxu0 %v2624
      %3393 = vmatmul.mubr.bf16.gmra.mrb[0].mxu0 %v2615
      %v3394 = vpop.f32.mrb[0].mxu0
      %v3395 = vadd.f32 %v3054, %v3394
      %v3396 = vpop.f32.mrb[0].mxu0
      %v3397 = vpop.f32.mrb[0].mxu0
      %v3398 = vadd.f32 %v3057, %v3397
      %v3399 = vpop.f32.mrb[0].mxu0
      %3400 = vmatprep.mubr.bf16.mxu0 %v2646
      %3401 = vmatmul.mubr.bf16.gmra.mrb[0].mxu0 %v2637
      %v3402 = vpop.f32.mrb[0].mxu0
      %v3403 = vadd.f32 %v3062, %v3402
      %v3404 = vpop.f32.mrb[0].mxu0
      %v3405 = vpop.f32.mrb[0].mxu0
      %v3406 = vadd.f32 %v3065, %v3405
      %v3407 = vpop.f32.mrb[0].mxu0
      %3408 = vmatprep.mubr.bf16.mxu0 %v3141
      %3409 = vmatmul.mubr.bf16.gmra.mrb[0].mxu0 %v2659
      %v3410 = vpop.f32.mrb[0].mxu0
      %v3411 = vadd.f32 %v3070, %v3410
      %v3412 = vpop.f32.mrb[0].mxu0
      %v3413 = vpop.f32.mrb[0].mxu0
      %v3414 = vadd.f32 %v3073, %v3413
      %v3415 = vpop.f32.mrb[0].mxu0
      %3416 = vmatprep.mubr.bf16.mxu0 %v3163
      %3417 = vmatmul.mubr.bf16.gmra.mrb[0].mxu0 %v3154
      %v3418 = vpop.f32.mrb[0].mxu0
      %v3419 = vadd.f32 %v3078, %v3418
      %v3420 = vpop.f32.mrb[0].mxu0
      %v3421 = vpop.f32.mrb[0].mxu0
      %v3422 = vadd.f32 %v3081, %v3421
      %v3423 = vpop.f32.mrb[0].mxu0
      %3424 = vdwg.mxu0
      %3425 = vmatprep.subr.bf16.mxu0 0
      %3426 = vmatpush1.bf16.msra.mxu0 %v3296
      %3427 = vmatprep.subr.bf16.mxu0 0
      %3428 = vmatpush1.bf16.msra.mxu0 %v3297
      %3429 = vmatprep.subr.bf16.mxu0 0
      %3430 = vmatpush1.bf16.msra.mxu0 %v3298
      %3431 = vmatprep.subr.bf16.mxu0 0
      %3432 = vmatpush1.bf16.msra.mxu0 %v3299
      %3433 = vmatprep.subr.bf16.mxu0 0
      %3434 = vmatpush1.bf16.msra.mxu0 %v3300
      %3435 = vmatprep.subr.bf16.mxu0 0
      %3436 = vmatpush1.bf16.msra.mxu0 %v3301
      %3437 = vmatprep.subr.bf16.mxu0 0
      %3438 = vmatpush1.bf16.msra.mxu0 %v3302
      %3439 = vmatprep.subr.bf16.mxu0 0
      %3440 = vmatpush1.bf16.msra.mxu0 %v3303
      %3441 = vmatprep.subr.bf16.mxu0 0
      %3442 = vmatpush1.bf16.msra.mxu0 0
      %3443 = vmatprep.subr.bf16.mxu0 0
      %3444 = vmatpush1.bf16.msra.mxu0 0
      %3445 = vmatprep.subr.bf16.mxu0 0
      %3446 = vmatpush1.bf16.msra.mxu0 0
      %3447 = vmatprep.subr.bf16.mxu0 0
      %3448 = vmatpush1.bf16.msra.mxu0 0
      %3449 = vmatprep.subr.bf16.mxu0 0
      %3450 = vmatpush1.bf16.msra.mxu0 0
      %3451 = vmatprep.subr.bf16.mxu0 0
      %3452 = vmatpush1.bf16.msra.mxu0 0
      %3453 = vmatprep.subr.bf16.mxu0 0
      %3454 = vmatpush1.bf16.msra.mxu0 0
      %3455 = vmatprep.subr.bf16.mxu0 0
      %3456 = vmatpush1.bf16.msra.mxu0 0
      %3457 = vmatprep.mubr.bf16.mxu0 0
      %3458 = vmatmul.mubr.bf16.gmra.mrb[0].mxu0 %v3129
      %v3459 = vpop.f32.mrb[0].mxu0
      %v3460 = vadd.f32 %v3363, %v3459
      %v3461 = vpop.f32.mrb[0].mxu0
      %v3462 = vpop.f32.mrb[0].mxu0
      %v3463 = vadd.f32 %v3366, %v3462
      %v3464 = vpop.f32.mrb[0].mxu0
      %3465 = vmatprep.mubr.bf16.mxu0 0
      %3466 = vmatmul.mubr.bf16.gmra.mrb[0].mxu0 %v3132
      %v3467 = vpop.f32.mrb[0].mxu0
      %v3468 = vadd.f32 %v3371, %v3467
      %v3469 = vpop.f32.mrb[0].mxu0
      %v3470 = vpop.f32.mrb[0].mxu0
      %v3471 = vadd.f32 %v3374, %v3470
      %v3472 = vpop.f32.mrb[0].mxu0
      %3473 = vmatprep.mubr.bf16.mxu0 0
      %3474 = vmatmul.mubr.bf16.gmra.mrb[0].mxu0 %v2589
      %v3475 = vpop.f32.mrb[0].mxu0
      %v3476 = vadd.f32 %v3379, %v3475
      %v3477 = vpop.f32.mrb[0].mxu0
      %v3478 = vpop.f32.mrb[0].mxu0
      %v3479 = vadd.f32 %v3382, %v3478
      %v3480 = vpop.f32.mrb[0].mxu0
      %3481 = vmatprep.mubr.bf16.mxu0 0
      %3482 = vmatmul.mubr.bf16.gmra.mrb[0].mxu0 %v2611
      %v3483 = vpop.f32.mrb[0].mxu0
      %v3484 = vadd.f32 %v3387, %v3483
      %v3485 = vpop.f32.mrb[0].mxu0
      %v3486 = vpop.f32.mrb[0].mxu0
      %v3487 = vadd.f32 %v3390, %v3486
      %v3488 = vpop.f32.mrb[0].mxu0
      %3489 = vmatprep.mubr.bf16.mxu0 0
      %3490 = vmatmul.mubr.bf16.gmra.mrb[0].mxu0 %v2633
      %v3491 = vpop.f32.mrb[0].mxu0
      %v3492 = vadd.f32 %v3395, %v3491
      %v3493 = vpop.f32.mrb[0].mxu0
      %v3494 = vpop.f32.mrb[0].mxu0
      %v3495 = vadd.f32 %v3398, %v3494
      %v3496 = vpop.f32.mrb[0].mxu0
      %3497 = vmatprep.mubr.bf16.mxu0 0
      %3498 = vmatmul.mubr.bf16.gmra.mrb[0].mxu0 %v2655
      %v3499 = vpop.f32.mrb[0].mxu0
      %v3500 = vadd.f32 %v3403, %v3499
      %v3501 = vpop.f32.mrb[0].mxu0
      %v3502 = vpop.f32.mrb[0].mxu0
      %v3503 = vadd.f32 %v3406, %v3502
      %v3504 = vpop.f32.mrb[0].mxu0
      %3505 = vmatprep.mubr.bf16.mxu0 0
      %3506 = vmatmul.mubr.bf16.gmra.mrb[0].mxu0 %v3150
      %v3507 = vpop.f32.mrb[0].mxu0
      %v3508 = vadd.f32 %v3411, %v3507
      %v3509 = vpop.f32.mrb[0].mxu0
      %v3510 = vpop.f32.mrb[0].mxu0
      %v3511 = vadd.f32 %v3414, %v3510
      %v3512 = vpop.f32.mrb[0].mxu0
      %3513 = vmatprep.mubr.bf16.mxu0 0
      %3514 = vmatmul.mubr.bf16.gmra.mrb[0].mxu0 %v3172
      %v3515 = vpop.f32.mrb[0].mxu0
      %v3516 = vadd.f32 %v3419, %v3515
      %v3517 = vpop.f32.mrb[0].mxu0
      %v3518 = vpop.f32.mrb[0].mxu0
      %v3519 = vadd.f32 %v3422, %v3518
      %v3520 = vpop.f32.mrb[0].mxu0
      %3521 = vdwg.mxu0
      %v3522 = vld [vmem:[#allocation2 + $0x10] sm:$0xf8]
      %v3523 = vld [vmem:[#allocation2 + $0x18] sm:$0xff]
      %v3524 = vld [vmem:[#allocation2 + $0x20] sm:$0xff]
      %v3525 = vld [vmem:[#allocation2 + $0x28] sm:$0xff]
      %v3526 = vld [vmem:[#allocation2 + $0x30] sm:$0xff]
      %v3527 = vld [vmem:[#allocation2 + $0x38] sm:$0xff]
      %v3528 = vld [vmem:[#allocation2 + $0x40] sm:$0xff]
      %v3529 = vld [vmem:[#allocation2 + $0x48] sm:$0xff]
      %v3530 = vld [vmem:[#allocation2 + $0x50] sm:$0xf]
      %v3531 = vld [vmem:[#allocation2 + $0x10] sm:$0xf0]
      %v3532 = vld [vmem:[#allocation2 + $0x50] sm:$0x1f]
      %v3534 = vshrl.u32 %v3531, 16
      %v3536 = vshll.u32 %v3531, 16
      %v3538 = vrot.slane %v3536, 1
      %v3539 = vor.u32 %v3534, %v3538
      %v3541 = vshll.u32 %v3523, 16
      %v3543 = vrot.slane %v3541, 1
      %v3544 = vsel %vm402, %v3539, %v3543
      %v3545 = vshrl.u32 %v3523, 16
      %v3547 = vor.u32 %v3545, %v3543
      %v3549 = vshll.u32 %v3524, 16
      %v3551 = vrot.slane %v3549, 1
      %v3552 = vsel %vm402, %v3547, %v3551
      %v3553 = vshrl.u32 %v3524, 16
      %v3555 = vor.u32 %v3553, %v3551
      %v3557 = vshll.u32 %v3525, 16
      %v3559 = vrot.slane %v3557, 1
      %v3560 = vsel %vm402, %v3555, %v3559
      %v3561 = vshrl.u32 %v3525, 16
      %v3563 = vor.u32 %v3561, %v3559
      %v3565 = vshll.u32 %v3526, 16
      %v3567 = vrot.slane %v3565, 1
      %v3568 = vsel %vm402, %v3563, %v3567
      %v3569 = vshrl.u32 %v3526, 16
      %v3571 = vor.u32 %v3569, %v3567
      %v3573 = vshll.u32 %v3527, 16
      %v3575 = vrot.slane %v3573, 1
      %v3576 = vsel %vm402, %v3571, %v3575
      %v3577 = vshrl.u32 %v3527, 16
      %v3579 = vor.u32 %v3577, %v3575
      %v3581 = vshll.u32 %v3528, 16
      %v3583 = vrot.slane %v3581, 1
      %v3584 = vsel %vm402, %v3579, %v3583
      %v3585 = vshrl.u32 %v3528, 16
      %v3587 = vor.u32 %v3585, %v3583
      %v3589 = vshll.u32 %v3529, 16
      %v3591 = vrot.slane %v3589, 1
      %v3592 = vsel %vm402, %v3587, %v3591
      %v3593 = vshrl.u32 %v3529, 16
      %v3595 = vor.u32 %v3593, %v3591
      %v3597 = vshll.u32 %v3530, 16
      %v3599 = vrot.slane %v3597, 1
      %v3600 = vsel %vm402, %v3595, %v3599
      %v3601 = vshrl.u32 %v3530, 16
      %v3603 = vor.u32 %v3601, %v3599
      %v3613 = vrot.slane %v3531, 1
      %v3614 = vrot.slane %v3523, 1
      %v3615 = vsel %vm2368, %v3613, %v3614
      %v3616 = vrot.slane %v3524, 1
      %v3617 = vsel %vm2368, %v3614, %v3616
      %v3618 = vrot.slane %v3525, 1
      %v3619 = vsel %vm2368, %v3616, %v3618
      %v3620 = vrot.slane %v3526, 1
      %v3621 = vsel %vm2368, %v3618, %v3620
      %v3622 = vrot.slane %v3527, 1
      %v3623 = vsel %vm2368, %v3620, %v3622
      %v3624 = vrot.slane %v3528, 1
      %v3625 = vsel %vm2368, %v3622, %v3624
      %v3626 = vrot.slane %v3529, 1
      %v3627 = vsel %vm2368, %v3624, %v3626
      %v3628 = vrot.slane %v3532, 1
      %v3629 = vsel %vm2368, %v3626, %v3628
      %s3630 = scalar_lea.vmem %s2, 384
      %v3631 = vld [vmem:[%s3630] sm:$0xf]
      %v3632 = vld [vmem:[%s3630 + $0x4] sm:$0xf]
      %v3633 = vld [vmem:[%s3630 + $0x8] sm:$0xf]
      %v3634 = vld [vmem:[%s3630 + $0xc] sm:$0xf]
      %v3635 = vld [vmem:[%s3630 + $0x10] sm:$0xf]
      %v3636 = vld [vmem:[%s3630 + $0x14] sm:$0xf]
      %v3637 = vld [vmem:[%s3630 + $0x18] sm:$0xf]
      %v3638 = vld [vmem:[%s3630 + $0x1c] sm:$0xf]
      %v3639 = vld [vmem:[%s3630 + $0x20] sm:$0xf]
      %v3640 = vld [vmem:[%s3630 + $0x24] sm:$0xf]
      %v3641 = vld [vmem:[%s3630 + $0x28] sm:$0xf]
      %v3642 = vld [vmem:[%s3630 + $0x2c] sm:$0xf]
      %v3643 = vld [vmem:[%s3630 + $0x30] sm:$0xf]
      %v3644 = vld [vmem:[%s3630 + $0x34] sm:$0xf]
      %v3645 = vld [vmem:[%s3630 + $0x38] sm:$0xf]
      %v3646 = vld [vmem:[%s3630 + $0x3c] sm:$0xf]
      %v3647 = vld [vmem:[%s3630 + $0x40] sm:$0xf]
      %v3648 = vld [vmem:[%s3630 + $0x44] sm:$0xf]
      %v3649 = vld [vmem:[%s3630 + $0x48] sm:$0xf]
      %v3650 = vld [vmem:[%s3630 + $0x4c] sm:$0xf]
      %v3651 = vld [vmem:[%s3630 + $0x50] sm:$0xf]
      %v3652 = vld [vmem:[%s3630 + $0x54] sm:$0xf]
      %v3653 = vld [vmem:[%s3630 + $0x58] sm:$0xf]
      %v3654 = vld [vmem:[%s3630 + $0x5c] sm:$0xf]
      %v3655 = vld [vmem:[%s3630 + $0x60] sm:$0xf]
      %v3656 = vld [vmem:[%s3630 + $0x64] sm:$0xf]
      %v3657 = vld [vmem:[%s3630 + $0x68] sm:$0xf]
      %v3658 = vld [vmem:[%s3630 + $0x6c] sm:$0xf]
      %v3659 = vld [vmem:[%s3630 + $0x70] sm:$0xf]
      %v3660 = vld [vmem:[%s3630 + $0x74] sm:$0xf]
      %v3661 = vld [vmem:[%s3630 + $0x78] sm:$0xf]
      %v3662 = vld [vmem:[%s3630 + $0x7c] sm:$0xf]
      %v3663 = vld [vmem:[%s3630 + $0x80] sm:$0xf]
      %v3664 = vld [vmem:[%s3630 + $0x84] sm:$0xf]
      %v3665 = vld [vmem:[%s3630 + $0x88] sm:$0xf]
      %v3666 = vld [vmem:[%s3630 + $0x8c] sm:$0xf]
      %v3667 = vld [vmem:[%s3630 + $0x90] sm:$0xf]
      %v3668 = vld [vmem:[%s3630 + $0x94] sm:$0xf]
      %v3669 = vld [vmem:[%s3630 + $0x98] sm:$0xf]
      %v3670 = vld [vmem:[%s3630 + $0x9c] sm:$0xf]
      %v3671 = vld [vmem:[%s3630 + $0xa0] sm:$0xf]
      %v3672 = vld [vmem:[%s3630 + $0xa4] sm:$0xf]
      %v3673 = vld [vmem:[%s3630 + $0xa8] sm:$0xf]
      %v3674 = vld [vmem:[%s3630 + $0xac] sm:$0xf]
      %v3675 = vld [vmem:[%s3630 + $0xb0] sm:$0xf]
      %v3676 = vld [vmem:[%s3630 + $0xb4] sm:$0xf]
      %v3677 = vld [vmem:[%s3630 + $0xb8] sm:$0xf]
      %v3678 = vld [vmem:[%s3630 + $0xbc] sm:$0xf]
      %v3680 = vshrl.u32 %v3522, 16
      %v3682 = vrot.slane %v3680, 3
      %v3683 = vshll.u32 %v3522, 16
      %v3685 = vrot.slane %v3683, 4
      %v3686 = vor.u32 %v3682, %v3685
      %v3687 = vrot.slane %v3545, 3
      %v3688 = vrot.slane %v3541, 4
      %v3689 = vor.u32 %v3687, %v3688
      %v3690 = vsel %vm2521, %v3686, %v3689
      %v3692 = vshrl.u32 %v3544, 16
      %v3694 = vrot.slane %v3692, 3
      %v3695 = vshll.u32 %v3544, 16
      %v3697 = vrot.slane %v3695, 4
      %v3698 = vor.u32 %v3694, %v3697
      %v3700 = vshrl.u32 %v3552, 16
      %v3702 = vrot.slane %v3700, 3
      %v3703 = vshll.u32 %v3552, 16
      %v3705 = vrot.slane %v3703, 4
      %v3706 = vor.u32 %v3702, %v3705
      %v3707 = vsel %vm2521, %v3698, %v3706
      %v3709 = vshrl.u32 %v3615, 16
      %v3711 = vrot.slane %v3709, 3
      %v3712 = vshll.u32 %v3615, 16
      %v3714 = vrot.slane %v3712, 4
      %v3715 = vor.u32 %v3711, %v3714
      %v3717 = vshrl.u32 %v3617, 16
      %v3719 = vrot.slane %v3717, 3
      %v3720 = vshll.u32 %v3617, 16
      %v3722 = vrot.slane %v3720, 4
      %v3723 = vor.u32 %v3719, %v3722
      %v3724 = vsel %vm2521, %v3715, %v3723
      %v3725 = vrot.slane %v3553, 3
      %v3726 = vrot.slane %v3549, 4
      %v3727 = vor.u32 %v3725, %v3726
      %v3728 = vsel %vm2521, %v3689, %v3727
      %v3730 = vshrl.u32 %v3560, 16
      %v3732 = vrot.slane %v3730, 3
      %v3733 = vshll.u32 %v3560, 16
      %v3735 = vrot.slane %v3733, 4
      %v3736 = vor.u32 %v3732, %v3735
      %v3737 = vsel %vm2521, %v3706, %v3736
      %v3739 = vshrl.u32 %v3619, 16
      %v3741 = vrot.slane %v3739, 3
      %v3742 = vshll.u32 %v3619, 16
      %v3744 = vrot.slane %v3742, 4
      %v3745 = vor.u32 %v3741, %v3744
      %v3746 = vsel %vm2521, %v3723, %v3745
      %v3747 = vrot.slane %v3561, 3
      %v3748 = vrot.slane %v3557, 4
      %v3749 = vor.u32 %v3747, %v3748
      %v3750 = vsel %vm2521, %v3727, %v3749
      %v3752 = vshrl.u32 %v3568, 16
      %v3754 = vrot.slane %v3752, 3
      %v3755 = vshll.u32 %v3568, 16
      %v3757 = vrot.slane %v3755, 4
      %v3758 = vor.u32 %v3754, %v3757
      %v3759 = vsel %vm2521, %v3736, %v3758
      %v3761 = vshrl.u32 %v3621, 16
      %v3763 = vrot.slane %v3761, 3
      %v3764 = vshll.u32 %v3621, 16
      %v3766 = vrot.slane %v3764, 4
      %v3767 = vor.u32 %v3763, %v3766
      %v3768 = vsel %vm2521, %v3745, %v3767
      %v3769 = vrot.slane %v3569, 3
      %v3770 = vrot.slane %v3565, 4
      %v3771 = vor.u32 %v3769, %v3770
      %v3772 = vsel %vm2521, %v3749, %v3771
      %v3774 = vshrl.u32 %v3576, 16
      %v3776 = vrot.slane %v3774, 3
      %v3777 = vshll.u32 %v3576, 16
      %v3779 = vrot.slane %v3777, 4
      %v3780 = vor.u32 %v3776, %v3779
      %v3781 = vsel %vm2521, %v3758, %v3780
      %v3783 = vshrl.u32 %v3623, 16
      %v3785 = vrot.slane %v3783, 3
      %v3786 = vshll.u32 %v3623, 16
      %v3788 = vrot.slane %v3786, 4
      %v3789 = vor.u32 %v3785, %v3788
      %v3790 = vsel %vm2521, %v3767, %v3789
      %v3791 = vrot.slane %v3577, 3
      %v3792 = vrot.slane %v3573, 4
      %v3793 = vor.u32 %v3791, %v3792
      %v3794 = vsel %vm2521, %v3771, %v3793
      %v3796 = vshrl.u32 %v3584, 16
      %v3798 = vrot.slane %v3796, 3
      %v3799 = vshll.u32 %v3584, 16
      %v3801 = vrot.slane %v3799, 4
      %v3802 = vor.u32 %v3798, %v3801
      %v3803 = vsel %vm2521, %v3780, %v3802
      %v3805 = vshrl.u32 %v3625, 16
      %v3807 = vrot.slane %v3805, 3
      %v3808 = vshll.u32 %v3625, 16
      %v3810 = vrot.slane %v3808, 4
      %v3811 = vor.u32 %v3807, %v3810
      %v3812 = vsel %vm2521, %v3789, %v3811
      %v3813 = vrot.slane %v3585, 3
      %v3814 = vrot.slane %v3581, 4
      %v3815 = vor.u32 %v3813, %v3814
      %v3816 = vsel %vm2521, %v3793, %v3815
      %v3818 = vshrl.u32 %v3592, 16
      %v3820 = vrot.slane %v3818, 3
      %v3821 = vshll.u32 %v3592, 16
      %v3823 = vrot.slane %v3821, 4
      %v3824 = vor.u32 %v3820, %v3823
      %v3825 = vsel %vm2521, %v3802, %v3824
      %v3827 = vshrl.u32 %v3627, 16
      %v3829 = vrot.slane %v3827, 3
      %v3830 = vshll.u32 %v3627, 16
      %v3832 = vrot.slane %v3830, 4
      %v3833 = vor.u32 %v3829, %v3832
      %v3834 = vsel %vm2521, %v3811, %v3833
      %v3835 = vrot.slane %v3593, 3
      %v3836 = vrot.slane %v3589, 4
      %v3837 = vor.u32 %v3835, %v3836
      %v3838 = vsel %vm2521, %v3815, %v3837
      %v3840 = vshrl.u32 %v3600, 16
      %v3842 = vrot.slane %v3840, 3
      %v3843 = vshll.u32 %v3600, 16
      %v3845 = vrot.slane %v3843, 4
      %v3846 = vor.u32 %v3842, %v3845
      %v3847 = vsel %vm2521, %v3824, %v3846
      %v3849 = vshrl.u32 %v3629, 16
      %v3851 = vrot.slane %v3849, 3
      %v3852 = vshll.u32 %v3629, 16
      %v3854 = vrot.slane %v3852, 4
      %v3855 = vor.u32 %v3851, %v3854
      %v3856 = vsel %vm2521, %v3833, %v3855
      %v3857 = vrot.slane %v3601, 3
      %v3858 = vrot.slane %v3597, 4
      %v3859 = vor.u32 %v3857, %v3858
      %v3860 = vsel %vm2521, %v3837, %v3859
      %v3862 = vshrl.u32 %v3603, 16
      %v3864 = vrot.slane %v3862, 3
      %v3865 = vshll.u32 %v3603, 16
      %v3867 = vrot.slane %v3865, 4
      %v3868 = vor.u32 %v3864, %v3867
      %v3869 = vsel %vm2521, %v3846, %v3868
      %v3871 = vshrl.u32 %v3628, 16
      %v3873 = vrot.slane %v3871, 3
      %v3874 = vshll.u32 %v3628, 16
      %v3876 = vrot.slane %v3874, 4
      %v3877 = vor.u32 %v3873, %v3876
      %v3878 = vsel %vm2521, %v3855, %v3877
      %v3951 = vunpack.c.l.b16 %v3631
      %v3952 = vunpack.c.l.b16 %v3632
      %v3953 = vunpack.c.l.b16 %v3633
      %v3954 = vunpack.c.l.b16 %v3634
      %v3955 = vunpack.c.l.b16 %v3635
      %v3956 = vunpack.c.l.b16 %v3636
      %v3957 = vunpack.c.l.b16 %v3637
      %v3958 = vunpack.c.l.b16 %v3638
      %v3959 = vunpack.c.l.b16 %v3639
      %v3960 = vunpack.c.l.b16 %v3640
      %v3961 = vunpack.c.l.b16 %v3641
      %v3962 = vunpack.c.l.b16 %v3642
      %v3963 = vunpack.c.l.b16 %v3643
      %v3964 = vunpack.c.l.b16 %v3644
      %v3965 = vunpack.c.l.b16 %v3645
      %v3966 = vunpack.c.l.b16 %v3646
      %v3967 = vunpack.c.l.b16 %v3647
      %v3968 = vunpack.c.l.b16 %v3648
      %v3969 = vunpack.c.l.b16 %v3649
      %v3970 = vunpack.c.l.b16 %v3650
      %v3971 = vunpack.c.l.b16 %v3651
      %v3972 = vunpack.c.l.b16 %v3652
      %v3973 = vunpack.c.l.b16 %v3653
      %v3974 = vunpack.c.l.b16 %v3654
      %v3975 = vunpack.c.l.b16 %v3655
      %v3976 = vunpack.c.l.b16 %v3656
      %v3977 = vunpack.c.l.b16 %v3657
      %v3978 = vunpack.c.l.b16 %v3658
      %v3979 = vunpack.c.l.b16 %v3659
      %v3980 = vunpack.c.l.b16 %v3660
      %v3981 = vunpack.c.l.b16 %v3661
      %v3982 = vunpack.c.l.b16 %v3662
      %v3983 = vunpack.c.l.b16 %v3663
      %v3984 = vunpack.c.l.b16 %v3664
      %v3985 = vunpack.c.l.b16 %v3665
      %v3986 = vunpack.c.l.b16 %v3666
      %v3987 = vunpack.c.l.b16 %v3667
      %v3988 = vunpack.c.l.b16 %v3668
      %v3989 = vunpack.c.l.b16 %v3669
      %v3990 = vunpack.c.l.b16 %v3670
      %v3991 = vunpack.c.l.b16 %v3671
      %v3992 = vunpack.c.l.b16 %v3672
      %v3993 = vunpack.c.l.b16 %v3673
      %v3994 = vunpack.c.l.b16 %v3674
      %v3995 = vunpack.c.l.b16 %v3675
      %v3996 = vunpack.c.l.b16 %v3676
      %v3997 = vunpack.c.l.b16 %v3677
      %v3998 = vunpack.c.l.b16 %v3678
      %v3999 = vpack.c.b16 %v3952, %v3951
      %v4000 = vpack.c.b16 %v3954, %v3953
      %v4001 = vpack.c.b16 %v3956, %v3955
      %v4002 = vpack.c.b16 %v3958, %v3957
      %v4003 = vpack.c.b16 %v3960, %v3959
      %v4004 = vpack.c.b16 %v3962, %v3961
      %v4005 = vpack.c.b16 %v3964, %v3963
      %v4006 = vpack.c.b16 %v3966, %v3965
      %v4007 = vpack.c.b16 %v3968, %v3967
      %v4008 = vpack.c.b16 %v3970, %v3969
      %v4009 = vpack.c.b16 %v3972, %v3971
      %v4010 = vpack.c.b16 %v3974, %v3973
      %v4011 = vpack.c.b16 %v3976, %v3975
      %v4012 = vpack.c.b16 %v3978, %v3977
      %v4013 = vpack.c.b16 %v3980, %v3979
      %v4014 = vpack.c.b16 %v3982, %v3981
      %v4015 = vpack.c.b16 %v3984, %v3983
      %v4016 = vpack.c.b16 %v3986, %v3985
      %v4017 = vpack.c.b16 %v3988, %v3987
      %v4018 = vpack.c.b16 %v3990, %v3989
      %v4019 = vpack.c.b16 %v3992, %v3991
      %v4020 = vpack.c.b16 %v3994, %v3993
      %v4021 = vpack.c.b16 %v3996, %v3995
      %v4022 = vpack.c.b16 %v3998, %v3997
      %4047 = vmatprep.subr.bf16.mxu0 0
      %4048 = vmatpush1.bf16.msra.mxu0 %v3999
      %4049 = vmatprep.subr.bf16.mxu0 0
      %4050 = vmatpush1.bf16.msra.mxu0 %v4000
      %4051 = vmatprep.subr.bf16.mxu0 0
      %4052 = vmatpush1.bf16.msra.mxu0 %v4001
      %4053 = vmatprep.subr.bf16.mxu0 0
      %4054 = vmatpush1.bf16.msra.mxu0 %v4002
      %4055 = vmatprep.subr.bf16.mxu0 0
      %4056 = vmatpush1.bf16.msra.mxu0 %v4003
      %4057 = vmatprep.subr.bf16.mxu0 0
      %4058 = vmatpush1.bf16.msra.mxu0 %v4004
      %4059 = vmatprep.subr.bf16.mxu0 0
      %4060 = vmatpush1.bf16.msra.mxu0 %v4005
      %4061 = vmatprep.subr.bf16.mxu0 0
      %4062 = vmatpush1.bf16.msra.mxu0 %v4006
      %4063 = vmatprep.subr.bf16.mxu0 0
      %4064 = vmatpush1.bf16.msra.mxu0 %v4007
      %4065 = vmatprep.subr.bf16.mxu0 0
      %4066 = vmatpush1.bf16.msra.mxu0 %v4008
      %4067 = vmatprep.subr.bf16.mxu0 0
      %4068 = vmatpush1.bf16.msra.mxu0 %v4009
      %4069 = vmatprep.subr.bf16.mxu0 0
      %4070 = vmatpush1.bf16.msra.mxu0 %v4010
      %4071 = vmatprep.subr.bf16.mxu0 0
      %4072 = vmatpush1.bf16.msra.mxu0 %v4011
      %4073 = vmatprep.subr.bf16.mxu0 0
      %4074 = vmatpush1.bf16.msra.mxu0 %v4012
      %4075 = vmatprep.subr.bf16.mxu0 0
      %4076 = vmatpush1.bf16.msra.mxu0 %v4013
      %4077 = vmatprep.subr.bf16.mxu0 0
      %4078 = vmatpush1.bf16.msra.mxu0 %v4014
      %4079 = vmatprep.mubr.bf16.mxu0 %v3707
      %4080 = vmatmul.mubr.bf16.gmra.mrb[0].mxu0 %v3690
      %v4081 = vpop.f32.mrb[0].mxu0
      %v4082 = vadd.f32 0.0, %v4081
      %v4083 = vpop.f32.mrb[0].mxu0
      %v4084 = vpop.f32.mrb[0].mxu0
      %v4085 = vadd.f32 0.0, %v4084
      %v4086 = vpop.f32.mrb[0].mxu0
      %4087 = vmatprep.mubr.bf16.mxu0 %v3737
      %4088 = vmatmul.mubr.bf16.gmra.mrb[0].mxu0 %v3728
      %v4089 = vpop.f32.mrb[0].mxu0
      %v4090 = vadd.f32 0.0, %v4089
      %v4091 = vpop.f32.mrb[0].mxu0
      %v4092 = vpop.f32.mrb[0].mxu0
      %v4093 = vadd.f32 0.0, %v4092
      %v4094 = vpop.f32.mrb[0].mxu0
      %4095 = vmatprep.mubr.bf16.mxu0 %v3759
      %4096 = vmatmul.mubr.bf16.gmra.mrb[0].mxu0 %v3750
      %v4097 = vpop.f32.mrb[0].mxu0
      %v4098 = vadd.f32 0.0, %v4097
      %v4099 = vpop.f32.mrb[0].mxu0
      %v4100 = vpop.f32.mrb[0].mxu0
      %v4101 = vadd.f32 0.0, %v4100
      %v4102 = vpop.f32.mrb[0].mxu0
      %4103 = vmatprep.mubr.bf16.mxu0 %v3781
      %4104 = vmatmul.mubr.bf16.gmra.mrb[0].mxu0 %v3772
      %v4105 = vpop.f32.mrb[0].mxu0
      %v4106 = vadd.f32 0.0, %v4105
      %v4107 = vpop.f32.mrb[0].mxu0
      %v4108 = vpop.f32.mrb[0].mxu0
      %v4109 = vadd.f32 0.0, %v4108
      %v4110 = vpop.f32.mrb[0].mxu0
      %4111 = vmatprep.mubr.bf16.mxu0 %v3803
      %4112 = vmatmul.mubr.bf16.gmra.mrb[0].mxu0 %v3794
      %v4113 = vpop.f32.mrb[0].mxu0
      %v4114 = vadd.f32 0.0, %v4113
      %v4115 = vpop.f32.mrb[0].mxu0
      %v4116 = vpop.f32.mrb[0].mxu0
      %v4117 = vadd.f32 0.0, %v4116
      %v4118 = vpop.f32.mrb[0].mxu0
      %4119 = vmatprep.mubr.bf16.mxu0 %v3825
      %4120 = vmatmul.mubr.bf16.gmra.mrb[0].mxu0 %v3816
      %v4121 = vpop.f32.mrb[0].mxu0
      %v4122 = vadd.f32 0.0, %v4121
      %v4123 = vpop.f32.mrb[0].mxu0
      %v4124 = vpop.f32.mrb[0].mxu0
      %v4125 = vadd.f32 0.0, %v4124
      %v4126 = vpop.f32.mrb[0].mxu0
      %4127 = vmatprep.mubr.bf16.mxu0 %v3847
      %4128 = vmatmul.mubr.bf16.gmra.mrb[0].mxu0 %v3838
      %v4129 = vpop.f32.mrb[0].mxu0
      %v4130 = vadd.f32 0.0, %v4129
      %v4131 = vpop.f32.mrb[0].mxu0
      %v4132 = vpop.f32.mrb[0].mxu0
      %v4133 = vadd.f32 0.0, %v4132
      %v4134 = vpop.f32.mrb[0].mxu0
      %4135 = vmatprep.mubr.bf16.mxu0 %v3869
      %4136 = vmatmul.mubr.bf16.gmra.mrb[0].mxu0 %v3860
      %v4137 = vpop.f32.mrb[0].mxu0
      %v4138 = vadd.f32 0.0, %v4137
      %v4139 = vpop.f32.mrb[0].mxu0
      %v4140 = vpop.f32.mrb[0].mxu0
      %v4141 = vadd.f32 0.0, %v4140
      %v4142 = vpop.f32.mrb[0].mxu0
      %4143 = vdwg.mxu0
      %4144 = vmatprep.subr.bf16.mxu0 0
      %4145 = vmatpush1.bf16.msra.mxu0 %v4015
      %4146 = vmatprep.subr.bf16.mxu0 0
      %4147 = vmatpush1.bf16.msra.mxu0 %v4016
      %4148 = vmatprep.subr.bf16.mxu0 0
      %4149 = vmatpush1.bf16.msra.mxu0 %v4017
      %4150 = vmatprep.subr.bf16.mxu0 0
      %4151 = vmatpush1.bf16.msra.mxu0 %v4018
      %4152 = vmatprep.subr.bf16.mxu0 0
      %4153 = vmatpush1.bf16.msra.mxu0 %v4019
      %4154 = vmatprep.subr.bf16.mxu0 0
      %4155 = vmatpush1.bf16.msra.mxu0 %v4020
      %4156 = vmatprep.subr.bf16.mxu0 0
      %4157 = vmatpush1.bf16.msra.mxu0 %v4021
      %4158 = vmatprep.subr.bf16.mxu0 0
      %4159 = vmatpush1.bf16.msra.mxu0 %v4022
      %4160 = vmatprep.subr.bf16.mxu0 0
      %4161 = vmatpush1.bf16.msra.mxu0 0
      %4162 = vmatprep.subr.bf16.mxu0 0
      %4163 = vmatpush1.bf16.msra.mxu0 0
      %4164 = vmatprep.subr.bf16.mxu0 0
      %4165 = vmatpush1.bf16.msra.mxu0 0
      %4166 = vmatprep.subr.bf16.mxu0 0
      %4167 = vmatpush1.bf16.msra.mxu0 0
      %4168 = vmatprep.subr.bf16.mxu0 0
      %4169 = vmatpush1.bf16.msra.mxu0 0
      %4170 = vmatprep.subr.bf16.mxu0 0
      %4171 = vmatpush1.bf16.msra.mxu0 0
      %4172 = vmatprep.subr.bf16.mxu0 0
      %4173 = vmatpush1.bf16.msra.mxu0 0
      %4174 = vmatprep.subr.bf16.mxu0 0
      %4175 = vmatpush1.bf16.msra.mxu0 0
      %4176 = vmatprep.mubr.bf16.mxu0 0
      %4177 = vmatmul.mubr.bf16.gmra.mrb[0].mxu0 %v3724
      %v4178 = vpop.f32.mrb[0].mxu0
      %v4179 = vadd.f32 %v4082, %v4178
      %v4180 = vpop.f32.mrb[0].mxu0
      %v4181 = vpop.f32.mrb[0].mxu0
      %v4182 = vadd.f32 %v4085, %v4181
      %v4183 = vpop.f32.mrb[0].mxu0
      %4184 = vmatprep.mubr.bf16.mxu0 0
      %4185 = vmatmul.mubr.bf16.gmra.mrb[0].mxu0 %v3746
      %v4186 = vpop.f32.mrb[0].mxu0
      %v4187 = vadd.f32 %v4090, %v4186
      %v4188 = vpop.f32.mrb[0].mxu0
      %v4189 = vpop.f32.mrb[0].mxu0
      %v4190 = vadd.f32 %v4093, %v4189
      %v4191 = vpop.f32.mrb[0].mxu0
      %4192 = vmatprep.mubr.bf16.mxu0 0
      %4193 = vmatmul.mubr.bf16.gmra.mrb[0].mxu0 %v3768
      %v4194 = vpop.f32.mrb[0].mxu0
      %v4195 = vadd.f32 %v4098, %v4194
      %v4196 = vpop.f32.mrb[0].mxu0
      %v4197 = vpop.f32.mrb[0].mxu0
      %v4198 = vadd.f32 %v4101, %v4197
      %v4199 = vpop.f32.mrb[0].mxu0
      %4200 = vmatprep.mubr.bf16.mxu0 0
      %4201 = vmatmul.mubr.bf16.gmra.mrb[0].mxu0 %v3790
      %v4202 = vpop.f32.mrb[0].mxu0
      %v4203 = vadd.f32 %v4106, %v4202
      %v4204 = vpop.f32.mrb[0].mxu0
      %v4205 = vpop.f32.mrb[0].mxu0
      %v4206 = vadd.f32 %v4109, %v4205
      %v4207 = vpop.f32.mrb[0].mxu0
      %4208 = vmatprep.mubr.bf16.mxu0 0
      %4209 = vmatmul.mubr.bf16.gmra.mrb[0].mxu0 %v3812
      %v4210 = vpop.f32.mrb[0].mxu0
      %v4211 = vadd.f32 %v4114, %v4210
      %v4212 = vpop.f32.mrb[0].mxu0
      %v4213 = vpop.f32.mrb[0].mxu0
      %v4214 = vadd.f32 %v4117, %v4213
      %v4215 = vpop.f32.mrb[0].mxu0
      %4216 = vmatprep.mubr.bf16.mxu0 0
      %4217 = vmatmul.mubr.bf16.gmra.mrb[0].mxu0 %v3834
      %v4218 = vpop.f32.mrb[0].mxu0
      %v4219 = vadd.f32 %v4122, %v4218
      %v4220 = vpop.f32.mrb[0].mxu0
      %v4221 = vpop.f32.mrb[0].mxu0
      %v4222 = vadd.f32 %v4125, %v4221
      %v4223 = vpop.f32.mrb[0].mxu0
      %4224 = vmatprep.mubr.bf16.mxu0 0
      %4225 = vmatmul.mubr.bf16.gmra.mrb[0].mxu0 %v3856
      %v4226 = vpop.f32.mrb[0].mxu0
      %v4227 = vadd.f32 %v4130, %v4226
      %v4228 = vpop.f32.mrb[0].mxu0
      %v4229 = vpop.f32.mrb[0].mxu0
      %v4230 = vadd.f32 %v4133, %v4229
      %v4231 = vpop.f32.mrb[0].mxu0
      %4232 = vmatprep.mubr.bf16.mxu0 0
      %4233 = vmatmul.mubr.bf16.gmra.mrb[0].mxu0 %v3878
      %v4234 = vpop.f32.mrb[0].mxu0
      %v4235 = vadd.f32 %v4138, %v4234
      %v4236 = vpop.f32.mrb[0].mxu0
      %v4237 = vpop.f32.mrb[0].mxu0
      %v4238 = vadd.f32 %v4141, %v4237
      %v4239 = vpop.f32.mrb[0].mxu0
      %4240 = vdwg.mxu0
      %v4241 = vadd.f32 %v3460, %v4179
      %v4242 = vadd.f32 %v3463, %v4182
      %v4243 = vadd.f32 %v3468, %v4187
      %v4244 = vadd.f32 %v3471, %v4190
      %v4245 = vadd.f32 %v3476, %v4195
      %v4246 = vadd.f32 %v3479, %v4198
      %v4247 = vadd.f32 %v3484, %v4203
      %v4248 = vadd.f32 %v3487, %v4206
      %v4249 = vadd.f32 %v3492, %v4211
      %v4250 = vadd.f32 %v3495, %v4214
      %v4251 = vadd.f32 %v3500, %v4219
      %v4252 = vadd.f32 %v3503, %v4222
      %v4253 = vadd.f32 %v3508, %v4227
      %v4254 = vadd.f32 %v3511, %v4230
      %v4255 = vadd.f32 %v3516, %v4235
      %v4256 = vadd.f32 %v3519, %v4238
      %v4257 = vlaneseq
      %v4258 = vshrl.u32 %v4257, 7
      %v4259 = vsub.s32 2, %v4258
      %v4260 = vrot.slane %v253, %v4259
      %v4261 = vmul.f32 %v4241, %v4260
      %v4262 = vmul.f32 %v4242, %v4260
      %v4263 = vmul.f32 %v4243, %v4260
      %v4264 = vmul.f32 %v4244, %v4260
      %v4265 = vmul.f32 %v4245, %v4260
      %v4266 = vmul.f32 %v4246, %v4260
      %v4267 = vmul.f32 %v4247, %v4260
      %v4268 = vmul.f32 %v4248, %v4260
      %v4269 = vmul.f32 %v4249, %v4260
      %v4270 = vmul.f32 %v4250, %v4260
      %v4271 = vmul.f32 %v4251, %v4260
      %v4272 = vmul.f32 %v4252, %v4260
      %v4273 = vmul.f32 %v4253, %v4260
      %v4274 = vmul.f32 %v4254, %v4260
      %v4275 = vmul.f32 %v4255, %v4260
      %v4276 = vmul.f32 %v4256, %v4260
      %v4277 = vlaneseq
      %v4278 = vshrl.u32 %v4277, 7
      %v4279 = vsub.s32 3, %v4278
      %v4280 = vrot.slane %v253, %v4279
      %v4281 = vadd.f32 %v4261, %v4280
      %v4282 = vadd.f32 %v4262, %v4280
      %v4283 = vadd.f32 %v4263, %v4280
      %v4284 = vadd.f32 %v4264, %v4280
      %v4285 = vadd.f32 %v4265, %v4280
      %v4286 = vadd.f32 %v4266, %v4280
      %v4287 = vadd.f32 %v4267, %v4280
      %v4288 = vadd.f32 %v4268, %v4280
      %v4289 = vadd.f32 %v4269, %v4280
      %v4290 = vadd.f32 %v4270, %v4280
      %v4291 = vadd.f32 %v4271, %v4280
      %v4292 = vadd.f32 %v4272, %v4280
      %v4293 = vadd.f32 %v4273, %v4280
      %v4294 = vadd.f32 %v4274, %v4280
      %v4295 = vadd.f32 %v4275, %v4280
      %v4296 = vadd.f32 %v4276, %v4280
      %v4297 = vld [vmem:[%s3] sm:$0xf]
      %v4298 = vld [vmem:[%s3 + $0x4] sm:$0xf]
      %v4299 = vld [vmem:[%s3 + $0x8] sm:$0xf]
      %v4300 = vld [vmem:[%s3 + $0xc] sm:$0xf]
      %v4301 = vld [vmem:[%s3 + $0x10] sm:$0xf]
      %v4302 = vld [vmem:[%s3 + $0x14] sm:$0xf]
      %v4303 = vld [vmem:[%s3 + $0x18] sm:$0xf]
      %v4304 = vld [vmem:[%s3 + $0x1c] sm:$0xf]
      %v4305 = vld [vmem:[%s3 + $0x20] sm:$0xf]
      %v4306 = vld [vmem:[%s3 + $0x24] sm:$0xf]
      %v4307 = vld [vmem:[%s3 + $0x28] sm:$0xf]
      %v4308 = vld [vmem:[%s3 + $0x2c] sm:$0xf]
      %v4309 = vld [vmem:[%s3 + $0x30] sm:$0xf]
      %v4310 = vld [vmem:[%s3 + $0x34] sm:$0xf]
      %v4311 = vld [vmem:[%s3 + $0x38] sm:$0xf]
      %v4312 = vld [vmem:[%s3 + $0x3c] sm:$0xf]
      %v4329 = vunpack.c.l.b16 %v4297
      %v4330 = vunpack.c.l.b16 %v4298
      %v4331 = vunpack.c.l.b16 %v4299
      %v4332 = vunpack.c.l.b16 %v4300
      %v4333 = vunpack.c.l.b16 %v4301
      %v4334 = vunpack.c.l.b16 %v4302
      %v4335 = vunpack.c.l.b16 %v4303
      %v4336 = vunpack.c.l.b16 %v4304
      %v4337 = vunpack.c.l.b16 %v4305
      %v4338 = vunpack.c.l.b16 %v4306
      %v4339 = vunpack.c.l.b16 %v4307
      %v4340 = vunpack.c.l.b16 %v4308
      %v4341 = vunpack.c.l.b16 %v4309
      %v4342 = vunpack.c.l.b16 %v4310
      %v4343 = vunpack.c.l.b16 %v4311
      %v4344 = vunpack.c.l.b16 %v4312
      %v4345 = vpack.c.b16 %v4330, %v4329
      %v4346 = vpack.c.b16 %v4332, %v4331
      %v4347 = vpack.c.b16 %v4334, %v4333
      %v4348 = vpack.c.b16 %v4336, %v4335
      %v4349 = vpack.c.b16 %v4338, %v4337
      %v4350 = vpack.c.b16 %v4340, %v4339
      %v4351 = vpack.c.b16 %v4342, %v4341
      %v4352 = vpack.c.b16 %v4344, %v4343
      %4361 = vmatprep.subr.bf16.mxu0 0
      %4362 = vmatpush1.bf16.msra.mxu0 %v4345
      %4363 = vmatprep.subr.bf16.mxu0 0
      %4364 = vmatpush1.bf16.msra.mxu0 %v4346
      %4365 = vmatprep.subr.bf16.mxu0 0
      %4366 = vmatpush1.bf16.msra.mxu0 %v4347
      %4367 = vmatprep.subr.bf16.mxu0 0
      %4368 = vmatpush1.bf16.msra.mxu0 %v4348
      %4369 = vmatprep.subr.bf16.mxu0 0
      %4370 = vmatpush1.bf16.msra.mxu0 %v4349
      %4371 = vmatprep.subr.bf16.mxu0 0
      %4372 = vmatpush1.bf16.msra.mxu0 %v4350
      %4373 = vmatprep.subr.bf16.mxu0 0
      %4374 = vmatpush1.bf16.msra.mxu0 %v4351
      %4375 = vmatprep.subr.bf16.mxu0 0
      %4376 = vmatpush1.bf16.msra.mxu0 %v4352
      %4377 = vmatprep.subr.bf16.mxu0 0
      %4378 = vmatpush1.bf16.msra.mxu0 0
      %4379 = vmatprep.subr.bf16.mxu0 0
      %4380 = vmatpush1.bf16.msra.mxu0 0
      %4381 = vmatprep.subr.bf16.mxu0 0
      %4382 = vmatpush1.bf16.msra.mxu0 0
      %4383 = vmatprep.subr.bf16.mxu0 0
      %4384 = vmatpush1.bf16.msra.mxu0 0
      %4385 = vmatprep.subr.bf16.mxu0 0
      %4386 = vmatpush1.bf16.msra.mxu0 0
      %4387 = vmatprep.subr.bf16.mxu0 0
      %4388 = vmatpush1.bf16.msra.mxu0 0
      %4389 = vmatprep.subr.bf16.mxu0 0
      %4390 = vmatpush1.bf16.msra.mxu0 0
      %4391 = vmatprep.subr.bf16.mxu0 0
      %4392 = vmatpush1.bf16.msra.mxu0 0
      %4393 = vmatprep.mubr.bf16.mxu0 0
      %4394 = vmatmul.mubr.bf16.gmra.mrb[0].mxu0 %v640
      %v4395 = vpop.f32.mrb[0].mxu0
      %v4396 = vadd.f32 0.0, %v4395
      %v4397 = vpop.f32.mrb[0].mxu0
      %v4398 = vpop.f32.mrb[0].mxu0
      %v4399 = vadd.f32 0.0, %v4398
      %v4400 = vpop.f32.mrb[0].mxu0
      %4401 = vmatprep.mubr.bf16.mxu0 0
      %4402 = vmatmul.mubr.bf16.gmra.mrb[0].mxu0 %v641
      %v4403 = vpop.f32.mrb[0].mxu0
      %v4404 = vadd.f32 0.0, %v4403
      %v4405 = vpop.f32.mrb[0].mxu0
      %v4406 = vpop.f32.mrb[0].mxu0
      %v4407 = vadd.f32 0.0, %v4406
      %v4408 = vpop.f32.mrb[0].mxu0
      %4409 = vmatprep.mubr.bf16.mxu0 0
      %4410 = vmatmul.mubr.bf16.gmra.mrb[0].mxu0 %v642
      %v4411 = vpop.f32.mrb[0].mxu0
      %v4412 = vadd.f32 0.0, %v4411
      %v4413 = vpop.f32.mrb[0].mxu0
      %v4414 = vpop.f32.mrb[0].mxu0
      %v4415 = vadd.f32 0.0, %v4414
      %v4416 = vpop.f32.mrb[0].mxu0
      %4417 = vmatprep.mubr.bf16.mxu0 0
      %4418 = vmatmul.mubr.bf16.gmra.mrb[0].mxu0 %v643
      %v4419 = vpop.f32.mrb[0].mxu0
      %v4420 = vadd.f32 0.0, %v4419
      %v4421 = vpop.f32.mrb[0].mxu0
      %v4422 = vpop.f32.mrb[0].mxu0
      %v4423 = vadd.f32 0.0, %v4422
      %v4424 = vpop.f32.mrb[0].mxu0
      %4425 = vmatprep.mubr.bf16.mxu0 0
      %4426 = vmatmul.mubr.bf16.gmra.mrb[0].mxu0 %v644
      %v4427 = vpop.f32.mrb[0].mxu0
      %v4428 = vadd.f32 0.0, %v4427
      %v4429 = vpop.f32.mrb[0].mxu0
      %v4430 = vpop.f32.mrb[0].mxu0
      %v4431 = vadd.f32 0.0, %v4430
      %v4432 = vpop.f32.mrb[0].mxu0
      %4433 = vmatprep.mubr.bf16.mxu0 0
      %4434 = vmatmul.mubr.bf16.gmra.mrb[0].mxu0 %v645
      %v4435 = vpop.f32.mrb[0].mxu0
      %v4436 = vadd.f32 0.0, %v4435
      %v4437 = vpop.f32.mrb[0].mxu0
      %v4438 = vpop.f32.mrb[0].mxu0
      %v4439 = vadd.f32 0.0, %v4438
      %v4440 = vpop.f32.mrb[0].mxu0
      %4441 = vmatprep.mubr.bf16.mxu0 0
      %4442 = vmatmul.mubr.bf16.gmra.mrb[0].mxu0 %v646
      %v4443 = vpop.f32.mrb[0].mxu0
      %v4444 = vadd.f32 0.0, %v4443
      %v4445 = vpop.f32.mrb[0].mxu0
      %v4446 = vpop.f32.mrb[0].mxu0
      %v4447 = vadd.f32 0.0, %v4446
      %v4448 = vpop.f32.mrb[0].mxu0
      %4449 = vmatprep.mubr.bf16.mxu0 0
      %4450 = vmatmul.mubr.bf16.gmra.mrb[0].mxu0 %v647
      %v4451 = vpop.f32.mrb[0].mxu0
      %v4452 = vadd.f32 0.0, %v4451
      %v4453 = vpop.f32.mrb[0].mxu0
      %v4454 = vpop.f32.mrb[0].mxu0
      %v4455 = vadd.f32 0.0, %v4454
      %v4456 = vpop.f32.mrb[0].mxu0
      %4457 = vdwg.mxu0
      %v4458 = vlaneseq
      %v4459 = vshrl.u32 %v4458, 7
      %v4460 = vsub.s32 4, %v4459
      %v4461 = vrot.slane %v253, %v4460
      %v4462 = vmul.f32 %v4396, %v4461
      %v4463 = vmul.f32 %v4399, %v4461
      %v4464 = vmul.f32 %v4404, %v4461
      %v4465 = vmul.f32 %v4407, %v4461
      %v4466 = vmul.f32 %v4412, %v4461
      %v4467 = vmul.f32 %v4415, %v4461
      %v4468 = vmul.f32 %v4420, %v4461
      %v4469 = vmul.f32 %v4423, %v4461
      %v4470 = vmul.f32 %v4428, %v4461
      %v4471 = vmul.f32 %v4431, %v4461
      %v4472 = vmul.f32 %v4436, %v4461
      %v4473 = vmul.f32 %v4439, %v4461
      %v4474 = vmul.f32 %v4444, %v4461
      %v4475 = vmul.f32 %v4447, %v4461
      %v4476 = vmul.f32 %v4452, %v4461
      %v4477 = vmul.f32 %v4455, %v4461
      %v4478 = vlaneseq
      %v4479 = vshrl.u32 %v4478, 7
      %v4480 = vsub.s32 5, %v4479
      %v4481 = vrot.slane %v253, %v4480
      %v4482 = vadd.f32 %v4462, %v4481
      %v4483 = vadd.f32 %v4463, %v4481
      %v4484 = vadd.f32 %v4464, %v4481
      %v4485 = vadd.f32 %v4465, %v4481
      %v4486 = vadd.f32 %v4466, %v4481
      %v4487 = vadd.f32 %v4467, %v4481
      %v4488 = vadd.f32 %v4468, %v4481
      %v4489 = vadd.f32 %v4469, %v4481
      %v4490 = vadd.f32 %v4470, %v4481
      %v4491 = vadd.f32 %v4471, %v4481
      %v4492 = vadd.f32 %v4472, %v4481
      %v4493 = vadd.f32 %v4473, %v4481
      %v4494 = vadd.f32 %v4474, %v4481
      %v4495 = vadd.f32 %v4475, %v4481
      %v4496 = vadd.f32 %v4476, %v4481
      %v4497 = vadd.f32 %v4477, %v4481
      %v4498 = vadd.f32 %v4281, %v4482
      %v4499 = vadd.f32 %v4282, %v4483
      %v4500 = vadd.f32 %v4283, %v4484
      %v4501 = vadd.f32 %v4284, %v4485
      %v4502 = vadd.f32 %v4285, %v4486
      %v4503 = vadd.f32 %v4286, %v4487
      %v4504 = vadd.f32 %v4287, %v4488
      %v4505 = vadd.f32 %v4288, %v4489
      %v4506 = vadd.f32 %v4289, %v4490
      %v4507 = vadd.f32 %v4290, %v4491
      %v4508 = vadd.f32 %v4291, %v4492
      %v4509 = vadd.f32 %v4292, %v4493
      %v4510 = vadd.f32 %v4293, %v4494
      %v4511 = vadd.f32 %v4294, %v4495
      %v4512 = vadd.f32 %v4295, %v4496
      %v4513 = vadd.f32 %v4296, %v4497
      %v4514 = vmax.f32 %v4498, 0.0
      %v4515 = vmax.f32 %v4499, 0.0
      %v4516 = vmax.f32 %v4500, 0.0
      %v4517 = vmax.f32 %v4501, 0.0
      %v4518 = vmax.f32 %v4502, 0.0
      %v4519 = vmax.f32 %v4503, 0.0
      %v4520 = vmax.f32 %v4504, 0.0
      %v4521 = vmax.f32 %v4505, 0.0
      %v4522 = vmax.f32 %v4506, 0.0
      %v4523 = vmax.f32 %v4507, 0.0
      %v4524 = vmax.f32 %v4508, 0.0
      %v4525 = vmax.f32 %v4509, 0.0
      %v4526 = vmax.f32 %v4510, 0.0
      %v4527 = vmax.f32 %v4511, 0.0
      %v4528 = vmax.f32 %v4512, 0.0
      %v4529 = vmax.f32 %v4513, 0.0
      %v4530 = vpack.c.bf16 %v4515, %v4514
      %v4531 = vpack.c.bf16 %v4517, %v4516
      %v4532 = vpack.c.bf16 %v4519, %v4518
      %v4533 = vpack.c.bf16 %v4521, %v4520
      %v4534 = vpack.c.bf16 %v4523, %v4522
      %v4535 = vpack.c.bf16 %v4525, %v4524
      %v4536 = vpack.c.bf16 %v4527, %v4526
      %v4537 = vpack.c.bf16 %v4529, %v4528
      %v4546 = vunpack.c.l.b16 %v4530
      %v4547 = vunpack.c.h.b16 %v4530
      %v4548 = vunpack.c.l.b16 %v4531
      %v4549 = vunpack.c.h.b16 %v4531
      %v4550 = vunpack.c.l.b16 %v4532
      %v4551 = vunpack.c.h.b16 %v4532
      %v4552 = vunpack.c.l.b16 %v4533
      %v4553 = vunpack.c.h.b16 %v4533
      %v4554 = vunpack.c.l.b16 %v4534
      %v4555 = vunpack.c.h.b16 %v4534
      %v4556 = vunpack.c.l.b16 %v4535
      %v4557 = vunpack.c.h.b16 %v4535
      %v4558 = vunpack.c.l.b16 %v4536
      %v4559 = vunpack.c.h.b16 %v4536
      %v4560 = vunpack.c.l.b16 %v4537
      %v4561 = vunpack.c.h.b16 %v4537
      %v4562 = vpack.c.b16 %v4546, %v4546
      %v4563 = vpack.c.b16 %v4547, %v4547
      %v4564 = vpack.c.b16 %v4548, %v4548
      %v4565 = vpack.c.b16 %v4549, %v4549
      %v4566 = vpack.c.b16 %v4550, %v4550
      %v4567 = vpack.c.b16 %v4551, %v4551
      %v4568 = vpack.c.b16 %v4552, %v4552
      %v4569 = vpack.c.b16 %v4553, %v4553
      %v4570 = vpack.c.b16 %v4554, %v4554
      %v4571 = vpack.c.b16 %v4555, %v4555
      %v4572 = vpack.c.b16 %v4556, %v4556
      %v4573 = vpack.c.b16 %v4557, %v4557
      %v4574 = vpack.c.b16 %v4558, %v4558
      %v4575 = vpack.c.b16 %v4559, %v4559
      %v4576 = vpack.c.b16 %v4560, %v4560
      %v4577 = vpack.c.b16 %v4561, %v4561
      %4594 = vst [vmem:[%s251] sm:$0xf] %v4562
      %4595 = vst [vmem:[%s251 + $0x4] sm:$0xf] %v4563
      %4596 = vst [vmem:[%s251 + $0x8] sm:$0xf] %v4564
      %4597 = vst [vmem:[%s251 + $0xc] sm:$0xf] %v4565
      %4598 = vst [vmem:[%s251 + $0x10] sm:$0xf] %v4566
      %4599 = vst [vmem:[%s251 + $0x14] sm:$0xf] %v4567
      %4600 = vst [vmem:[%s251 + $0x18] sm:$0xf] %v4568
      %4601 = vst [vmem:[%s251 + $0x1c] sm:$0xf] %v4569
      %4602 = vst [vmem:[%s251 + $0x20] sm:$0xf] %v4570
      %4603 = vst [vmem:[%s251 + $0x24] sm:$0xf] %v4571
      %4604 = vst [vmem:[%s251 + $0x28] sm:$0xf] %v4572
      %4605 = vst [vmem:[%s251 + $0x2c] sm:$0xf] %v4573
      %4606 = vst [vmem:[%s251 + $0x30] sm:$0xf] %v4574
      %4607 = vst [vmem:[%s251 + $0x34] sm:$0xf] %v4575
      %4608 = vst [vmem:[%s251 + $0x38] sm:$0xf] %v4576
      %4609 = vst [vmem:[%s251 + $0x3c] sm:$0xf] %v4577
      %p4610 = scmp.lt.s32.totalorder %s17, 1
      %s4611 = scalar_select %p4610, %s17, 1
      %s4612 = smul.addr %s4611, 16
      %s4613 = smul.addr %s4612, 4
      %s4614 = scalar_lea.vmem %s6, %s4613
      // Predicated region
      $region45: #{basic_blk_forward.1} parent=43 // pred_check
        %p4615 = pneg %p166
      $region46: #{basic_blk_forward.1} parent=43 // pred_check_branch
        %4617 = sbr.rel (%p4615) target = $region48
      $region47: #{basic_blk_forward.1} parent=43 // pred_region
        _
      $region48: #{basic_blk_forward.1} parent=43 // pred_fallthru
        _
    $region44: #{basic_blk_forward.1} parent=5 // pred_fallthru
      _
    %p4618 = scmp.le.s32.totalorder 2, %s12
    // Predicated region
    $region49: #{basic_blk_forward.1} parent=5 // pred_check
      %p4619 = pneg %p4618
    $region50: #{basic_blk_forward.1} parent=5 // pred_check_branch
      %4621 = sbr.rel (%p4619) target = $region52
    $region51: #{basic_blk_forward.1} parent=5 // pred_region
      %s4622 = ssub.s32 %s12, 2
      // Predicated region
      $region53: #{basic_blk_forward.1} parent=51 // pred_check
        %p4623 = pneg %p172
      $region54: #{basic_blk_forward.1} parent=51 // pred_check_branch
        %4625 = sbr.rel (%p4623) target = $region56
      $region55: #{basic_blk_forward.1} parent=51 // pred_region
        %p4626 = scmp.lt.s32.totalorder %s18, 1
        %s4627 = scalar_select %p4626, %s18, 1
        %s4628 = smul.addr %s4627, 16
        %s4629 = smul.addr %s4628, 4
        %s4630 = scalar_lea.vmem %s6, %s4629
      $region56: #{basic_blk_forward.1} parent=51 // pred_fallthru
        _
    $region52: #{basic_blk_forward.1} parent=5 // pred_fallthru
      _
  $region6: #{basic_blk_forward.1} parent=0 // loop_footer
    %s16 = sadd.s32 1, %s12
  $region7: #{basic_blk_forward.1} parent=0 // loop_footer_branch
    %11 = sbr.rel target = $region3
  $region8: #{basic_blk_forward.1} parent=0 // loop_exit
    _

</llo_original>
